<compile_context>
chip_gen: v7x
topology: tpu7x:2x2x1
jax: 0.10.0
libtpu: 0.0.40
codegen_flags: <defaults>
</compile_context>

<pallas_src>
import jax
import jax.numpy as jnp
from jax import lax
from jax.experimental import pallas as pl
from jax.experimental.pallas import tpu as pltpu


# ----------------------------------------------------------------------------
# Fused kernel: batched input projection + block-diagonal wavefront recurrence
# over all layers + fc + sigmoid, fully VMEM-resident.
# ----------------------------------------------------------------------------
def _make_fused_kernel(L, S, B, H):
    BH = L * H

    def kernel(x_ref, win_ref, bbig_ref, wbig_ref, fcw_ref, fcb_ref,
               o_ref, proj_ref, last_ref):
        hi = lax.Precision.HIGHEST

        # ---- Phase 1: ONE batched input projection for all timesteps -------
        # (S*B, D) @ (D, L*H) + (1, L*H).  The layer-0 lane block gets
        # x_t @ W_ih0^T + b0; layer>=1 lane blocks get exactly their bias
        # (their weight columns in win are zero), which is what the wavefront
        # recurrence needs at every step.
        proj_ref[...] = (
            jnp.dot(x_ref[...], win_ref[...],
                    preferred_element_type=jnp.float32, precision=hi)
            + bbig_ref[...])

        # ---- Phase 2: wavefront recurrence over all layers at once ---------
        # Carried state h = [h_0(t), h_1(t-1), ..., h_{L-1}(t-L+1)], (B, L*H).
        # wbig is block-upper-bidiagonal:
        #   block (l, l)   = W_hh_l^T   (same-layer hidden recurrence)
        #   block (l, l+1) = W_ih_{l+1}^T (layer l hidden -> layer l+1 input)
        # so one (B, L*H) @ (L*H, L*H) MXU push advances every layer by one
        # (staggered) time step.  Serial chain: S + L - 1 segments, not L * S.
        wbig = wbig_ref[...]
        if L > 1:
            lane = lax.broadcasted_iota(jnp.int32, (B, BH), 1)
        h = jnp.zeros((B, BH), jnp.float32)
        for u in range(S + L - 1):
            t0 = min(u, S - 1)      # layer-0 time index (clamped for pad steps;
                                    # the resulting layer-0 garbage for u >= S
                                    # is never consumed by a valid output)
            inp = proj_ref[pl.ds(t0 * B, B), :]
            h = jnp.tanh(inp + jnp.dot(h, wbig,
                                       preferred_element_type=jnp.float32,
                                       precision=hi))
            if L > 1 and u < L - 1:
                # Layers l > u have not started yet: their initial hidden state
                # must remain exactly zero (the bias alone would pollute it).
                h = jnp.where(lane < (u + 1) * H, h, 0.0)
            t_last = u - (L - 1)    # time index of the LAST layer this step
            if t_last >= 0:
                # fc only ever consumes out[:, -1, :]  ==  batch row B-1 of the
                # last layer, so store just that (1, H) row.  This store is off
                # the h dependence chain and hides under the next MXU push.
                last_ref[pl.ds(t_last, 1), :] = h[B - 1:B, (L - 1) * H:L * H]

        # ---- Phase 3: fc (H -> 1) as VPU multiply + lane reduce + sigmoid --
        scores = jnp.sum(last_ref[...] * fcw_ref[...], axis=-1, keepdims=True)
        o_ref[...] = jax.nn.sigmoid(scores + fcb_ref[...])      # (S, 1)

    return kernel


def _full_spec(shape):
    n = len(shape)
    return pl.BlockSpec(shape, lambda *_: (0,) * n)


# ----------------------------------------------------------------------------
# Full forward: one pallas_call.
#   layer_params: tuple of (wih_t (D_l, H), whh_t (H, H), bias (1, H))
#                 (weights pre-transposed; bias = b_ih + b_hh)
#   fc_w: (1, H) (PyTorch fc.weight), fc_b: (1, 1)
# ----------------------------------------------------------------------------
@jax.jit
def binary_rnn_forward(x, layer_params, fc_w, fc_b):
    S, B, D = x.shape
    H = layer_params[0][1].shape[0]
    L = len(layer_params)
    BH = L * H

    # Layer-0 input-projection weight, zero-padded so a single matmul produces
    # all L lane blocks; every layer's bias is folded in via b_big.
    w_in_big = jnp.concatenate(
        [layer_params[0][0]] + [jnp.zeros((D, H), jnp.float32)] * (L - 1),
        axis=1)                                                   # (D, L*H)
    b_big = jnp.concatenate([p[2] for p in layer_params], axis=1)  # (1, L*H)

    # Block-upper-bidiagonal recurrence weight (built once, outside the kernel).
    rows = []
    for l in range(L):
        blocks = []
        for j in range(L):
            if j == l:
                blocks.append(layer_params[l][1])          # W_hh_l^T  (H, H)
            elif j == l + 1:
                blocks.append(layer_params[l + 1][0])      # W_ih_{l+1}^T (H, H)
            else:
                blocks.append(jnp.zeros((H, H), jnp.float32))
        rows.append(jnp.concatenate(blocks, axis=1))
    w_big = jnp.concatenate(rows, axis=0)                  # (L*H, L*H)

    x_flat = x.reshape(S * B, D)

    # No grid: problem is tiny and fully VMEM-resident; the recurrence is
    # serial so nothing may be marked "parallel".  (v7x: if several independent
    # sequences were batched here, a leading "parallel" grid axis over them
    # would use the second TensorCore.)
    out = pl.pallas_call(
        _make_fused_kernel(L, S, B, H),
        out_shape=jax.ShapeDtypeStruct((S, 1), jnp.float32),
        in_specs=[_full_spec((S * B, D)),
                  _full_spec((D, BH)),
                  _full_spec((1, BH)),
                  _full_spec((BH, BH)),
                  _full_spec((1, H)),
                  _full_spec((1, 1))],
        out_specs=_full_spec((S, 1)),
        scratch_shapes=[pltpu.VMEM((S * B, BH), jnp.float32),   # projections
                        pltpu.VMEM((S, H), jnp.float32)],       # last-layer row B-1
    )(x_flat, w_in_big, b_big, w_big, fc_w, fc_b)
    return out[:, 0]                                       # squeeze(-1) -> (S,)


# ----------------------------------------------------------------------------
# Pure-JAX reference (for verification)
# ----------------------------------------------------------------------------
def ref_forward(x, layer_params, fc_w, fc_b):
    hi = lax.Precision.HIGHEST
    h_seq = x
    for (wih_t, whh_t, bias) in layer_params:
        H = whh_t.shape[0]

        def step(h, x_t, wih_t=wih_t, whh_t=whh_t, bias=bias):
            h_new = jnp.tanh(jnp.dot(x_t, wih_t, precision=hi)
                             + jnp.dot(h, whh_t, precision=hi)
                             + bias[0])
            return h_new, h_new

        h0 = jnp.zeros((x.shape[1], H), jnp.float32)
        _, h_seq = lax.scan(step, h0, h_seq)
    last = h_seq[:, -1, :]                                 # (S, H)
    logits = jnp.dot(last, fc_w.T, precision=hi) + fc_b    # (S, 1)
    return jax.nn.sigmoid(logits)[:, 0]


if __name__ == "__main__":
    # Small shapes: seq=8, batch=2, input_size=4, hidden=32, num_layers=2
    S, B, INPUT, HIDDEN, LAYERS = 8, 2, 4, 32, 2

    key = jax.random.PRNGKey(0)
    k = 1.0 / jnp.sqrt(HIDDEN)

    layer_params = []
    d_in = INPUT
    for l in range(LAYERS):
        key, k1, k2, k3, k4 = jax.random.split(key, 5)
        # PyTorch stores W_ih (H, D_in), W_hh (H, H); we keep them transposed.
        wih_t = jax.random.uniform(k1, (d_in, HIDDEN), jnp.float32, -k, k)
        whh_t = jax.random.uniform(k2, (HIDDEN, HIDDEN), jnp.float32, -k, k)
        b_ih = jax.random.uniform(k3, (HIDDEN,), jnp.float32, -k, k)
        b_hh = jax.random.uniform(k4, (HIDDEN,), jnp.float32, -k, k)
        layer_params.append((wih_t, whh_t, (b_ih + b_hh).reshape(1, HIDDEN)))
        d_in = HIDDEN

    key, kf1, kf2, kx = jax.random.split(key, 4)
    fc_w = jax.random.uniform(kf1, (1, HIDDEN), jnp.float32, -k, k)  # fc.weight
    fc_b = jax.random.uniform(kf2, (1, 1), jnp.float32, -k, k)

    x = jax.random.normal(kx, (S, B, INPUT), jnp.float32)

    out = binary_rnn_forward(x, tuple(layer_params), fc_w, fc_b)
    out = jax.block_until_ready(out)

    ref = ref_forward(x, layer_params, fc_w, fc_b)
    assert out.shape == (S,), out.shape
    assert jnp.allclose(out, ref, rtol=1e-5, atol=1e-5), (out, ref)

    print("KERNEL_OK")
</pallas_src>

<mosaic_0001>
module attributes {stable_mosaic.version = 11 : i64} {
  func.func @kernel(%arg0: memref<16x4xf32, #tpu.memory_space<vmem>>, %arg1: memref<4x64xf32, #tpu.memory_space<vmem>>, %arg2: memref<1x64xf32, #tpu.memory_space<vmem>>, %arg3: memref<64x64xf32, #tpu.memory_space<vmem>>, %arg4: memref<1x32xf32, #tpu.memory_space<vmem>>, %arg5: memref<1x1xf32, #tpu.memory_space<vmem>>, %arg6: memref<8x1xf32, #tpu.memory_space<vmem>>, %arg7: memref<16x64xf32, #tpu.memory_space<vmem>>, %arg8: memref<8x32xf32, #tpu.memory_space<vmem>>) attributes {dimension_semantics = [], scalar_prefetch = 0 : i64, scratch_operands = 2 : i64, tpu.core_type = #tpu.core_type<tc>} {
    %c0 = arith.constant 0 : index
    %c0_0 = arith.constant 0 : index
    %0 = vector.load %arg0[%c0, %c0_0] : memref<16x4xf32, #tpu.memory_space<vmem>>, vector<16x4xf32>
    %c0_1 = arith.constant 0 : index
    %c0_2 = arith.constant 0 : index
    %1 = vector.load %arg1[%c0_1, %c0_2] : memref<4x64xf32, #tpu.memory_space<vmem>>, vector<4x64xf32>
    %cst = arith.constant dense<0.000000e+00> : vector<16x64xf32>
    %2 = tpu.matmul %0, %1, %cst {dimension_numbers = #tpu.dot_dimension_numbers<[1], [0], [0], [1], [0, 0, 1, 1], [], []>, precision = #tpu.contract_precision<fp32>} : vector<16x4xf32>, vector<4x64xf32>, vector<16x64xf32> -> vector<16x64xf32>
    %c0_3 = arith.constant 0 : index
    %c0_4 = arith.constant 0 : index
    %3 = vector.load %arg2[%c0_3, %c0_4] : memref<1x64xf32, #tpu.memory_space<vmem>>, vector<1x64xf32>
    %4 = vector.broadcast %3 : vector<1x64xf32> to vector<16x64xf32>
    %5 = arith.addf %2, %4 : vector<16x64xf32>
    %c0_5 = arith.constant 0 : index
    %c0_6 = arith.constant 0 : index
    %6 = vector.load %arg7[%c0_5, %c0_6] : memref<16x64xf32, #tpu.memory_space<vmem>>, vector<16x64xf32>
    tpu.vector_store %arg7[%c0_5, %c0_6], %5 {strides = array<i32>} : memref<16x64xf32, #tpu.memory_space<vmem>>, vector<16x64xf32>,
    %c0_7 = arith.constant 0 : index
    %c0_8 = arith.constant 0 : index
    %7 = vector.load %arg3[%c0_7, %c0_8] : memref<64x64xf32, #tpu.memory_space<vmem>>, vector<64x64xf32>
    %8 = tpu.iota {dimensions = array<i32: 1>} : vector<2x64xi32>
    %cst_9 = arith.constant 0.000000e+00 : f32
    %9 = vector.broadcast %cst_9 : f32 to vector<2x64xf32>
    %c0_10 = arith.constant 0 : index
    %c0_11 = arith.constant 0 : index
    %10 = vector.load %arg7[%c0_10, %c0_11] : memref<16x64xf32, #tpu.memory_space<vmem>>, vector<2x64xf32>
    %cst_12 = arith.constant dense<0.000000e+00> : vector<2x64xf32>
    %11 = tpu.matmul %9, %7, %cst_12 {dimension_numbers = #tpu.dot_dimension_numbers<[1], [0], [0], [1], [0, 0, 1, 1], [], []>, precision = #tpu.contract_precision<fp32>} : vector<2x64xf32>, vector<64x64xf32>, vector<2x64xf32> -> vector<2x64xf32>
    %12 = arith.addf %10, %11 : vector<2x64xf32>
    %13 = math.tanh %12 : vector<2x64xf32>
    %c32_i32 = arith.constant 32 : i32
    %14 = vector.broadcast %c32_i32 : i32 to vector<2x64xi32>
    %15 = arith.cmpi slt, %8, %14 : vector<2x64xi32>
    %cst_13 = arith.constant 0.000000e+00 : f32
    %16 = vector.broadcast %cst_13 : f32 to vector<2x64xf32>
    %17 = arith.select %15, %13, %16 : vector<2x64xi1>, vector<2x64xf32>
    %c2 = arith.constant 2 : index
    %c0_14 = arith.constant 0 : index
    %18 = vector.load %arg7[%c2, %c0_14] : memref<16x64xf32, #tpu.memory_space<vmem>>, vector<2x64xf32>
    %cst_15 = arith.constant dense<0.000000e+00> : vector<2x64xf32>
    %19 = tpu.matmul %17, %7, %cst_15 {dimension_numbers = #tpu.dot_dimension_numbers<[1], [0], [0], [1], [0, 0, 1, 1], [], []>, precision = #tpu.contract_precision<fp32>} : vector<2x64xf32>, vector<64x64xf32>, vector<2x64xf32> -> vector<2x64xf32>
    %20 = arith.addf %18, %19 : vector<2x64xf32>
    %21 = math.tanh %20 : vector<2x64xf32>
    %22 = vector.extract_strided_slice %21 {offsets = [1, 32], sizes = [1, 32], strides = [1, 1]} : vector<2x64xf32> to vector<1x32xf32>
    %c0_16 = arith.constant 0 : index
    %c0_17 = arith.constant 0 : index
    %23 = vector.load %arg8[%c0_16, %c0_17] : memref<8x32xf32, #tpu.memory_space<vmem>>, vector<1x32xf32>
    tpu.vector_store %arg8[%c0_16, %c0_17], %22 {strides = array<i32>} : memref<8x32xf32, #tpu.memory_space<vmem>>, vector<1x32xf32>,
    %c4 = arith.constant 4 : index
    %c0_18 = arith.constant 0 : index
    %24 = vector.load %arg7[%c4, %c0_18] : memref<16x64xf32, #tpu.memory_space<vmem>>, vector<2x64xf32>
    %cst_19 = arith.constant dense<0.000000e+00> : vector<2x64xf32>
    %25 = tpu.matmul %21, %7, %cst_19 {dimension_numbers = #tpu.dot_dimension_numbers<[1], [0], [0], [1], [0, 0, 1, 1], [], []>, precision = #tpu.contract_precision<fp32>} : vector<2x64xf32>, vector<64x64xf32>, vector<2x64xf32> -> vector<2x64xf32>
    %26 = arith.addf %24, %25 : vector<2x64xf32>
    %27 = math.tanh %26 : vector<2x64xf32>
    %28 = vector.extract_strided_slice %27 {offsets = [1, 32], sizes = [1, 32], strides = [1, 1]} : vector<2x64xf32> to vector<1x32xf32>
    %c1 = arith.constant 1 : index
    %c0_20 = arith.constant 0 : index
    %29 = vector.load %arg8[%c1, %c0_20] : memref<8x32xf32, #tpu.memory_space<vmem>>, vector<1x32xf32>
    tpu.vector_store %arg8[%c1, %c0_20], %28 {strides = array<i32>} : memref<8x32xf32, #tpu.memory_space<vmem>>, vector<1x32xf32>,
    %c6 = arith.constant 6 : index
    %c0_21 = arith.constant 0 : index
    %30 = vector.load %arg7[%c6, %c0_21] : memref<16x64xf32, #tpu.memory_space<vmem>>, vector<2x64xf32>
    %cst_22 = arith.constant dense<0.000000e+00> : vector<2x64xf32>
    %31 = tpu.matmul %27, %7, %cst_22 {dimension_numbers = #tpu.dot_dimension_numbers<[1], [0], [0], [1], [0, 0, 1, 1], [], []>, precision = #tpu.contract_precision<fp32>} : vector<2x64xf32>, vector<64x64xf32>, vector<2x64xf32> -> vector<2x64xf32>
    %32 = arith.addf %30, %31 : vector<2x64xf32>
    %33 = math.tanh %32 : vector<2x64xf32>
    %34 = vector.extract_strided_slice %33 {offsets = [1, 32], sizes = [1, 32], strides = [1, 1]} : vector<2x64xf32> to vector<1x32xf32>
    %c2_23 = arith.constant 2 : index
    %c0_24 = arith.constant 0 : index
    %35 = vector.load %arg8[%c2_23, %c0_24] : memref<8x32xf32, #tpu.memory_space<vmem>>, vector<1x32xf32>
    tpu.vector_store %arg8[%c2_23, %c0_24], %34 {strides = array<i32>} : memref<8x32xf32, #tpu.memory_space<vmem>>, vector<1x32xf32>,
    %c8 = arith.constant 8 : index
    %c0_25 = arith.constant 0 : index
    %36 = vector.load %arg7[%c8, %c0_25] : memref<16x64xf32, #tpu.memory_space<vmem>>, vector<2x64xf32>
    %cst_26 = arith.constant dense<0.000000e+00> : vector<2x64xf32>
    %37 = tpu.matmul %33, %7, %cst_26 {dimension_numbers = #tpu.dot_dimension_numbers<[1], [0], [0], [1], [0, 0, 1, 1], [], []>, precision = #tpu.contract_precision<fp32>} : vector<2x64xf32>, vector<64x64xf32>, vector<2x64xf32> -> vector<2x64xf32>
    %38 = arith.addf %36, %37 : vector<2x64xf32>
    %39 = math.tanh %38 : vector<2x64xf32>
    %40 = vector.extract_strided_slice %39 {offsets = [1, 32], sizes = [1, 32], strides = [1, 1]} : vector<2x64xf32> to vector<1x32xf32>
    %c3 = arith.constant 3 : index
    %c0_27 = arith.constant 0 : index
    %41 = vector.load %arg8[%c3, %c0_27] : memref<8x32xf32, #tpu.memory_space<vmem>>, vector<1x32xf32>
    tpu.vector_store %arg8[%c3, %c0_27], %40 {strides = array<i32>} : memref<8x32xf32, #tpu.memory_space<vmem>>, vector<1x32xf32>,
    %c10 = arith.constant 10 : index
    %c0_28 = arith.constant 0 : index
    %42 = vector.load %arg7[%c10, %c0_28] : memref<16x64xf32, #tpu.memory_space<vmem>>, vector<2x64xf32>
    %cst_29 = arith.constant dense<0.000000e+00> : vector<2x64xf32>
    %43 = tpu.matmul %39, %7, %cst_29 {dimension_numbers = #tpu.dot_dimension_numbers<[1], [0], [0], [1], [0, 0, 1, 1], [], []>, precision = #tpu.contract_precision<fp32>} : vector<2x64xf32>, vector<64x64xf32>, vector<2x64xf32> -> vector<2x64xf32>
    %44 = arith.addf %42, %43 : vector<2x64xf32>
    %45 = math.tanh %44 : vector<2x64xf32>
    %46 = vector.extract_strided_slice %45 {offsets = [1, 32], sizes = [1, 32], strides = [1, 1]} : vector<2x64xf32> to vector<1x32xf32>
    %c4_30 = arith.constant 4 : index
    %c0_31 = arith.constant 0 : index
    %47 = vector.load %arg8[%c4_30, %c0_31] : memref<8x32xf32, #tpu.memory_space<vmem>>, vector<1x32xf32>
    tpu.vector_store %arg8[%c4_30, %c0_31], %46 {strides = array<i32>} : memref<8x32xf32, #tpu.memory_space<vmem>>, vector<1x32xf32>,
    %c12 = arith.constant 12 : index
    %c0_32 = arith.constant 0 : index
    %48 = vector.load %arg7[%c12, %c0_32] : memref<16x64xf32, #tpu.memory_space<vmem>>, vector<2x64xf32>
    %cst_33 = arith.constant dense<0.000000e+00> : vector<2x64xf32>
    %49 = tpu.matmul %45, %7, %cst_33 {dimension_numbers = #tpu.dot_dimension_numbers<[1], [0], [0], [1], [0, 0, 1, 1], [], []>, precision = #tpu.contract_precision<fp32>} : vector<2x64xf32>, vector<64x64xf32>, vector<2x64xf32> -> vector<2x64xf32>
    %50 = arith.addf %48, %49 : vector<2x64xf32>
    %51 = math.tanh %50 : vector<2x64xf32>
    %52 = vector.extract_strided_slice %51 {offsets = [1, 32], sizes = [1, 32], strides = [1, 1]} : vector<2x64xf32> to vector<1x32xf32>
    %c5 = arith.constant 5 : index
    %c0_34 = arith.constant 0 : index
    %53 = vector.load %arg8[%c5, %c0_34] : memref<8x32xf32, #tpu.memory_space<vmem>>, vector<1x32xf32>
    tpu.vector_store %arg8[%c5, %c0_34], %52 {strides = array<i32>} : memref<8x32xf32, #tpu.memory_space<vmem>>, vector<1x32xf32>,
    %c14 = arith.constant 14 : index
    %c0_35 = arith.constant 0 : index
    %54 = vector.load %arg7[%c14, %c0_35] : memref<16x64xf32, #tpu.memory_space<vmem>>, vector<2x64xf32>
    %cst_36 = arith.constant dense<0.000000e+00> : vector<2x64xf32>
    %55 = tpu.matmul %51, %7, %cst_36 {dimension_numbers = #tpu.dot_dimension_numbers<[1], [0], [0], [1], [0, 0, 1, 1], [], []>, precision = #tpu.contract_precision<fp32>} : vector<2x64xf32>, vector<64x64xf32>, vector<2x64xf32> -> vector<2x64xf32>
    %56 = arith.addf %54, %55 : vector<2x64xf32>
    %57 = math.tanh %56 : vector<2x64xf32>
    %58 = vector.extract_strided_slice %57 {offsets = [1, 32], sizes = [1, 32], strides = [1, 1]} : vector<2x64xf32> to vector<1x32xf32>
    %c6_37 = arith.constant 6 : index
    %c0_38 = arith.constant 0 : index
    %59 = vector.load %arg8[%c6_37, %c0_38] : memref<8x32xf32, #tpu.memory_space<vmem>>, vector<1x32xf32>
    tpu.vector_store %arg8[%c6_37, %c0_38], %58 {strides = array<i32>} : memref<8x32xf32, #tpu.memory_space<vmem>>, vector<1x32xf32>,
    %c14_39 = arith.constant 14 : index
    %c0_40 = arith.constant 0 : index
    %60 = vector.load %arg7[%c14_39, %c0_40] : memref<16x64xf32, #tpu.memory_space<vmem>>, vector<2x64xf32>
    %cst_41 = arith.constant dense<0.000000e+00> : vector<2x64xf32>
    %61 = tpu.matmul %57, %7, %cst_41 {dimension_numbers = #tpu.dot_dimension_numbers<[1], [0], [0], [1], [0, 0, 1, 1], [], []>, precision = #tpu.contract_precision<fp32>} : vector<2x64xf32>, vector<64x64xf32>, vector<2x64xf32> -> vector<2x64xf32>
    %62 = arith.addf %60, %61 : vector<2x64xf32>
    %63 = math.tanh %62 : vector<2x64xf32>
    %64 = vector.extract_strided_slice %63 {offsets = [1, 32], sizes = [1, 32], strides = [1, 1]} : vector<2x64xf32> to vector<1x32xf32>
    %c7 = arith.constant 7 : index
    %c0_42 = arith.constant 0 : index
    %65 = vector.load %arg8[%c7, %c0_42] : memref<8x32xf32, #tpu.memory_space<vmem>>, vector<1x32xf32>
    tpu.vector_store %arg8[%c7, %c0_42], %64 {strides = array<i32>} : memref<8x32xf32, #tpu.memory_space<vmem>>, vector<1x32xf32>,
    %c0_43 = arith.constant 0 : index
    %c0_44 = arith.constant 0 : index
    %66 = vector.load %arg8[%c0_43, %c0_44] : memref<8x32xf32, #tpu.memory_space<vmem>>, vector<8x32xf32>
    %c0_45 = arith.constant 0 : index
    %c0_46 = arith.constant 0 : index
    %67 = vector.load %arg4[%c0_45, %c0_46] : memref<1x32xf32, #tpu.memory_space<vmem>>, vector<1x32xf32>
    %68 = vector.broadcast %67 : vector<1x32xf32> to vector<8x32xf32>
    %69 = arith.mulf %66, %68 : vector<8x32xf32>
    %cst_47 = arith.constant dense<0.000000e+00> : vector<8xf32>
    %70 = vector.multi_reduction <add>, %69, %cst_47 [1] : vector<8x32xf32> to vector<8xf32>
    %71 = vector.shape_cast %70 : vector<8xf32> to vector<8x1xf32>
    %c0_48 = arith.constant 0 : index
    %c0_49 = arith.constant 0 : index
    %72 = vector.load %arg5[%c0_48, %c0_49] : memref<1x1xf32, #tpu.memory_space<vmem>>, vector<1x1xf32>
    %73 = vector.broadcast %72 : vector<1x1xf32> to vector<8x1xf32>
    %74 = arith.addf %71, %73 : vector<8x1xf32>
    %75 = arith.negf %74 : vector<8x1xf32>
    %76 = math.exp %75 : vector<8x1xf32>
    %cst_50 = arith.constant 1.000000e+00 : f32
    %77 = vector.broadcast %cst_50 : f32 to vector<8x1xf32>
    %78 = arith.addf %77, %76 : vector<8x1xf32>
    %79 = arith.divf %77, %78 : vector<8x1xf32>
    %c0_51 = arith.constant 0 : index
    %c0_52 = arith.constant 0 : index
    %80 = vector.load %arg6[%c0_51, %c0_52] : memref<8x1xf32, #tpu.memory_space<vmem>>, vector<8x1xf32>
    tpu.vector_store %arg6[%c0_51, %c0_52], %79 {strides = array<i32>} : memref<8x1xf32, #tpu.memory_space<vmem>>, vector<8x1xf32>,
    return
  }
}

</mosaic_0001>

<llo_original>
// kernel: binary_rnn_forward.1
$region0: #{binary_rnn_forward.1}
  #allocation0 [shape = 'u32[]', space=smem, size = 0x4, offset = 0x4, fixed_abs, tag = 'smem constant byte address 0x4 - core index']
  #allocation1 [shape = 'u32[144,128]{1,0:T(1,128)}', space=vmem, size = 0x12000, scoped, tag = 'internal scratch']
  #allocation2 [shape = 'f32[16,64]{1,0:T(8,128)}', space=vmem, size = 0x2000, scoped, tag = 'scratch operand']
  #allocation3 [shape = 'f32[8,32]{1,0:T(8,128)}', space=vmem, size = 0x1000, scoped, tag = 'scratch operand']
  #allocation4 [shape = 'f32[1,1]{1,0:T(1,128)S(1)}', space=vmem, size = 0x200, scoped, tag = 'scoped memory for binary_rnn_forward.1']
  %s0 = inlined_call_operand.vmem [shape: f32[16,4], index: 0, kind: input, shape index: {}]
  %s1 = inlined_call_operand.vmem [shape: f32[4,64], index: 1, kind: input, shape index: {}]
  %s2 = inlined_call_operand.vmem [shape: f32[1,64], index: 2, kind: input, shape index: {}]
  %s3 = inlined_call_operand.vmem [shape: f32[64,64], index: 3, kind: input, shape index: {}]
  %s4 = inlined_call_operand.vmem [shape: f32[1,32], index: 4, kind: input, shape index: {}]
  %s5 = inlined_call_operand.<no memory space> [shape: f32[1,1], index: 5, kind: input, shape index: {}]
  %s6 = inlined_call_operand.vmem [shape: f32[8,1], index: 6, kind: output, shape index: {}]
  %s7 = sld [smem:[#allocation0]]
  $region34: #{binary_rnn_forward.1} parent=0
    _
  %s9 = ssub.s32 1, %s7
  %s10 = scalar_select 0, %s9, %s7
  %v11 = vstv %s5
  %12 = vst [vmem:[#allocation4] sm:$0x1] %v11
  // Predicated region
  $region2: #{binary_rnn_forward.1} parent=0 // pred_check
    _
  $region3: #{binary_rnn_forward.1} parent=0 // pred_check_branch
    %14 = sbr.rel (0) target = $region5
  $region4: #{binary_rnn_forward.1} parent=0 // pred_region
    _
  $region5: #{binary_rnn_forward.1} parent=0 // pred_fallthru
    _
  // Predicated region
  $region6: #{binary_rnn_forward.1} parent=0 // pred_check
    _
  $region7: #{binary_rnn_forward.1} parent=0 // pred_check_branch
    %16 = sbr.rel (0) target = $region9
  $region8: #{binary_rnn_forward.1} parent=0 // pred_region
    _
  $region9: #{binary_rnn_forward.1} parent=0 // pred_fallthru
    _
  // Predicated region
  $region10: #{binary_rnn_forward.1} parent=0 // pred_check
    _
  $region11: #{binary_rnn_forward.1} parent=0 // pred_check_branch
    %18 = sbr.rel (0) target = $region13
  $region12: #{binary_rnn_forward.1} parent=0 // pred_region
    _
  $region13: #{binary_rnn_forward.1} parent=0 // pred_fallthru
    _
  // Predicated region
  $region14: #{binary_rnn_forward.1} parent=0 // pred_check
    _
  $region15: #{binary_rnn_forward.1} parent=0 // pred_check_branch
    %20 = sbr.rel (0) target = $region17
  $region16: #{binary_rnn_forward.1} parent=0 // pred_region
    _
  $region17: #{binary_rnn_forward.1} parent=0 // pred_fallthru
    _
  // Predicated region
  $region18: #{binary_rnn_forward.1} parent=0 // pred_check
    _
  $region19: #{binary_rnn_forward.1} parent=0 // pred_check_branch
    %22 = sbr.rel (0) target = $region21
  $region20: #{binary_rnn_forward.1} parent=0 // pred_region
    _
  $region21: #{binary_rnn_forward.1} parent=0 // pred_fallthru
    _
  // Predicated region
  $region22: #{binary_rnn_forward.1} parent=0 // pred_check
    _
  $region23: #{binary_rnn_forward.1} parent=0 // pred_check_branch
    %24 = sbr.rel (0) target = $region25
  $region24: #{binary_rnn_forward.1} parent=0 // pred_region
    _
  $region25: #{binary_rnn_forward.1} parent=0 // pred_fallthru
    _
  %v25 = vld [vmem:[%s0] sm:$0xff]
  %v26 = vld [vmem:[%s0 + $0x8] sm:$0xff]
  %v27 = vld [vmem:[%s1] sm:$0xf]
  %v28 = vld [vmem:[%s2] sm:$0x1]
  %v30 = vlaneseq
  %v31 = vshrl.u32 %v30, 7
  %v32 = vsub.s32 0, %v31
  %v33 = vrot.slane %v28, %v32
  %vm35 = vcmask 31744
  %v37 = vsel %vm35, %v25, 0
  %v40 = vsel %vm35, %v26, 0
  %vm42 = vcmask 1043456
  %v44 = vsel %vm42, %v27, 0
  %46 = vmatprep.subr.mxu0 0.0
  %v47 = vand.u32 %v44, 4294901760
  %48 = vmatpush1.msra.mxu0 %v47
  %49 = vmatprep.subr.mxu0 0.0
  %50 = vmatpush1.msra.mxu0 0.0
  %51 = vmatprep.subr.mxu0 0.0
  %52 = vmatpush1.msra.mxu0 0.0
  %53 = vmatprep.subr.mxu0 0.0
  %54 = vmatpush1.msra.mxu0 0.0
  %55 = vmatprep.subr.mxu0 0.0
  %56 = vmatpush1.msra.mxu0 0.0
  %57 = vmatprep.subr.mxu0 0.0
  %58 = vmatpush1.msra.mxu0 0.0
  %59 = vmatprep.subr.mxu0 0.0
  %60 = vmatpush1.msra.mxu0 0.0
  %61 = vmatprep.subr.mxu0 0.0
  %62 = vmatpush1.msra.mxu0 0.0
  %63 = vmatprep.subr.mxu0 0.0
  %64 = vmatpush1.msra.mxu0 0.0
  %65 = vmatprep.subr.mxu0 0.0
  %66 = vmatpush1.msra.mxu0 0.0
  %67 = vmatprep.subr.mxu0 0.0
  %68 = vmatpush1.msra.mxu0 0.0
  %69 = vmatprep.subr.mxu0 0.0
  %70 = vmatpush1.msra.mxu0 0.0
  %71 = vmatprep.subr.mxu0 0.0
  %72 = vmatpush1.msra.mxu0 0.0
  %73 = vmatprep.subr.mxu0 0.0
  %74 = vmatpush1.msra.mxu0 0.0
  %75 = vmatprep.subr.mxu0 0.0
  %76 = vmatpush1.msra.mxu0 0.0
  %77 = vmatprep.subr.mxu0 0.0
  %78 = vmatpush1.msra.mxu0 0.0
  %79 = vmatprep.subr.mxu0 0.0
  %80 = vmatpush1.msra.mxu0 0.0
  %81 = vmatprep.subr.mxu0 0.0
  %82 = vmatpush1.msra.mxu0 0.0
  %83 = vmatprep.subr.mxu0 0.0
  %84 = vmatpush1.msra.mxu0 0.0
  %85 = vmatprep.subr.mxu0 0.0
  %86 = vmatpush1.msra.mxu0 0.0
  %87 = vmatprep.subr.mxu0 0.0
  %88 = vmatpush1.msra.mxu0 0.0
  %89 = vmatprep.subr.mxu0 0.0
  %90 = vmatpush1.msra.mxu0 0.0
  %91 = vmatprep.subr.mxu0 0.0
  %92 = vmatpush1.msra.mxu0 0.0
  %93 = vmatprep.subr.mxu0 0.0
  %94 = vmatpush1.msra.mxu0 0.0
  %95 = vmatprep.subr.mxu0 0.0
  %96 = vmatpush1.msra.mxu0 0.0
  %97 = vmatprep.subr.mxu0 0.0
  %98 = vmatpush1.msra.mxu0 0.0
  %99 = vmatprep.subr.mxu0 0.0
  %100 = vmatpush1.msra.mxu0 0.0
  %101 = vmatprep.subr.mxu0 0.0
  %102 = vmatpush1.msra.mxu0 0.0
  %103 = vmatprep.subr.mxu0 0.0
  %104 = vmatpush1.msra.mxu0 0.0
  %105 = vmatprep.subr.mxu0 0.0
  %106 = vmatpush1.msra.mxu0 0.0
  %107 = vmatprep.subr.mxu0 0.0
  %108 = vmatpush1.msra.mxu0 0.0
  %109 = vmatprep.subr.mxu0 0.0
  %110 = vmatpush1.msra.mxu0 0.0
  %111 = vmatprep.mubr.f32.mxu0 0.0
  %v112 = vand.u32 %v37, 4294901760
  %v113 = vsub.f32 %v37, %v112
  %v114 = vand.u32 %v113, 4294901760
  %v115 = vsub.f32 %v113, %v114
  %v116 = vand.u32 %v115, 4294901760
  %117 = vmatmul.mubr.f32.gmra.mrb[0].mxu0 %v116
  %v118 = vpop.f32.mrb[0].mxu0
  %v119 = vadd.f32 %v33, %v118
  %v120 = vpop.f32.mrb[0].mxu0
  %121 = vmatprep.mubr.f32.mxu0 0.0
  %v122 = vand.u32 %v40, 4294901760
  %v123 = vsub.f32 %v40, %v122
  %v124 = vand.u32 %v123, 4294901760
  %v125 = vsub.f32 %v123, %v124
  %v126 = vand.u32 %v125, 4294901760
  %127 = vmatmul.mubr.f32.gmra.mrb[0].mxu0 %v126
  %v128 = vpop.f32.mrb[0].mxu0
  %v129 = vadd.f32 %v33, %v128
  %v130 = vpop.f32.mrb[0].mxu0
  %131 = vdwg.mxu0
  %132 = vmatprep.subr.mxu0 0.0
  %v133 = vand.u32 %v44, 4294901760
  %v134 = vsub.f32 %v44, %v133
  %v135 = vand.u32 %v134, 4294901760
  %v136 = vsub.f32 %v134, %v135
  %v137 = vand.u32 %v136, 4294901760
  %138 = vmatpush1.msra.mxu0 %v137
  %139 = vmatprep.subr.mxu0 0.0
  %140 = vmatpush1.msra.mxu0 0.0
  %141 = vmatprep.subr.mxu0 0.0
  %142 = vmatpush1.msra.mxu0 0.0
  %143 = vmatprep.subr.mxu0 0.0
  %144 = vmatpush1.msra.mxu0 0.0
  %145 = vmatprep.subr.mxu0 0.0
  %146 = vmatpush1.msra.mxu0 0.0
  %147 = vmatprep.subr.mxu0 0.0
  %148 = vmatpush1.msra.mxu0 0.0
  %149 = vmatprep.subr.mxu0 0.0
  %150 = vmatpush1.msra.mxu0 0.0
  %151 = vmatprep.subr.mxu0 0.0
  %152 = vmatpush1.msra.mxu0 0.0
  %153 = vmatprep.subr.mxu0 0.0
  %154 = vmatpush1.msra.mxu0 0.0
  %155 = vmatprep.subr.mxu0 0.0
  %156 = vmatpush1.msra.mxu0 0.0
  %157 = vmatprep.subr.mxu0 0.0
  %158 = vmatpush1.msra.mxu0 0.0
  %159 = vmatprep.subr.mxu0 0.0
  %160 = vmatpush1.msra.mxu0 0.0
  %161 = vmatprep.subr.mxu0 0.0
  %162 = vmatpush1.msra.mxu0 0.0
  %163 = vmatprep.subr.mxu0 0.0
  %164 = vmatpush1.msra.mxu0 0.0
  %165 = vmatprep.subr.mxu0 0.0
  %166 = vmatpush1.msra.mxu0 0.0
  %167 = vmatprep.subr.mxu0 0.0
  %168 = vmatpush1.msra.mxu0 0.0
  %169 = vmatprep.subr.mxu0 0.0
  %170 = vmatpush1.msra.mxu0 0.0
  %171 = vmatprep.subr.mxu0 0.0
  %172 = vmatpush1.msra.mxu0 0.0
  %173 = vmatprep.subr.mxu0 0.0
  %174 = vmatpush1.msra.mxu0 0.0
  %175 = vmatprep.subr.mxu0 0.0
  %176 = vmatpush1.msra.mxu0 0.0
  %177 = vmatprep.subr.mxu0 0.0
  %178 = vmatpush1.msra.mxu0 0.0
  %179 = vmatprep.subr.mxu0 0.0
  %180 = vmatpush1.msra.mxu0 0.0
  %181 = vmatprep.subr.mxu0 0.0
  %182 = vmatpush1.msra.mxu0 0.0
  %183 = vmatprep.subr.mxu0 0.0
  %184 = vmatpush1.msra.mxu0 0.0
  %185 = vmatprep.subr.mxu0 0.0
  %186 = vmatpush1.msra.mxu0 0.0
  %187 = vmatprep.subr.mxu0 0.0
  %188 = vmatpush1.msra.mxu0 0.0
  %189 = vmatprep.subr.mxu0 0.0
  %190 = vmatpush1.msra.mxu0 0.0
  %191 = vmatprep.subr.mxu0 0.0
  %192 = vmatpush1.msra.mxu0 0.0
  %193 = vmatprep.subr.mxu0 0.0
  %194 = vmatpush1.msra.mxu0 0.0
  %195 = vmatprep.subr.mxu0 0.0
  %196 = vmatpush1.msra.mxu0 0.0
  %197 = vmatprep.subr.mxu0 0.0
  %198 = vmatpush1.msra.mxu0 0.0
  %199 = vmatprep.subr.mxu0 0.0
  %200 = vmatpush1.msra.mxu0 0.0
  %201 = vmatprep.mubr.f32.mxu0 0.0
  %v202 = vand.u32 %v37, 4294901760
  %203 = vmatmul.mubr.f32.gmra.mrb[0].mxu0 %v202
  %v204 = vpop.f32.mrb[0].mxu0
  %v205 = vadd.f32 %v119, %v204
  %v206 = vpop.f32.mrb[0].mxu0
  %207 = vmatprep.mubr.f32.mxu0 0.0
  %v208 = vand.u32 %v40, 4294901760
  %209 = vmatmul.mubr.f32.gmra.mrb[0].mxu0 %v208
  %v210 = vpop.f32.mrb[0].mxu0
  %v211 = vadd.f32 %v129, %v210
  %v212 = vpop.f32.mrb[0].mxu0
  %213 = vdwg.mxu0
  %214 = vmatprep.subr.mxu0 0.0
  %v215 = vand.u32 %v44, 4294901760
  %v216 = vsub.f32 %v44, %v215
  %217 = vmatpush1.msra.mxu0 %v216
  %218 = vmatprep.subr.mxu0 0.0
  %219 = vmatpush1.msra.mxu0 0.0
  %220 = vmatprep.subr.mxu0 0.0
  %221 = vmatpush1.msra.mxu0 0.0
  %222 = vmatprep.subr.mxu0 0.0
  %223 = vmatpush1.msra.mxu0 0.0
  %224 = vmatprep.subr.mxu0 0.0
  %225 = vmatpush1.msra.mxu0 0.0
  %226 = vmatprep.subr.mxu0 0.0
  %227 = vmatpush1.msra.mxu0 0.0
  %228 = vmatprep.subr.mxu0 0.0
  %229 = vmatpush1.msra.mxu0 0.0
  %230 = vmatprep.subr.mxu0 0.0
  %231 = vmatpush1.msra.mxu0 0.0
  %232 = vmatprep.subr.mxu0 0.0
  %233 = vmatpush1.msra.mxu0 0.0
  %234 = vmatprep.subr.mxu0 0.0
  %235 = vmatpush1.msra.mxu0 0.0
  %236 = vmatprep.subr.mxu0 0.0
  %237 = vmatpush1.msra.mxu0 0.0
  %238 = vmatprep.subr.mxu0 0.0
  %239 = vmatpush1.msra.mxu0 0.0
  %240 = vmatprep.subr.mxu0 0.0
  %241 = vmatpush1.msra.mxu0 0.0
  %242 = vmatprep.subr.mxu0 0.0
  %243 = vmatpush1.msra.mxu0 0.0
  %244 = vmatprep.subr.mxu0 0.0
  %245 = vmatpush1.msra.mxu0 0.0
  %246 = vmatprep.subr.mxu0 0.0
  %247 = vmatpush1.msra.mxu0 0.0
  %248 = vmatprep.subr.mxu0 0.0
  %249 = vmatpush1.msra.mxu0 0.0
  %250 = vmatprep.subr.mxu0 0.0
  %251 = vmatpush1.msra.mxu0 0.0
  %252 = vmatprep.subr.mxu0 0.0
  %253 = vmatpush1.msra.mxu0 0.0
  %254 = vmatprep.subr.mxu0 0.0
  %255 = vmatpush1.msra.mxu0 0.0
  %256 = vmatprep.subr.mxu0 0.0
  %257 = vmatpush1.msra.mxu0 0.0
  %258 = vmatprep.subr.mxu0 0.0
  %259 = vmatpush1.msra.mxu0 0.0
  %260 = vmatprep.subr.mxu0 0.0
  %261 = vmatpush1.msra.mxu0 0.0
  %262 = vmatprep.subr.mxu0 0.0
  %263 = vmatpush1.msra.mxu0 0.0
  %264 = vmatprep.subr.mxu0 0.0
  %265 = vmatpush1.msra.mxu0 0.0
  %266 = vmatprep.subr.mxu0 0.0
  %267 = vmatpush1.msra.mxu0 0.0
  %268 = vmatprep.subr.mxu0 0.0
  %269 = vmatpush1.msra.mxu0 0.0
  %270 = vmatprep.subr.mxu0 0.0
  %271 = vmatpush1.msra.mxu0 0.0
  %272 = vmatprep.subr.mxu0 0.0
  %273 = vmatpush1.msra.mxu0 0.0
  %274 = vmatprep.subr.mxu0 0.0
  %275 = vmatpush1.msra.mxu0 0.0
  %276 = vmatprep.subr.mxu0 0.0
  %277 = vmatpush1.msra.mxu0 0.0
  %278 = vmatprep.subr.mxu0 0.0
  %279 = vmatpush1.msra.mxu0 0.0
  %280 = vmatprep.mubr.f32.mxu0 0.0
  %v281 = vand.u32 %v37, 4294901760
  %v282 = vsub.f32 %v37, %v281
  %283 = vmatmul.mubr.f32.gmra.mrb[0].mxu0 %v282
  %v284 = vpop.f32.mrb[0].mxu0
  %v285 = vadd.f32 %v205, %v284
  %v286 = vpop.f32.mrb[0].mxu0
  %287 = vmatprep.mubr.f32.mxu0 0.0
  %v288 = vand.u32 %v40, 4294901760
  %v289 = vsub.f32 %v40, %v288
  %290 = vmatmul.mubr.f32.gmra.mrb[0].mxu0 %v289
  %v291 = vpop.f32.mrb[0].mxu0
  %v292 = vadd.f32 %v211, %v291
  %v293 = vpop.f32.mrb[0].mxu0
  %294 = vdwg.mxu0
  %295 = vmatprep.subr.mxu0 0.0
  %v296 = vand.u32 %v44, 4294901760
  %297 = vmatpush1.msra.mxu0 %v296
  %298 = vmatprep.subr.mxu0 0.0
  %299 = vmatpush1.msra.mxu0 0.0
  %300 = vmatprep.subr.mxu0 0.0
  %301 = vmatpush1.msra.mxu0 0.0
  %302 = vmatprep.subr.mxu0 0.0
  %303 = vmatpush1.msra.mxu0 0.0
  %304 = vmatprep.subr.mxu0 0.0
  %305 = vmatpush1.msra.mxu0 0.0
  %306 = vmatprep.subr.mxu0 0.0
  %307 = vmatpush1.msra.mxu0 0.0
  %308 = vmatprep.subr.mxu0 0.0
  %309 = vmatpush1.msra.mxu0 0.0
  %310 = vmatprep.subr.mxu0 0.0
  %311 = vmatpush1.msra.mxu0 0.0
  %312 = vmatprep.subr.mxu0 0.0
  %313 = vmatpush1.msra.mxu0 0.0
  %314 = vmatprep.subr.mxu0 0.0
  %315 = vmatpush1.msra.mxu0 0.0
  %316 = vmatprep.subr.mxu0 0.0
  %317 = vmatpush1.msra.mxu0 0.0
  %318 = vmatprep.subr.mxu0 0.0
  %319 = vmatpush1.msra.mxu0 0.0
  %320 = vmatprep.subr.mxu0 0.0
  %321 = vmatpush1.msra.mxu0 0.0
  %322 = vmatprep.subr.mxu0 0.0
  %323 = vmatpush1.msra.mxu0 0.0
  %324 = vmatprep.subr.mxu0 0.0
  %325 = vmatpush1.msra.mxu0 0.0
  %326 = vmatprep.subr.mxu0 0.0
  %327 = vmatpush1.msra.mxu0 0.0
  %328 = vmatprep.subr.mxu0 0.0
  %329 = vmatpush1.msra.mxu0 0.0
  %330 = vmatprep.subr.mxu0 0.0
  %331 = vmatpush1.msra.mxu0 0.0
  %332 = vmatprep.subr.mxu0 0.0
  %333 = vmatpush1.msra.mxu0 0.0
  %334 = vmatprep.subr.mxu0 0.0
  %335 = vmatpush1.msra.mxu0 0.0
  %336 = vmatprep.subr.mxu0 0.0
  %337 = vmatpush1.msra.mxu0 0.0
  %338 = vmatprep.subr.mxu0 0.0
  %339 = vmatpush1.msra.mxu0 0.0
  %340 = vmatprep.subr.mxu0 0.0
  %341 = vmatpush1.msra.mxu0 0.0
  %342 = vmatprep.subr.mxu0 0.0
  %343 = vmatpush1.msra.mxu0 0.0
  %344 = vmatprep.subr.mxu0 0.0
  %345 = vmatpush1.msra.mxu0 0.0
  %346 = vmatprep.subr.mxu0 0.0
  %347 = vmatpush1.msra.mxu0 0.0
  %348 = vmatprep.subr.mxu0 0.0
  %349 = vmatpush1.msra.mxu0 0.0
  %350 = vmatprep.subr.mxu0 0.0
  %351 = vmatpush1.msra.mxu0 0.0
  %352 = vmatprep.subr.mxu0 0.0
  %353 = vmatpush1.msra.mxu0 0.0
  %354 = vmatprep.subr.mxu0 0.0
  %355 = vmatpush1.msra.mxu0 0.0
  %356 = vmatprep.subr.mxu0 0.0
  %357 = vmatpush1.msra.mxu0 0.0
  %358 = vmatprep.subr.mxu0 0.0
  %359 = vmatpush1.msra.mxu0 0.0
  %360 = vmatprep.mubr.f32.mxu0 0.0
  %v361 = vand.u32 %v37, 4294901760
  %v362 = vsub.f32 %v37, %v361
  %v363 = vand.u32 %v362, 4294901760
  %364 = vmatmul.mubr.f32.gmra.mrb[0].mxu0 %v363
  %v365 = vpop.f32.mrb[0].mxu0
  %v366 = vadd.f32 %v285, %v365
  %v367 = vpop.f32.mrb[0].mxu0
  %368 = vmatprep.mubr.f32.mxu0 0.0
  %v369 = vand.u32 %v40, 4294901760
  %v370 = vsub.f32 %v40, %v369
  %v371 = vand.u32 %v370, 4294901760
  %372 = vmatmul.mubr.f32.gmra.mrb[0].mxu0 %v371
  %v373 = vpop.f32.mrb[0].mxu0
  %v374 = vadd.f32 %v292, %v373
  %v375 = vpop.f32.mrb[0].mxu0
  %376 = vdwg.mxu0
  %377 = vmatprep.subr.mxu0 0.0
  %v378 = vand.u32 %v44, 4294901760
  %v379 = vsub.f32 %v44, %v378
  %v380 = vand.u32 %v379, 4294901760
  %381 = vmatpush1.msra.mxu0 %v380
  %382 = vmatprep.subr.mxu0 0.0
  %383 = vmatpush1.msra.mxu0 0.0
  %384 = vmatprep.subr.mxu0 0.0
  %385 = vmatpush1.msra.mxu0 0.0
  %386 = vmatprep.subr.mxu0 0.0
  %387 = vmatpush1.msra.mxu0 0.0
  %388 = vmatprep.subr.mxu0 0.0
  %389 = vmatpush1.msra.mxu0 0.0
  %390 = vmatprep.subr.mxu0 0.0
  %391 = vmatpush1.msra.mxu0 0.0
  %392 = vmatprep.subr.mxu0 0.0
  %393 = vmatpush1.msra.mxu0 0.0
  %394 = vmatprep.subr.mxu0 0.0
  %395 = vmatpush1.msra.mxu0 0.0
  %396 = vmatprep.subr.mxu0 0.0
  %397 = vmatpush1.msra.mxu0 0.0
  %398 = vmatprep.subr.mxu0 0.0
  %399 = vmatpush1.msra.mxu0 0.0
  %400 = vmatprep.subr.mxu0 0.0
  %401 = vmatpush1.msra.mxu0 0.0
  %402 = vmatprep.subr.mxu0 0.0
  %403 = vmatpush1.msra.mxu0 0.0
  %404 = vmatprep.subr.mxu0 0.0
  %405 = vmatpush1.msra.mxu0 0.0
  %406 = vmatprep.subr.mxu0 0.0
  %407 = vmatpush1.msra.mxu0 0.0
  %408 = vmatprep.subr.mxu0 0.0
  %409 = vmatpush1.msra.mxu0 0.0
  %410 = vmatprep.subr.mxu0 0.0
  %411 = vmatpush1.msra.mxu0 0.0
  %412 = vmatprep.subr.mxu0 0.0
  %413 = vmatpush1.msra.mxu0 0.0
  %414 = vmatprep.subr.mxu0 0.0
  %415 = vmatpush1.msra.mxu0 0.0
  %416 = vmatprep.subr.mxu0 0.0
  %417 = vmatpush1.msra.mxu0 0.0
  %418 = vmatprep.subr.mxu0 0.0
  %419 = vmatpush1.msra.mxu0 0.0
  %420 = vmatprep.subr.mxu0 0.0
  %421 = vmatpush1.msra.mxu0 0.0
  %422 = vmatprep.subr.mxu0 0.0
  %423 = vmatpush1.msra.mxu0 0.0
  %424 = vmatprep.subr.mxu0 0.0
  %425 = vmatpush1.msra.mxu0 0.0
  %426 = vmatprep.subr.mxu0 0.0
  %427 = vmatpush1.msra.mxu0 0.0
  %428 = vmatprep.subr.mxu0 0.0
  %429 = vmatpush1.msra.mxu0 0.0
  %430 = vmatprep.subr.mxu0 0.0
  %431 = vmatpush1.msra.mxu0 0.0
  %432 = vmatprep.subr.mxu0 0.0
  %433 = vmatpush1.msra.mxu0 0.0
  %434 = vmatprep.subr.mxu0 0.0
  %435 = vmatpush1.msra.mxu0 0.0
  %436 = vmatprep.subr.mxu0 0.0
  %437 = vmatpush1.msra.mxu0 0.0
  %438 = vmatprep.subr.mxu0 0.0
  %439 = vmatpush1.msra.mxu0 0.0
  %440 = vmatprep.subr.mxu0 0.0
  %441 = vmatpush1.msra.mxu0 0.0
  %442 = vmatprep.subr.mxu0 0.0
  %443 = vmatpush1.msra.mxu0 0.0
  %444 = vmatprep.mubr.f32.mxu0 0.0
  %v445 = vand.u32 %v37, 4294901760
  %446 = vmatmul.mubr.f32.gmra.mrb[0].mxu0 %v445
  %v447 = vpop.f32.mrb[0].mxu0
  %v448 = vadd.f32 %v366, %v447
  %v449 = vpop.f32.mrb[0].mxu0
  %450 = vmatprep.mubr.f32.mxu0 0.0
  %v451 = vand.u32 %v40, 4294901760
  %452 = vmatmul.mubr.f32.gmra.mrb[0].mxu0 %v451
  %v453 = vpop.f32.mrb[0].mxu0
  %v454 = vadd.f32 %v374, %v453
  %v455 = vpop.f32.mrb[0].mxu0
  %456 = vdwg.mxu0
  %457 = vmatprep.subr.mxu0 0.0
  %v458 = vand.u32 %v44, 4294901760
  %459 = vmatpush1.msra.mxu0 %v458
  %460 = vmatprep.subr.mxu0 0.0
  %461 = vmatpush1.msra.mxu0 0.0
  %462 = vmatprep.subr.mxu0 0.0
  %463 = vmatpush1.msra.mxu0 0.0
  %464 = vmatprep.subr.mxu0 0.0
  %465 = vmatpush1.msra.mxu0 0.0
  %466 = vmatprep.subr.mxu0 0.0
  %467 = vmatpush1.msra.mxu0 0.0
  %468 = vmatprep.subr.mxu0 0.0
  %469 = vmatpush1.msra.mxu0 0.0
  %470 = vmatprep.subr.mxu0 0.0
  %471 = vmatpush1.msra.mxu0 0.0
  %472 = vmatprep.subr.mxu0 0.0
  %473 = vmatpush1.msra.mxu0 0.0
  %474 = vmatprep.subr.mxu0 0.0
  %475 = vmatpush1.msra.mxu0 0.0
  %476 = vmatprep.subr.mxu0 0.0
  %477 = vmatpush1.msra.mxu0 0.0
  %478 = vmatprep.subr.mxu0 0.0
  %479 = vmatpush1.msra.mxu0 0.0
  %480 = vmatprep.subr.mxu0 0.0
  %481 = vmatpush1.msra.mxu0 0.0
  %482 = vmatprep.subr.mxu0 0.0
  %483 = vmatpush1.msra.mxu0 0.0
  %484 = vmatprep.subr.mxu0 0.0
  %485 = vmatpush1.msra.mxu0 0.0
  %486 = vmatprep.subr.mxu0 0.0
  %487 = vmatpush1.msra.mxu0 0.0
  %488 = vmatprep.subr.mxu0 0.0
  %489 = vmatpush1.msra.mxu0 0.0
  %490 = vmatprep.subr.mxu0 0.0
  %491 = vmatpush1.msra.mxu0 0.0
  %492 = vmatprep.subr.mxu0 0.0
  %493 = vmatpush1.msra.mxu0 0.0
  %494 = vmatprep.subr.mxu0 0.0
  %495 = vmatpush1.msra.mxu0 0.0
  %496 = vmatprep.subr.mxu0 0.0
  %497 = vmatpush1.msra.mxu0 0.0
  %498 = vmatprep.subr.mxu0 0.0
  %499 = vmatpush1.msra.mxu0 0.0
  %500 = vmatprep.subr.mxu0 0.0
  %501 = vmatpush1.msra.mxu0 0.0
  %502 = vmatprep.subr.mxu0 0.0
  %503 = vmatpush1.msra.mxu0 0.0
  %504 = vmatprep.subr.mxu0 0.0
  %505 = vmatpush1.msra.mxu0 0.0
  %506 = vmatprep.subr.mxu0 0.0
  %507 = vmatpush1.msra.mxu0 0.0
  %508 = vmatprep.subr.mxu0 0.0
  %509 = vmatpush1.msra.mxu0 0.0
  %510 = vmatprep.subr.mxu0 0.0
  %511 = vmatpush1.msra.mxu0 0.0
  %512 = vmatprep.subr.mxu0 0.0
  %513 = vmatpush1.msra.mxu0 0.0
  %514 = vmatprep.subr.mxu0 0.0
  %515 = vmatpush1.msra.mxu0 0.0
  %516 = vmatprep.subr.mxu0 0.0
  %517 = vmatpush1.msra.mxu0 0.0
  %518 = vmatprep.subr.mxu0 0.0
  %519 = vmatpush1.msra.mxu0 0.0
  %520 = vmatprep.subr.mxu0 0.0
  %521 = vmatpush1.msra.mxu0 0.0
  %522 = vmatprep.mubr.f32.mxu0 0.0
  %v523 = vand.u32 %v37, 4294901760
  %524 = vmatmul.mubr.f32.gmra.mrb[0].mxu0 %v523
  %v525 = vpop.f32.mrb[0].mxu0
  %v526 = vadd.f32 %v448, %v525
  %v527 = vpop.f32.mrb[0].mxu0
  %528 = vmatprep.mubr.f32.mxu0 0.0
  %v529 = vand.u32 %v40, 4294901760
  %530 = vmatmul.mubr.f32.gmra.mrb[0].mxu0 %v529
  %v531 = vpop.f32.mrb[0].mxu0
  %v532 = vadd.f32 %v454, %v531
  %v533 = vpop.f32.mrb[0].mxu0
  %534 = vdwg.mxu0
  %vm535 = vcmask 523264
  %536 = vst.msk [vmem:[#allocation2] sm:$0xff] %vm535, %v526
  %537 = vst.msk [vmem:[#allocation2 + $0x8] sm:$0xff] %vm535, %v532
  %v538 = vld [vmem:[%s3] sm:$0xff]
  %v539 = vld [vmem:[%s3 + $0x8] sm:$0xff]
  %v540 = vld [vmem:[%s3 + $0x10] sm:$0xff]
  %v541 = vld [vmem:[%s3 + $0x18] sm:$0xff]
  %v542 = vld [vmem:[%s3 + $0x20] sm:$0xff]
  %v543 = vld [vmem:[%s3 + $0x28] sm:$0xff]
  %v544 = vld [vmem:[%s3 + $0x30] sm:$0xff]
  %v545 = vld [vmem:[%s3 + $0x38] sm:$0xff]
  %v546 = vlaneseq
  %v547 = vand.u32 %v546, 127
  %v548 = vld [vmem:[#allocation2] sm:$0x3]
  %v550 = vsel %vm535, 0.0, 0
  %552 = vmatprep.subr.mxu0 0.0
  %v553 = vand.u32 %v538, 4294901760
  %554 = vmatpush1.msra.mxu0 %v553
  %555 = vmatprep.subr.mxu0 0.0
  %v556 = vand.u32 %v539, 4294901760
  %557 = vmatpush1.msra.mxu0 %v556
  %558 = vmatprep.subr.mxu0 0.0
  %v559 = vand.u32 %v540, 4294901760
  %560 = vmatpush1.msra.mxu0 %v559
  %561 = vmatprep.subr.mxu0 0.0
  %v562 = vand.u32 %v541, 4294901760
  %563 = vmatpush1.msra.mxu0 %v562
  %564 = vmatprep.subr.mxu0 0.0
  %v565 = vand.u32 %v542, 4294901760
  %566 = vmatpush1.msra.mxu0 %v565
  %567 = vmatprep.subr.mxu0 0.0
  %v568 = vand.u32 %v543, 4294901760
  %569 = vmatpush1.msra.mxu0 %v568
  %570 = vmatprep.subr.mxu0 0.0
  %v571 = vand.u32 %v544, 4294901760
  %572 = vmatpush1.msra.mxu0 %v571
  %573 = vmatprep.subr.mxu0 0.0
  %v574 = vand.u32 %v545, 4294901760
  %575 = vmatpush1.msra.mxu0 %v574
  %576 = vmatprep.subr.mxu0 0.0
  %577 = vmatpush1.msra.mxu0 0.0
  %578 = vmatprep.subr.mxu0 0.0
  %579 = vmatpush1.msra.mxu0 0.0
  %580 = vmatprep.subr.mxu0 0.0
  %581 = vmatpush1.msra.mxu0 0.0
  %582 = vmatprep.subr.mxu0 0.0
  %583 = vmatpush1.msra.mxu0 0.0
  %584 = vmatprep.subr.mxu0 0.0
  %585 = vmatpush1.msra.mxu0 0.0
  %586 = vmatprep.subr.mxu0 0.0
  %587 = vmatpush1.msra.mxu0 0.0
  %588 = vmatprep.subr.mxu0 0.0
  %589 = vmatpush1.msra.mxu0 0.0
  %590 = vmatprep.subr.mxu0 0.0
  %591 = vmatpush1.msra.mxu0 0.0
  %592 = vmatprep.subr.mxu0 0.0
  %593 = vmatpush1.msra.mxu0 0.0
  %594 = vmatprep.subr.mxu0 0.0
  %595 = vmatpush1.msra.mxu0 0.0
  %596 = vmatprep.subr.mxu0 0.0
  %597 = vmatpush1.msra.mxu0 0.0
  %598 = vmatprep.subr.mxu0 0.0
  %599 = vmatpush1.msra.mxu0 0.0
  %600 = vmatprep.subr.mxu0 0.0
  %601 = vmatpush1.msra.mxu0 0.0
  %602 = vmatprep.subr.mxu0 0.0
  %603 = vmatpush1.msra.mxu0 0.0
  %604 = vmatprep.subr.mxu0 0.0
  %605 = vmatpush1.msra.mxu0 0.0
  %606 = vmatprep.subr.mxu0 0.0
  %607 = vmatpush1.msra.mxu0 0.0
  %608 = vmatprep.subr.mxu0 0.0
  %609 = vmatpush1.msra.mxu0 0.0
  %610 = vmatprep.subr.mxu0 0.0
  %611 = vmatpush1.msra.mxu0 0.0
  %612 = vmatprep.subr.mxu0 0.0
  %613 = vmatpush1.msra.mxu0 0.0
  %614 = vmatprep.subr.mxu0 0.0
  %615 = vmatpush1.msra.mxu0 0.0
  %616 = vmatprep.subr.mxu0 0.0
  %617 = vmatpush1.msra.mxu0 0.0
  %618 = vmatprep.subr.mxu0 0.0
  %619 = vmatpush1.msra.mxu0 0.0
  %620 = vmatprep.subr.mxu0 0.0
  %621 = vmatpush1.msra.mxu0 0.0
  %622 = vmatprep.subr.mxu0 0.0
  %623 = vmatpush1.msra.mxu0 0.0
  %624 = vmatprep.mubr.f32.mxu0 0.0
  %v625 = vand.u32 %v550, 4294901760
  %v626 = vsub.f32 %v550, %v625
  %v627 = vand.u32 %v626, 4294901760
  %v628 = vsub.f32 %v626, %v627
  %v629 = vand.u32 %v628, 4294901760
  %630 = vmatmul.mubr.f32.gmra.mrb[0].mxu0 %v629
  %v631 = vpop.f32.mrb[0].mxu0
  %v632 = vadd.f32 0.0, %v631
  %v633 = vpop.f32.mrb[0].mxu0
  %634 = vdwg.mxu0
  %635 = vmatprep.subr.mxu0 0.0
  %v636 = vand.u32 %v538, 4294901760
  %v637 = vsub.f32 %v538, %v636
  %v638 = vand.u32 %v637, 4294901760
  %v639 = vsub.f32 %v637, %v638
  %v640 = vand.u32 %v639, 4294901760
  %641 = vmatpush1.msra.mxu0 %v640
  %642 = vmatprep.subr.mxu0 0.0
  %v643 = vand.u32 %v539, 4294901760
  %v644 = vsub.f32 %v539, %v643
  %v645 = vand.u32 %v644, 4294901760
  %v646 = vsub.f32 %v644, %v645
  %v647 = vand.u32 %v646, 4294901760
  %648 = vmatpush1.msra.mxu0 %v647
  %649 = vmatprep.subr.mxu0 0.0
  %v650 = vand.u32 %v540, 4294901760
  %v651 = vsub.f32 %v540, %v650
  %v652 = vand.u32 %v651, 4294901760
  %v653 = vsub.f32 %v651, %v652
  %v654 = vand.u32 %v653, 4294901760
  %655 = vmatpush1.msra.mxu0 %v654
  %656 = vmatprep.subr.mxu0 0.0
  %v657 = vand.u32 %v541, 4294901760
  %v658 = vsub.f32 %v541, %v657
  %v659 = vand.u32 %v658, 4294901760
  %v660 = vsub.f32 %v658, %v659
  %v661 = vand.u32 %v660, 4294901760
  %662 = vmatpush1.msra.mxu0 %v661
  %663 = vmatprep.subr.mxu0 0.0
  %v664 = vand.u32 %v542, 4294901760
  %v665 = vsub.f32 %v542, %v664
  %v666 = vand.u32 %v665, 4294901760
  %v667 = vsub.f32 %v665, %v666
  %v668 = vand.u32 %v667, 4294901760
  %669 = vmatpush1.msra.mxu0 %v668
  %670 = vmatprep.subr.mxu0 0.0
  %v671 = vand.u32 %v543, 4294901760
  %v672 = vsub.f32 %v543, %v671
  %v673 = vand.u32 %v672, 4294901760
  %v674 = vsub.f32 %v672, %v673
  %v675 = vand.u32 %v674, 4294901760
  %676 = vmatpush1.msra.mxu0 %v675
  %677 = vmatprep.subr.mxu0 0.0
  %v678 = vand.u32 %v544, 4294901760
  %v679 = vsub.f32 %v544, %v678
  %v680 = vand.u32 %v679, 4294901760
  %v681 = vsub.f32 %v679, %v680
  %v682 = vand.u32 %v681, 4294901760
  %683 = vmatpush1.msra.mxu0 %v682
  %684 = vmatprep.subr.mxu0 0.0
  %v685 = vand.u32 %v545, 4294901760
  %v686 = vsub.f32 %v545, %v685
  %v687 = vand.u32 %v686, 4294901760
  %v688 = vsub.f32 %v686, %v687
  %v689 = vand.u32 %v688, 4294901760
  %690 = vmatpush1.msra.mxu0 %v689
  %691 = vmatprep.subr.mxu0 0.0
  %692 = vmatpush1.msra.mxu0 0.0
  %693 = vmatprep.subr.mxu0 0.0
  %694 = vmatpush1.msra.mxu0 0.0
  %695 = vmatprep.subr.mxu0 0.0
  %696 = vmatpush1.msra.mxu0 0.0
  %697 = vmatprep.subr.mxu0 0.0
  %698 = vmatpush1.msra.mxu0 0.0
  %699 = vmatprep.subr.mxu0 0.0
  %700 = vmatpush1.msra.mxu0 0.0
  %701 = vmatprep.subr.mxu0 0.0
  %702 = vmatpush1.msra.mxu0 0.0
  %703 = vmatprep.subr.mxu0 0.0
  %704 = vmatpush1.msra.mxu0 0.0
  %705 = vmatprep.subr.mxu0 0.0
  %706 = vmatpush1.msra.mxu0 0.0
  %707 = vmatprep.subr.mxu0 0.0
  %708 = vmatpush1.msra.mxu0 0.0
  %709 = vmatprep.subr.mxu0 0.0
  %710 = vmatpush1.msra.mxu0 0.0
  %711 = vmatprep.subr.mxu0 0.0
  %712 = vmatpush1.msra.mxu0 0.0
  %713 = vmatprep.subr.mxu0 0.0
  %714 = vmatpush1.msra.mxu0 0.0
  %715 = vmatprep.subr.mxu0 0.0
  %716 = vmatpush1.msra.mxu0 0.0
  %717 = vmatprep.subr.mxu0 0.0
  %718 = vmatpush1.msra.mxu0 0.0
  %719 = vmatprep.subr.mxu0 0.0
  %720 = vmatpush1.msra.mxu0 0.0
  %721 = vmatprep.subr.mxu0 0.0
  %722 = vmatpush1.msra.mxu0 0.0
  %723 = vmatprep.subr.mxu0 0.0
  %724 = vmatpush1.msra.mxu0 0.0
  %725 = vmatprep.subr.mxu0 0.0
  %726 = vmatpush1.msra.mxu0 0.0
  %727 = vmatprep.subr.mxu0 0.0
  %728 = vmatpush1.msra.mxu0 0.0
  %729 = vmatprep.subr.mxu0 0.0
  %730 = vmatpush1.msra.mxu0 0.0
  %731 = vmatprep.subr.mxu0 0.0
  %732 = vmatpush1.msra.mxu0 0.0
  %733 = vmatprep.subr.mxu0 0.0
  %734 = vmatpush1.msra.mxu0 0.0
  %735 = vmatprep.subr.mxu0 0.0
  %736 = vmatpush1.msra.mxu0 0.0
  %737 = vmatprep.subr.mxu0 0.0
  %738 = vmatpush1.msra.mxu0 0.0
  %739 = vmatprep.mubr.f32.mxu0 0.0
  %v740 = vand.u32 %v550, 4294901760
  %741 = vmatmul.mubr.f32.gmra.mrb[0].mxu0 %v740
  %v742 = vpop.f32.mrb[0].mxu0
  %v743 = vadd.f32 %v632, %v742
  %v744 = vpop.f32.mrb[0].mxu0
  %745 = vdwg.mxu0
  %746 = vmatprep.subr.mxu0 0.0
  %v747 = vand.u32 %v538, 4294901760
  %v748 = vsub.f32 %v538, %v747
  %749 = vmatpush1.msra.mxu0 %v748
  %750 = vmatprep.subr.mxu0 0.0
  %v751 = vand.u32 %v539, 4294901760
  %v752 = vsub.f32 %v539, %v751
  %753 = vmatpush1.msra.mxu0 %v752
  %754 = vmatprep.subr.mxu0 0.0
  %v755 = vand.u32 %v540, 4294901760
  %v756 = vsub.f32 %v540, %v755
  %757 = vmatpush1.msra.mxu0 %v756
  %758 = vmatprep.subr.mxu0 0.0
  %v759 = vand.u32 %v541, 4294901760
  %v760 = vsub.f32 %v541, %v759
  %761 = vmatpush1.msra.mxu0 %v760
  %762 = vmatprep.subr.mxu0 0.0
  %v763 = vand.u32 %v542, 4294901760
  %v764 = vsub.f32 %v542, %v763
  %765 = vmatpush1.msra.mxu0 %v764
  %766 = vmatprep.subr.mxu0 0.0
  %v767 = vand.u32 %v543, 4294901760
  %v768 = vsub.f32 %v543, %v767
  %769 = vmatpush1.msra.mxu0 %v768
  %770 = vmatprep.subr.mxu0 0.0
  %v771 = vand.u32 %v544, 4294901760
  %v772 = vsub.f32 %v544, %v771
  %773 = vmatpush1.msra.mxu0 %v772
  %774 = vmatprep.subr.mxu0 0.0
  %v775 = vand.u32 %v545, 4294901760
  %v776 = vsub.f32 %v545, %v775
  %777 = vmatpush1.msra.mxu0 %v776
  %778 = vmatprep.subr.mxu0 0.0
  %779 = vmatpush1.msra.mxu0 0.0
  %780 = vmatprep.subr.mxu0 0.0
  %781 = vmatpush1.msra.mxu0 0.0
  %782 = vmatprep.subr.mxu0 0.0
  %783 = vmatpush1.msra.mxu0 0.0
  %784 = vmatprep.subr.mxu0 0.0
  %785 = vmatpush1.msra.mxu0 0.0
  %786 = vmatprep.subr.mxu0 0.0
  %787 = vmatpush1.msra.mxu0 0.0
  %788 = vmatprep.subr.mxu0 0.0
  %789 = vmatpush1.msra.mxu0 0.0
  %790 = vmatprep.subr.mxu0 0.0
  %791 = vmatpush1.msra.mxu0 0.0
  %792 = vmatprep.subr.mxu0 0.0
  %793 = vmatpush1.msra.mxu0 0.0
  %794 = vmatprep.subr.mxu0 0.0
  %795 = vmatpush1.msra.mxu0 0.0
  %796 = vmatprep.subr.mxu0 0.0
  %797 = vmatpush1.msra.mxu0 0.0
  %798 = vmatprep.subr.mxu0 0.0
  %799 = vmatpush1.msra.mxu0 0.0
  %800 = vmatprep.subr.mxu0 0.0
  %801 = vmatpush1.msra.mxu0 0.0
  %802 = vmatprep.subr.mxu0 0.0
  %803 = vmatpush1.msra.mxu0 0.0
  %804 = vmatprep.subr.mxu0 0.0
  %805 = vmatpush1.msra.mxu0 0.0
  %806 = vmatprep.subr.mxu0 0.0
  %807 = vmatpush1.msra.mxu0 0.0
  %808 = vmatprep.subr.mxu0 0.0
  %809 = vmatpush1.msra.mxu0 0.0
  %810 = vmatprep.subr.mxu0 0.0
  %811 = vmatpush1.msra.mxu0 0.0
  %812 = vmatprep.subr.mxu0 0.0
  %813 = vmatpush1.msra.mxu0 0.0
  %814 = vmatprep.subr.mxu0 0.0
  %815 = vmatpush1.msra.mxu0 0.0
  %816 = vmatprep.subr.mxu0 0.0
  %817 = vmatpush1.msra.mxu0 0.0
  %818 = vmatprep.subr.mxu0 0.0
  %819 = vmatpush1.msra.mxu0 0.0
  %820 = vmatprep.subr.mxu0 0.0
  %821 = vmatpush1.msra.mxu0 0.0
  %822 = vmatprep.subr.mxu0 0.0
  %823 = vmatpush1.msra.mxu0 0.0
  %824 = vmatprep.subr.mxu0 0.0
  %825 = vmatpush1.msra.mxu0 0.0
  %826 = vmatprep.mubr.f32.mxu0 0.0
  %v827 = vand.u32 %v550, 4294901760
  %v828 = vsub.f32 %v550, %v827
  %829 = vmatmul.mubr.f32.gmra.mrb[0].mxu0 %v828
  %v830 = vpop.f32.mrb[0].mxu0
  %v831 = vadd.f32 %v743, %v830
  %v832 = vpop.f32.mrb[0].mxu0
  %833 = vdwg.mxu0
  %834 = vmatprep.subr.mxu0 0.0
  %v835 = vand.u32 %v538, 4294901760
  %836 = vmatpush1.msra.mxu0 %v835
  %837 = vmatprep.subr.mxu0 0.0
  %v838 = vand.u32 %v539, 4294901760
  %839 = vmatpush1.msra.mxu0 %v838
  %840 = vmatprep.subr.mxu0 0.0
  %v841 = vand.u32 %v540, 4294901760
  %842 = vmatpush1.msra.mxu0 %v841
  %843 = vmatprep.subr.mxu0 0.0
  %v844 = vand.u32 %v541, 4294901760
  %845 = vmatpush1.msra.mxu0 %v844
  %846 = vmatprep.subr.mxu0 0.0
  %v847 = vand.u32 %v542, 4294901760
  %848 = vmatpush1.msra.mxu0 %v847
  %849 = vmatprep.subr.mxu0 0.0
  %v850 = vand.u32 %v543, 4294901760
  %851 = vmatpush1.msra.mxu0 %v850
  %852 = vmatprep.subr.mxu0 0.0
  %v853 = vand.u32 %v544, 4294901760
  %854 = vmatpush1.msra.mxu0 %v853
  %855 = vmatprep.subr.mxu0 0.0
  %v856 = vand.u32 %v545, 4294901760
  %857 = vmatpush1.msra.mxu0 %v856
  %858 = vmatprep.subr.mxu0 0.0
  %859 = vmatpush1.msra.mxu0 0.0
  %860 = vmatprep.subr.mxu0 0.0
  %861 = vmatpush1.msra.mxu0 0.0
  %862 = vmatprep.subr.mxu0 0.0
  %863 = vmatpush1.msra.mxu0 0.0
  %864 = vmatprep.subr.mxu0 0.0
  %865 = vmatpush1.msra.mxu0 0.0
  %866 = vmatprep.subr.mxu0 0.0
  %867 = vmatpush1.msra.mxu0 0.0
  %868 = vmatprep.subr.mxu0 0.0
  %869 = vmatpush1.msra.mxu0 0.0
  %870 = vmatprep.subr.mxu0 0.0
  %871 = vmatpush1.msra.mxu0 0.0
  %872 = vmatprep.subr.mxu0 0.0
  %873 = vmatpush1.msra.mxu0 0.0
  %874 = vmatprep.subr.mxu0 0.0
  %875 = vmatpush1.msra.mxu0 0.0
  %876 = vmatprep.subr.mxu0 0.0
  %877 = vmatpush1.msra.mxu0 0.0
  %878 = vmatprep.subr.mxu0 0.0
  %879 = vmatpush1.msra.mxu0 0.0
  %880 = vmatprep.subr.mxu0 0.0
  %881 = vmatpush1.msra.mxu0 0.0
  %882 = vmatprep.subr.mxu0 0.0
  %883 = vmatpush1.msra.mxu0 0.0
  %884 = vmatprep.subr.mxu0 0.0
  %885 = vmatpush1.msra.mxu0 0.0
  %886 = vmatprep.subr.mxu0 0.0
  %887 = vmatpush1.msra.mxu0 0.0
  %888 = vmatprep.subr.mxu0 0.0
  %889 = vmatpush1.msra.mxu0 0.0
  %890 = vmatprep.subr.mxu0 0.0
  %891 = vmatpush1.msra.mxu0 0.0
  %892 = vmatprep.subr.mxu0 0.0
  %893 = vmatpush1.msra.mxu0 0.0
  %894 = vmatprep.subr.mxu0 0.0
  %895 = vmatpush1.msra.mxu0 0.0
  %896 = vmatprep.subr.mxu0 0.0
  %897 = vmatpush1.msra.mxu0 0.0
  %898 = vmatprep.subr.mxu0 0.0
  %899 = vmatpush1.msra.mxu0 0.0
  %900 = vmatprep.subr.mxu0 0.0
  %901 = vmatpush1.msra.mxu0 0.0
  %902 = vmatprep.subr.mxu0 0.0
  %903 = vmatpush1.msra.mxu0 0.0
  %904 = vmatprep.subr.mxu0 0.0
  %905 = vmatpush1.msra.mxu0 0.0
  %906 = vmatprep.mubr.f32.mxu0 0.0
  %v907 = vand.u32 %v550, 4294901760
  %v908 = vsub.f32 %v550, %v907
  %v909 = vand.u32 %v908, 4294901760
  %910 = vmatmul.mubr.f32.gmra.mrb[0].mxu0 %v909
  %v911 = vpop.f32.mrb[0].mxu0
  %v912 = vadd.f32 %v831, %v911
  %v913 = vpop.f32.mrb[0].mxu0
  %914 = vdwg.mxu0
  %915 = vmatprep.subr.mxu0 0.0
  %v916 = vand.u32 %v538, 4294901760
  %v917 = vsub.f32 %v538, %v916
  %v918 = vand.u32 %v917, 4294901760
  %919 = vmatpush1.msra.mxu0 %v918
  %920 = vmatprep.subr.mxu0 0.0
  %v921 = vand.u32 %v539, 4294901760
  %v922 = vsub.f32 %v539, %v921
  %v923 = vand.u32 %v922, 4294901760
  %924 = vmatpush1.msra.mxu0 %v923
  %925 = vmatprep.subr.mxu0 0.0
  %v926 = vand.u32 %v540, 4294901760
  %v927 = vsub.f32 %v540, %v926
  %v928 = vand.u32 %v927, 4294901760
  %929 = vmatpush1.msra.mxu0 %v928
  %930 = vmatprep.subr.mxu0 0.0
  %v931 = vand.u32 %v541, 4294901760
  %v932 = vsub.f32 %v541, %v931
  %v933 = vand.u32 %v932, 4294901760
  %934 = vmatpush1.msra.mxu0 %v933
  %935 = vmatprep.subr.mxu0 0.0
  %v936 = vand.u32 %v542, 4294901760
  %v937 = vsub.f32 %v542, %v936
  %v938 = vand.u32 %v937, 4294901760
  %939 = vmatpush1.msra.mxu0 %v938
  %940 = vmatprep.subr.mxu0 0.0
  %v941 = vand.u32 %v543, 4294901760
  %v942 = vsub.f32 %v543, %v941
  %v943 = vand.u32 %v942, 4294901760
  %944 = vmatpush1.msra.mxu0 %v943
  %945 = vmatprep.subr.mxu0 0.0
  %v946 = vand.u32 %v544, 4294901760
  %v947 = vsub.f32 %v544, %v946
  %v948 = vand.u32 %v947, 4294901760
  %949 = vmatpush1.msra.mxu0 %v948
  %950 = vmatprep.subr.mxu0 0.0
  %v951 = vand.u32 %v545, 4294901760
  %v952 = vsub.f32 %v545, %v951
  %v953 = vand.u32 %v952, 4294901760
  %954 = vmatpush1.msra.mxu0 %v953
  %955 = vmatprep.subr.mxu0 0.0
  %956 = vmatpush1.msra.mxu0 0.0
  %957 = vmatprep.subr.mxu0 0.0
  %958 = vmatpush1.msra.mxu0 0.0
  %959 = vmatprep.subr.mxu0 0.0
  %960 = vmatpush1.msra.mxu0 0.0
  %961 = vmatprep.subr.mxu0 0.0
  %962 = vmatpush1.msra.mxu0 0.0
  %963 = vmatprep.subr.mxu0 0.0
  %964 = vmatpush1.msra.mxu0 0.0
  %965 = vmatprep.subr.mxu0 0.0
  %966 = vmatpush1.msra.mxu0 0.0
  %967 = vmatprep.subr.mxu0 0.0
  %968 = vmatpush1.msra.mxu0 0.0
  %969 = vmatprep.subr.mxu0 0.0
  %970 = vmatpush1.msra.mxu0 0.0
  %971 = vmatprep.subr.mxu0 0.0
  %972 = vmatpush1.msra.mxu0 0.0
  %973 = vmatprep.subr.mxu0 0.0
  %974 = vmatpush1.msra.mxu0 0.0
  %975 = vmatprep.subr.mxu0 0.0
  %976 = vmatpush1.msra.mxu0 0.0
  %977 = vmatprep.subr.mxu0 0.0
  %978 = vmatpush1.msra.mxu0 0.0
  %979 = vmatprep.subr.mxu0 0.0
  %980 = vmatpush1.msra.mxu0 0.0
  %981 = vmatprep.subr.mxu0 0.0
  %982 = vmatpush1.msra.mxu0 0.0
  %983 = vmatprep.subr.mxu0 0.0
  %984 = vmatpush1.msra.mxu0 0.0
  %985 = vmatprep.subr.mxu0 0.0
  %986 = vmatpush1.msra.mxu0 0.0
  %987 = vmatprep.subr.mxu0 0.0
  %988 = vmatpush1.msra.mxu0 0.0
  %989 = vmatprep.subr.mxu0 0.0
  %990 = vmatpush1.msra.mxu0 0.0
  %991 = vmatprep.subr.mxu0 0.0
  %992 = vmatpush1.msra.mxu0 0.0
  %993 = vmatprep.subr.mxu0 0.0
  %994 = vmatpush1.msra.mxu0 0.0
  %995 = vmatprep.subr.mxu0 0.0
  %996 = vmatpush1.msra.mxu0 0.0
  %997 = vmatprep.subr.mxu0 0.0
  %998 = vmatpush1.msra.mxu0 0.0
  %999 = vmatprep.subr.mxu0 0.0
  %1000 = vmatpush1.msra.mxu0 0.0
  %1001 = vmatprep.subr.mxu0 0.0
  %1002 = vmatpush1.msra.mxu0 0.0
  %1003 = vmatprep.mubr.f32.mxu0 0.0
  %v1004 = vand.u32 %v550, 4294901760
  %1005 = vmatmul.mubr.f32.gmra.mrb[0].mxu0 %v1004
  %v1006 = vpop.f32.mrb[0].mxu0
  %v1007 = vadd.f32 %v912, %v1006
  %v1008 = vpop.f32.mrb[0].mxu0
  %1009 = vdwg.mxu0
  %1010 = vmatprep.subr.mxu0 0.0
  %v1011 = vand.u32 %v538, 4294901760
  %1012 = vmatpush1.msra.mxu0 %v1011
  %1013 = vmatprep.subr.mxu0 0.0
  %v1014 = vand.u32 %v539, 4294901760
  %1015 = vmatpush1.msra.mxu0 %v1014
  %1016 = vmatprep.subr.mxu0 0.0
  %v1017 = vand.u32 %v540, 4294901760
  %1018 = vmatpush1.msra.mxu0 %v1017
  %1019 = vmatprep.subr.mxu0 0.0
  %v1020 = vand.u32 %v541, 4294901760
  %1021 = vmatpush1.msra.mxu0 %v1020
  %1022 = vmatprep.subr.mxu0 0.0
  %v1023 = vand.u32 %v542, 4294901760
  %1024 = vmatpush1.msra.mxu0 %v1023
  %1025 = vmatprep.subr.mxu0 0.0
  %v1026 = vand.u32 %v543, 4294901760
  %1027 = vmatpush1.msra.mxu0 %v1026
  %1028 = vmatprep.subr.mxu0 0.0
  %v1029 = vand.u32 %v544, 4294901760
  %1030 = vmatpush1.msra.mxu0 %v1029
  %1031 = vmatprep.subr.mxu0 0.0
  %v1032 = vand.u32 %v545, 4294901760
  %1033 = vmatpush1.msra.mxu0 %v1032
  %1034 = vmatprep.subr.mxu0 0.0
  %1035 = vmatpush1.msra.mxu0 0.0
  %1036 = vmatprep.subr.mxu0 0.0
  %1037 = vmatpush1.msra.mxu0 0.0
  %1038 = vmatprep.subr.mxu0 0.0
  %1039 = vmatpush1.msra.mxu0 0.0
  %1040 = vmatprep.subr.mxu0 0.0
  %1041 = vmatpush1.msra.mxu0 0.0
  %1042 = vmatprep.subr.mxu0 0.0
  %1043 = vmatpush1.msra.mxu0 0.0
  %1044 = vmatprep.subr.mxu0 0.0
  %1045 = vmatpush1.msra.mxu0 0.0
  %1046 = vmatprep.subr.mxu0 0.0
  %1047 = vmatpush1.msra.mxu0 0.0
  %1048 = vmatprep.subr.mxu0 0.0
  %1049 = vmatpush1.msra.mxu0 0.0
  %1050 = vmatprep.subr.mxu0 0.0
  %1051 = vmatpush1.msra.mxu0 0.0
  %1052 = vmatprep.subr.mxu0 0.0
  %1053 = vmatpush1.msra.mxu0 0.0
  %1054 = vmatprep.subr.mxu0 0.0
  %1055 = vmatpush1.msra.mxu0 0.0
  %1056 = vmatprep.subr.mxu0 0.0
  %1057 = vmatpush1.msra.mxu0 0.0
  %1058 = vmatprep.subr.mxu0 0.0
  %1059 = vmatpush1.msra.mxu0 0.0
  %1060 = vmatprep.subr.mxu0 0.0
  %1061 = vmatpush1.msra.mxu0 0.0
  %1062 = vmatprep.subr.mxu0 0.0
  %1063 = vmatpush1.msra.mxu0 0.0
  %1064 = vmatprep.subr.mxu0 0.0
  %1065 = vmatpush1.msra.mxu0 0.0
  %1066 = vmatprep.subr.mxu0 0.0
  %1067 = vmatpush1.msra.mxu0 0.0
  %1068 = vmatprep.subr.mxu0 0.0
  %1069 = vmatpush1.msra.mxu0 0.0
  %1070 = vmatprep.subr.mxu0 0.0
  %1071 = vmatpush1.msra.mxu0 0.0
  %1072 = vmatprep.subr.mxu0 0.0
  %1073 = vmatpush1.msra.mxu0 0.0
  %1074 = vmatprep.subr.mxu0 0.0
  %1075 = vmatpush1.msra.mxu0 0.0
  %1076 = vmatprep.subr.mxu0 0.0
  %1077 = vmatpush1.msra.mxu0 0.0
  %1078 = vmatprep.subr.mxu0 0.0
  %1079 = vmatpush1.msra.mxu0 0.0
  %1080 = vmatprep.subr.mxu0 0.0
  %1081 = vmatpush1.msra.mxu0 0.0
  %1082 = vmatprep.mubr.f32.mxu0 0.0
  %v1083 = vand.u32 %v550, 4294901760
  %1084 = vmatmul.mubr.f32.gmra.mrb[0].mxu0 %v1083
  %v1085 = vpop.f32.mrb[0].mxu0
  %v1086 = vadd.f32 %v1007, %v1085
  %v1087 = vpop.f32.mrb[0].mxu0
  %1088 = vdwg.mxu0
  %v1089 = vadd.f32 %v548, %v1086
  %v1090 = vtanh.pop %v1089
  %vm1091 = vcmp.lt.s32.totalorder %v547, 32
  %v1092 = vsel %vm1091, %v1090, 0.0
  %v1093 = vld [vmem:[#allocation2 + $0x2] sm:$0x3]
  %v1095 = vsel %vm535, %v1092, 0
  %1097 = vmatprep.subr.mxu0 0.0
  %v1098 = vand.u32 %v538, 4294901760
  %1099 = vmatpush1.msra.mxu0 %v1098
  %1100 = vmatprep.subr.mxu0 0.0
  %v1101 = vand.u32 %v539, 4294901760
  %1102 = vmatpush1.msra.mxu0 %v1101
  %1103 = vmatprep.subr.mxu0 0.0
  %v1104 = vand.u32 %v540, 4294901760
  %1105 = vmatpush1.msra.mxu0 %v1104
  %1106 = vmatprep.subr.mxu0 0.0
  %v1107 = vand.u32 %v541, 4294901760
  %1108 = vmatpush1.msra.mxu0 %v1107
  %1109 = vmatprep.subr.mxu0 0.0
  %v1110 = vand.u32 %v542, 4294901760
  %1111 = vmatpush1.msra.mxu0 %v1110
  %1112 = vmatprep.subr.mxu0 0.0
  %v1113 = vand.u32 %v543, 4294901760
  %1114 = vmatpush1.msra.mxu0 %v1113
  %1115 = vmatprep.subr.mxu0 0.0
  %v1116 = vand.u32 %v544, 4294901760
  %1117 = vmatpush1.msra.mxu0 %v1116
  %1118 = vmatprep.subr.mxu0 0.0
  %v1119 = vand.u32 %v545, 4294901760
  %1120 = vmatpush1.msra.mxu0 %v1119
  %1121 = vmatprep.subr.mxu0 0.0
  %1122 = vmatpush1.msra.mxu0 0.0
  %1123 = vmatprep.subr.mxu0 0.0
  %1124 = vmatpush1.msra.mxu0 0.0
  %1125 = vmatprep.subr.mxu0 0.0
  %1126 = vmatpush1.msra.mxu0 0.0
  %1127 = vmatprep.subr.mxu0 0.0
  %1128 = vmatpush1.msra.mxu0 0.0
  %1129 = vmatprep.subr.mxu0 0.0
  %1130 = vmatpush1.msra.mxu0 0.0
  %1131 = vmatprep.subr.mxu0 0.0
  %1132 = vmatpush1.msra.mxu0 0.0
  %1133 = vmatprep.subr.mxu0 0.0
  %1134 = vmatpush1.msra.mxu0 0.0
  %1135 = vmatprep.subr.mxu0 0.0
  %1136 = vmatpush1.msra.mxu0 0.0
  %1137 = vmatprep.subr.mxu0 0.0
  %1138 = vmatpush1.msra.mxu0 0.0
  %1139 = vmatprep.subr.mxu0 0.0
  %1140 = vmatpush1.msra.mxu0 0.0
  %1141 = vmatprep.subr.mxu0 0.0
  %1142 = vmatpush1.msra.mxu0 0.0
  %1143 = vmatprep.subr.mxu0 0.0
  %1144 = vmatpush1.msra.mxu0 0.0
  %1145 = vmatprep.subr.mxu0 0.0
  %1146 = vmatpush1.msra.mxu0 0.0
  %1147 = vmatprep.subr.mxu0 0.0
  %1148 = vmatpush1.msra.mxu0 0.0
  %1149 = vmatprep.subr.mxu0 0.0
  %1150 = vmatpush1.msra.mxu0 0.0
  %1151 = vmatprep.subr.mxu0 0.0
  %1152 = vmatpush1.msra.mxu0 0.0
  %1153 = vmatprep.subr.mxu0 0.0
  %1154 = vmatpush1.msra.mxu0 0.0
  %1155 = vmatprep.subr.mxu0 0.0
  %1156 = vmatpush1.msra.mxu0 0.0
  %1157 = vmatprep.subr.mxu0 0.0
  %1158 = vmatpush1.msra.mxu0 0.0
  %1159 = vmatprep.subr.mxu0 0.0
  %1160 = vmatpush1.msra.mxu0 0.0
  %1161 = vmatprep.subr.mxu0 0.0
  %1162 = vmatpush1.msra.mxu0 0.0
  %1163 = vmatprep.subr.mxu0 0.0
  %1164 = vmatpush1.msra.mxu0 0.0
  %1165 = vmatprep.subr.mxu0 0.0
  %1166 = vmatpush1.msra.mxu0 0.0
  %1167 = vmatprep.subr.mxu0 0.0
  %1168 = vmatpush1.msra.mxu0 0.0
  %1169 = vmatprep.mubr.f32.mxu0 0.0
  %v1170 = vand.u32 %v1095, 4294901760
  %v1171 = vsub.f32 %v1095, %v1170
  %v1172 = vand.u32 %v1171, 4294901760
  %v1173 = vsub.f32 %v1171, %v1172
  %v1174 = vand.u32 %v1173, 4294901760
  %1175 = vmatmul.mubr.f32.gmra.mrb[0].mxu0 %v1174
  %v1176 = vpop.f32.mrb[0].mxu0
  %v1177 = vadd.f32 0.0, %v1176
  %v1178 = vpop.f32.mrb[0].mxu0
  %1179 = vdwg.mxu0
  %1180 = vmatprep.subr.mxu0 0.0
  %v1181 = vand.u32 %v538, 4294901760
  %v1182 = vsub.f32 %v538, %v1181
  %v1183 = vand.u32 %v1182, 4294901760
  %v1184 = vsub.f32 %v1182, %v1183
  %v1185 = vand.u32 %v1184, 4294901760
  %1186 = vmatpush1.msra.mxu0 %v1185
  %1187 = vmatprep.subr.mxu0 0.0
  %v1188 = vand.u32 %v539, 4294901760
  %v1189 = vsub.f32 %v539, %v1188
  %v1190 = vand.u32 %v1189, 4294901760
  %v1191 = vsub.f32 %v1189, %v1190
  %v1192 = vand.u32 %v1191, 4294901760
  %1193 = vmatpush1.msra.mxu0 %v1192
  %1194 = vmatprep.subr.mxu0 0.0
  %v1195 = vand.u32 %v540, 4294901760
  %v1196 = vsub.f32 %v540, %v1195
  %v1197 = vand.u32 %v1196, 4294901760
  %v1198 = vsub.f32 %v1196, %v1197
  %v1199 = vand.u32 %v1198, 4294901760
  %1200 = vmatpush1.msra.mxu0 %v1199
  %1201 = vmatprep.subr.mxu0 0.0
  %v1202 = vand.u32 %v541, 4294901760
  %v1203 = vsub.f32 %v541, %v1202
  %v1204 = vand.u32 %v1203, 4294901760
  %v1205 = vsub.f32 %v1203, %v1204
  %v1206 = vand.u32 %v1205, 4294901760
  %1207 = vmatpush1.msra.mxu0 %v1206
  %1208 = vmatprep.subr.mxu0 0.0
  %v1209 = vand.u32 %v542, 4294901760
  %v1210 = vsub.f32 %v542, %v1209
  %v1211 = vand.u32 %v1210, 4294901760
  %v1212 = vsub.f32 %v1210, %v1211
  %v1213 = vand.u32 %v1212, 4294901760
  %1214 = vmatpush1.msra.mxu0 %v1213
  %1215 = vmatprep.subr.mxu0 0.0
  %v1216 = vand.u32 %v543, 4294901760
  %v1217 = vsub.f32 %v543, %v1216
  %v1218 = vand.u32 %v1217, 4294901760
  %v1219 = vsub.f32 %v1217, %v1218
  %v1220 = vand.u32 %v1219, 4294901760
  %1221 = vmatpush1.msra.mxu0 %v1220
  %1222 = vmatprep.subr.mxu0 0.0
  %v1223 = vand.u32 %v544, 4294901760
  %v1224 = vsub.f32 %v544, %v1223
  %v1225 = vand.u32 %v1224, 4294901760
  %v1226 = vsub.f32 %v1224, %v1225
  %v1227 = vand.u32 %v1226, 4294901760
  %1228 = vmatpush1.msra.mxu0 %v1227
  %1229 = vmatprep.subr.mxu0 0.0
  %v1230 = vand.u32 %v545, 4294901760
  %v1231 = vsub.f32 %v545, %v1230
  %v1232 = vand.u32 %v1231, 4294901760
  %v1233 = vsub.f32 %v1231, %v1232
  %v1234 = vand.u32 %v1233, 4294901760
  %1235 = vmatpush1.msra.mxu0 %v1234
  %1236 = vmatprep.subr.mxu0 0.0
  %1237 = vmatpush1.msra.mxu0 0.0
  %1238 = vmatprep.subr.mxu0 0.0
  %1239 = vmatpush1.msra.mxu0 0.0
  %1240 = vmatprep.subr.mxu0 0.0
  %1241 = vmatpush1.msra.mxu0 0.0
  %1242 = vmatprep.subr.mxu0 0.0
  %1243 = vmatpush1.msra.mxu0 0.0
  %1244 = vmatprep.subr.mxu0 0.0
  %1245 = vmatpush1.msra.mxu0 0.0
  %1246 = vmatprep.subr.mxu0 0.0
  %1247 = vmatpush1.msra.mxu0 0.0
  %1248 = vmatprep.subr.mxu0 0.0
  %1249 = vmatpush1.msra.mxu0 0.0
  %1250 = vmatprep.subr.mxu0 0.0
  %1251 = vmatpush1.msra.mxu0 0.0
  %1252 = vmatprep.subr.mxu0 0.0
  %1253 = vmatpush1.msra.mxu0 0.0
  %1254 = vmatprep.subr.mxu0 0.0
  %1255 = vmatpush1.msra.mxu0 0.0
  %1256 = vmatprep.subr.mxu0 0.0
  %1257 = vmatpush1.msra.mxu0 0.0
  %1258 = vmatprep.subr.mxu0 0.0
  %1259 = vmatpush1.msra.mxu0 0.0
  %1260 = vmatprep.subr.mxu0 0.0
  %1261 = vmatpush1.msra.mxu0 0.0
  %1262 = vmatprep.subr.mxu0 0.0
  %1263 = vmatpush1.msra.mxu0 0.0
  %1264 = vmatprep.subr.mxu0 0.0
  %1265 = vmatpush1.msra.mxu0 0.0
  %1266 = vmatprep.subr.mxu0 0.0
  %1267 = vmatpush1.msra.mxu0 0.0
  %1268 = vmatprep.subr.mxu0 0.0
  %1269 = vmatpush1.msra.mxu0 0.0
  %1270 = vmatprep.subr.mxu0 0.0
  %1271 = vmatpush1.msra.mxu0 0.0
  %1272 = vmatprep.subr.mxu0 0.0
  %1273 = vmatpush1.msra.mxu0 0.0
  %1274 = vmatprep.subr.mxu0 0.0
  %1275 = vmatpush1.msra.mxu0 0.0
  %1276 = vmatprep.subr.mxu0 0.0
  %1277 = vmatpush1.msra.mxu0 0.0
  %1278 = vmatprep.subr.mxu0 0.0
  %1279 = vmatpush1.msra.mxu0 0.0
  %1280 = vmatprep.subr.mxu0 0.0
  %1281 = vmatpush1.msra.mxu0 0.0
  %1282 = vmatprep.subr.mxu0 0.0
  %1283 = vmatpush1.msra.mxu0 0.0
  %1284 = vmatprep.mubr.f32.mxu0 0.0
  %v1285 = vand.u32 %v1095, 4294901760
  %1286 = vmatmul.mubr.f32.gmra.mrb[0].mxu0 %v1285
  %v1287 = vpop.f32.mrb[0].mxu0
  %v1288 = vadd.f32 %v1177, %v1287
  %v1289 = vpop.f32.mrb[0].mxu0
  %1290 = vdwg.mxu0
  %1291 = vmatprep.subr.mxu0 0.0
  %v1292 = vand.u32 %v538, 4294901760
  %v1293 = vsub.f32 %v538, %v1292
  %1294 = vmatpush1.msra.mxu0 %v1293
  %1295 = vmatprep.subr.mxu0 0.0
  %v1296 = vand.u32 %v539, 4294901760
  %v1297 = vsub.f32 %v539, %v1296
  %1298 = vmatpush1.msra.mxu0 %v1297
  %1299 = vmatprep.subr.mxu0 0.0
  %v1300 = vand.u32 %v540, 4294901760
  %v1301 = vsub.f32 %v540, %v1300
  %1302 = vmatpush1.msra.mxu0 %v1301
  %1303 = vmatprep.subr.mxu0 0.0
  %v1304 = vand.u32 %v541, 4294901760
  %v1305 = vsub.f32 %v541, %v1304
  %1306 = vmatpush1.msra.mxu0 %v1305
  %1307 = vmatprep.subr.mxu0 0.0
  %v1308 = vand.u32 %v542, 4294901760
  %v1309 = vsub.f32 %v542, %v1308
  %1310 = vmatpush1.msra.mxu0 %v1309
  %1311 = vmatprep.subr.mxu0 0.0
  %v1312 = vand.u32 %v543, 4294901760
  %v1313 = vsub.f32 %v543, %v1312
  %1314 = vmatpush1.msra.mxu0 %v1313
  %1315 = vmatprep.subr.mxu0 0.0
  %v1316 = vand.u32 %v544, 4294901760
  %v1317 = vsub.f32 %v544, %v1316
  %1318 = vmatpush1.msra.mxu0 %v1317
  %1319 = vmatprep.subr.mxu0 0.0
  %v1320 = vand.u32 %v545, 4294901760
  %v1321 = vsub.f32 %v545, %v1320
  %1322 = vmatpush1.msra.mxu0 %v1321
  %1323 = vmatprep.subr.mxu0 0.0
  %1324 = vmatpush1.msra.mxu0 0.0
  %1325 = vmatprep.subr.mxu0 0.0
  %1326 = vmatpush1.msra.mxu0 0.0
  %1327 = vmatprep.subr.mxu0 0.0
  %1328 = vmatpush1.msra.mxu0 0.0
  %1329 = vmatprep.subr.mxu0 0.0
  %1330 = vmatpush1.msra.mxu0 0.0
  %1331 = vmatprep.subr.mxu0 0.0
  %1332 = vmatpush1.msra.mxu0 0.0
  %1333 = vmatprep.subr.mxu0 0.0
  %1334 = vmatpush1.msra.mxu0 0.0
  %1335 = vmatprep.subr.mxu0 0.0
  %1336 = vmatpush1.msra.mxu0 0.0
  %1337 = vmatprep.subr.mxu0 0.0
  %1338 = vmatpush1.msra.mxu0 0.0
  %1339 = vmatprep.subr.mxu0 0.0
  %1340 = vmatpush1.msra.mxu0 0.0
  %1341 = vmatprep.subr.mxu0 0.0
  %1342 = vmatpush1.msra.mxu0 0.0
  %1343 = vmatprep.subr.mxu0 0.0
  %1344 = vmatpush1.msra.mxu0 0.0
  %1345 = vmatprep.subr.mxu0 0.0
  %1346 = vmatpush1.msra.mxu0 0.0
  %1347 = vmatprep.subr.mxu0 0.0
  %1348 = vmatpush1.msra.mxu0 0.0
  %1349 = vmatprep.subr.mxu0 0.0
  %1350 = vmatpush1.msra.mxu0 0.0
  %1351 = vmatprep.subr.mxu0 0.0
  %1352 = vmatpush1.msra.mxu0 0.0
  %1353 = vmatprep.subr.mxu0 0.0
  %1354 = vmatpush1.msra.mxu0 0.0
  %1355 = vmatprep.subr.mxu0 0.0
  %1356 = vmatpush1.msra.mxu0 0.0
  %1357 = vmatprep.subr.mxu0 0.0
  %1358 = vmatpush1.msra.mxu0 0.0
  %1359 = vmatprep.subr.mxu0 0.0
  %1360 = vmatpush1.msra.mxu0 0.0
  %1361 = vmatprep.subr.mxu0 0.0
  %1362 = vmatpush1.msra.mxu0 0.0
  %1363 = vmatprep.subr.mxu0 0.0
  %1364 = vmatpush1.msra.mxu0 0.0
  %1365 = vmatprep.subr.mxu0 0.0
  %1366 = vmatpush1.msra.mxu0 0.0
  %1367 = vmatprep.subr.mxu0 0.0
  %1368 = vmatpush1.msra.mxu0 0.0
  %1369 = vmatprep.subr.mxu0 0.0
  %1370 = vmatpush1.msra.mxu0 0.0
  %1371 = vmatprep.mubr.f32.mxu0 0.0
  %v1372 = vand.u32 %v1095, 4294901760
  %v1373 = vsub.f32 %v1095, %v1372
  %1374 = vmatmul.mubr.f32.gmra.mrb[0].mxu0 %v1373
  %v1375 = vpop.f32.mrb[0].mxu0
  %v1376 = vadd.f32 %v1288, %v1375
  %v1377 = vpop.f32.mrb[0].mxu0
  %1378 = vdwg.mxu0
  %1379 = vmatprep.subr.mxu0 0.0
  %v1380 = vand.u32 %v538, 4294901760
  %1381 = vmatpush1.msra.mxu0 %v1380
  %1382 = vmatprep.subr.mxu0 0.0
  %v1383 = vand.u32 %v539, 4294901760
  %1384 = vmatpush1.msra.mxu0 %v1383
  %1385 = vmatprep.subr.mxu0 0.0
  %v1386 = vand.u32 %v540, 4294901760
  %1387 = vmatpush1.msra.mxu0 %v1386
  %1388 = vmatprep.subr.mxu0 0.0
  %v1389 = vand.u32 %v541, 4294901760
  %1390 = vmatpush1.msra.mxu0 %v1389
  %1391 = vmatprep.subr.mxu0 0.0
  %v1392 = vand.u32 %v542, 4294901760
  %1393 = vmatpush1.msra.mxu0 %v1392
  %1394 = vmatprep.subr.mxu0 0.0
  %v1395 = vand.u32 %v543, 4294901760
  %1396 = vmatpush1.msra.mxu0 %v1395
  %1397 = vmatprep.subr.mxu0 0.0
  %v1398 = vand.u32 %v544, 4294901760
  %1399 = vmatpush1.msra.mxu0 %v1398
  %1400 = vmatprep.subr.mxu0 0.0
  %v1401 = vand.u32 %v545, 4294901760
  %1402 = vmatpush1.msra.mxu0 %v1401
  %1403 = vmatprep.subr.mxu0 0.0
  %1404 = vmatpush1.msra.mxu0 0.0
  %1405 = vmatprep.subr.mxu0 0.0
  %1406 = vmatpush1.msra.mxu0 0.0
  %1407 = vmatprep.subr.mxu0 0.0
  %1408 = vmatpush1.msra.mxu0 0.0
  %1409 = vmatprep.subr.mxu0 0.0
  %1410 = vmatpush1.msra.mxu0 0.0
  %1411 = vmatprep.subr.mxu0 0.0
  %1412 = vmatpush1.msra.mxu0 0.0
  %1413 = vmatprep.subr.mxu0 0.0
  %1414 = vmatpush1.msra.mxu0 0.0
  %1415 = vmatprep.subr.mxu0 0.0
  %1416 = vmatpush1.msra.mxu0 0.0
  %1417 = vmatprep.subr.mxu0 0.0
  %1418 = vmatpush1.msra.mxu0 0.0
  %1419 = vmatprep.subr.mxu0 0.0
  %1420 = vmatpush1.msra.mxu0 0.0
  %1421 = vmatprep.subr.mxu0 0.0
  %1422 = vmatpush1.msra.mxu0 0.0
  %1423 = vmatprep.subr.mxu0 0.0
  %1424 = vmatpush1.msra.mxu0 0.0
  %1425 = vmatprep.subr.mxu0 0.0
  %1426 = vmatpush1.msra.mxu0 0.0
  %1427 = vmatprep.subr.mxu0 0.0
  %1428 = vmatpush1.msra.mxu0 0.0
  %1429 = vmatprep.subr.mxu0 0.0
  %1430 = vmatpush1.msra.mxu0 0.0
  %1431 = vmatprep.subr.mxu0 0.0
  %1432 = vmatpush1.msra.mxu0 0.0
  %1433 = vmatprep.subr.mxu0 0.0
  %1434 = vmatpush1.msra.mxu0 0.0
  %1435 = vmatprep.subr.mxu0 0.0
  %1436 = vmatpush1.msra.mxu0 0.0
  %1437 = vmatprep.subr.mxu0 0.0
  %1438 = vmatpush1.msra.mxu0 0.0
  %1439 = vmatprep.subr.mxu0 0.0
  %1440 = vmatpush1.msra.mxu0 0.0
  %1441 = vmatprep.subr.mxu0 0.0
  %1442 = vmatpush1.msra.mxu0 0.0
  %1443 = vmatprep.subr.mxu0 0.0
  %1444 = vmatpush1.msra.mxu0 0.0
  %1445 = vmatprep.subr.mxu0 0.0
  %1446 = vmatpush1.msra.mxu0 0.0
  %1447 = vmatprep.subr.mxu0 0.0
  %1448 = vmatpush1.msra.mxu0 0.0
  %1449 = vmatprep.subr.mxu0 0.0
  %1450 = vmatpush1.msra.mxu0 0.0
  %1451 = vmatprep.mubr.f32.mxu0 0.0
  %v1452 = vand.u32 %v1095, 4294901760
  %v1453 = vsub.f32 %v1095, %v1452
  %v1454 = vand.u32 %v1453, 4294901760
  %1455 = vmatmul.mubr.f32.gmra.mrb[0].mxu0 %v1454
  %v1456 = vpop.f32.mrb[0].mxu0
  %v1457 = vadd.f32 %v1376, %v1456
  %v1458 = vpop.f32.mrb[0].mxu0
  %1459 = vdwg.mxu0
  %1460 = vmatprep.subr.mxu0 0.0
  %v1461 = vand.u32 %v538, 4294901760
  %v1462 = vsub.f32 %v538, %v1461
  %v1463 = vand.u32 %v1462, 4294901760
  %1464 = vmatpush1.msra.mxu0 %v1463
  %1465 = vmatprep.subr.mxu0 0.0
  %v1466 = vand.u32 %v539, 4294901760
  %v1467 = vsub.f32 %v539, %v1466
  %v1468 = vand.u32 %v1467, 4294901760
  %1469 = vmatpush1.msra.mxu0 %v1468
  %1470 = vmatprep.subr.mxu0 0.0
  %v1471 = vand.u32 %v540, 4294901760
  %v1472 = vsub.f32 %v540, %v1471
  %v1473 = vand.u32 %v1472, 4294901760
  %1474 = vmatpush1.msra.mxu0 %v1473
  %1475 = vmatprep.subr.mxu0 0.0
  %v1476 = vand.u32 %v541, 4294901760
  %v1477 = vsub.f32 %v541, %v1476
  %v1478 = vand.u32 %v1477, 4294901760
  %1479 = vmatpush1.msra.mxu0 %v1478
  %1480 = vmatprep.subr.mxu0 0.0
  %v1481 = vand.u32 %v542, 4294901760
  %v1482 = vsub.f32 %v542, %v1481
  %v1483 = vand.u32 %v1482, 4294901760
  %1484 = vmatpush1.msra.mxu0 %v1483
  %1485 = vmatprep.subr.mxu0 0.0
  %v1486 = vand.u32 %v543, 4294901760
  %v1487 = vsub.f32 %v543, %v1486
  %v1488 = vand.u32 %v1487, 4294901760
  %1489 = vmatpush1.msra.mxu0 %v1488
  %1490 = vmatprep.subr.mxu0 0.0
  %v1491 = vand.u32 %v544, 4294901760
  %v1492 = vsub.f32 %v544, %v1491
  %v1493 = vand.u32 %v1492, 4294901760
  %1494 = vmatpush1.msra.mxu0 %v1493
  %1495 = vmatprep.subr.mxu0 0.0
  %v1496 = vand.u32 %v545, 4294901760
  %v1497 = vsub.f32 %v545, %v1496
  %v1498 = vand.u32 %v1497, 4294901760
  %1499 = vmatpush1.msra.mxu0 %v1498
  %1500 = vmatprep.subr.mxu0 0.0
  %1501 = vmatpush1.msra.mxu0 0.0
  %1502 = vmatprep.subr.mxu0 0.0
  %1503 = vmatpush1.msra.mxu0 0.0
  %1504 = vmatprep.subr.mxu0 0.0
  %1505 = vmatpush1.msra.mxu0 0.0
  %1506 = vmatprep.subr.mxu0 0.0
  %1507 = vmatpush1.msra.mxu0 0.0
  %1508 = vmatprep.subr.mxu0 0.0
  %1509 = vmatpush1.msra.mxu0 0.0
  %1510 = vmatprep.subr.mxu0 0.0
  %1511 = vmatpush1.msra.mxu0 0.0
  %1512 = vmatprep.subr.mxu0 0.0
  %1513 = vmatpush1.msra.mxu0 0.0
  %1514 = vmatprep.subr.mxu0 0.0
  %1515 = vmatpush1.msra.mxu0 0.0
  %1516 = vmatprep.subr.mxu0 0.0
  %1517 = vmatpush1.msra.mxu0 0.0
  %1518 = vmatprep.subr.mxu0 0.0
  %1519 = vmatpush1.msra.mxu0 0.0
  %1520 = vmatprep.subr.mxu0 0.0
  %1521 = vmatpush1.msra.mxu0 0.0
  %1522 = vmatprep.subr.mxu0 0.0
  %1523 = vmatpush1.msra.mxu0 0.0
  %1524 = vmatprep.subr.mxu0 0.0
  %1525 = vmatpush1.msra.mxu0 0.0
  %1526 = vmatprep.subr.mxu0 0.0
  %1527 = vmatpush1.msra.mxu0 0.0
  %1528 = vmatprep.subr.mxu0 0.0
  %1529 = vmatpush1.msra.mxu0 0.0
  %1530 = vmatprep.subr.mxu0 0.0
  %1531 = vmatpush1.msra.mxu0 0.0
  %1532 = vmatprep.subr.mxu0 0.0
  %1533 = vmatpush1.msra.mxu0 0.0
  %1534 = vmatprep.subr.mxu0 0.0
  %1535 = vmatpush1.msra.mxu0 0.0
  %1536 = vmatprep.subr.mxu0 0.0
  %1537 = vmatpush1.msra.mxu0 0.0
  %1538 = vmatprep.subr.mxu0 0.0
  %1539 = vmatpush1.msra.mxu0 0.0
  %1540 = vmatprep.subr.mxu0 0.0
  %1541 = vmatpush1.msra.mxu0 0.0
  %1542 = vmatprep.subr.mxu0 0.0
  %1543 = vmatpush1.msra.mxu0 0.0
  %1544 = vmatprep.subr.mxu0 0.0
  %1545 = vmatpush1.msra.mxu0 0.0
  %1546 = vmatprep.subr.mxu0 0.0
  %1547 = vmatpush1.msra.mxu0 0.0
  %1548 = vmatprep.mubr.f32.mxu0 0.0
  %v1549 = vand.u32 %v1095, 4294901760
  %1550 = vmatmul.mubr.f32.gmra.mrb[0].mxu0 %v1549
  %v1551 = vpop.f32.mrb[0].mxu0
  %v1552 = vadd.f32 %v1457, %v1551
  %v1553 = vpop.f32.mrb[0].mxu0
  %1554 = vdwg.mxu0
  %1555 = vmatprep.subr.mxu0 0.0
  %v1556 = vand.u32 %v538, 4294901760
  %1557 = vmatpush1.msra.mxu0 %v1556
  %1558 = vmatprep.subr.mxu0 0.0
  %v1559 = vand.u32 %v539, 4294901760
  %1560 = vmatpush1.msra.mxu0 %v1559
  %1561 = vmatprep.subr.mxu0 0.0
  %v1562 = vand.u32 %v540, 4294901760
  %1563 = vmatpush1.msra.mxu0 %v1562
  %1564 = vmatprep.subr.mxu0 0.0
  %v1565 = vand.u32 %v541, 4294901760
  %1566 = vmatpush1.msra.mxu0 %v1565
  %1567 = vmatprep.subr.mxu0 0.0
  %v1568 = vand.u32 %v542, 4294901760
  %1569 = vmatpush1.msra.mxu0 %v1568
  %1570 = vmatprep.subr.mxu0 0.0
  %v1571 = vand.u32 %v543, 4294901760
  %1572 = vmatpush1.msra.mxu0 %v1571
  %1573 = vmatprep.subr.mxu0 0.0
  %v1574 = vand.u32 %v544, 4294901760
  %1575 = vmatpush1.msra.mxu0 %v1574
  %1576 = vmatprep.subr.mxu0 0.0
  %v1577 = vand.u32 %v545, 4294901760
  %1578 = vmatpush1.msra.mxu0 %v1577
  %1579 = vmatprep.subr.mxu0 0.0
  %1580 = vmatpush1.msra.mxu0 0.0
  %1581 = vmatprep.subr.mxu0 0.0
  %1582 = vmatpush1.msra.mxu0 0.0
  %1583 = vmatprep.subr.mxu0 0.0
  %1584 = vmatpush1.msra.mxu0 0.0
  %1585 = vmatprep.subr.mxu0 0.0
  %1586 = vmatpush1.msra.mxu0 0.0
  %1587 = vmatprep.subr.mxu0 0.0
  %1588 = vmatpush1.msra.mxu0 0.0
  %1589 = vmatprep.subr.mxu0 0.0
  %1590 = vmatpush1.msra.mxu0 0.0
  %1591 = vmatprep.subr.mxu0 0.0
  %1592 = vmatpush1.msra.mxu0 0.0
  %1593 = vmatprep.subr.mxu0 0.0
  %1594 = vmatpush1.msra.mxu0 0.0
  %1595 = vmatprep.subr.mxu0 0.0
  %1596 = vmatpush1.msra.mxu0 0.0
  %1597 = vmatprep.subr.mxu0 0.0
  %1598 = vmatpush1.msra.mxu0 0.0
  %1599 = vmatprep.subr.mxu0 0.0
  %1600 = vmatpush1.msra.mxu0 0.0
  %1601 = vmatprep.subr.mxu0 0.0
  %1602 = vmatpush1.msra.mxu0 0.0
  %1603 = vmatprep.subr.mxu0 0.0
  %1604 = vmatpush1.msra.mxu0 0.0
  %1605 = vmatprep.subr.mxu0 0.0
  %1606 = vmatpush1.msra.mxu0 0.0
  %1607 = vmatprep.subr.mxu0 0.0
  %1608 = vmatpush1.msra.mxu0 0.0
  %1609 = vmatprep.subr.mxu0 0.0
  %1610 = vmatpush1.msra.mxu0 0.0
  %1611 = vmatprep.subr.mxu0 0.0
  %1612 = vmatpush1.msra.mxu0 0.0
  %1613 = vmatprep.subr.mxu0 0.0
  %1614 = vmatpush1.msra.mxu0 0.0
  %1615 = vmatprep.subr.mxu0 0.0
  %1616 = vmatpush1.msra.mxu0 0.0
  %1617 = vmatprep.subr.mxu0 0.0
  %1618 = vmatpush1.msra.mxu0 0.0
  %1619 = vmatprep.subr.mxu0 0.0
  %1620 = vmatpush1.msra.mxu0 0.0
  %1621 = vmatprep.subr.mxu0 0.0
  %1622 = vmatpush1.msra.mxu0 0.0
  %1623 = vmatprep.subr.mxu0 0.0
  %1624 = vmatpush1.msra.mxu0 0.0
  %1625 = vmatprep.subr.mxu0 0.0
  %1626 = vmatpush1.msra.mxu0 0.0
  %1627 = vmatprep.mubr.f32.mxu0 0.0
  %v1628 = vand.u32 %v1095, 4294901760
  %1629 = vmatmul.mubr.f32.gmra.mrb[0].mxu0 %v1628
  %v1630 = vpop.f32.mrb[0].mxu0
  %v1631 = vadd.f32 %v1552, %v1630
  %v1632 = vpop.f32.mrb[0].mxu0
  %1633 = vdwg.mxu0
  %v1634 = vadd.f32 %v1093, %v1631
  %v1635 = vtanh.pop %v1634
  %1637 = vrot.lane.b32.xlu0 %v1635, 96
  %v1638 = vpop.permute.xlu0 %1637
  %vm1640 = vcmask 254977
  %1641 = vst.msk [vmem:[#allocation3 - $0x1] sm:$0x2] %vm1640, %v1638
  %v1642 = vld [vmem:[#allocation2 + $0x4] sm:$0x3]
  %v1643 = vsel %vm535, %v1635, 0
  %1645 = vmatprep.subr.mxu0 0.0
  %v1646 = vand.u32 %v538, 4294901760
  %1647 = vmatpush1.msra.mxu0 %v1646
  %1648 = vmatprep.subr.mxu0 0.0
  %v1649 = vand.u32 %v539, 4294901760
  %1650 = vmatpush1.msra.mxu0 %v1649
  %1651 = vmatprep.subr.mxu0 0.0
  %v1652 = vand.u32 %v540, 4294901760
  %1653 = vmatpush1.msra.mxu0 %v1652
  %1654 = vmatprep.subr.mxu0 0.0
  %v1655 = vand.u32 %v541, 4294901760
  %1656 = vmatpush1.msra.mxu0 %v1655
  %1657 = vmatprep.subr.mxu0 0.0
  %v1658 = vand.u32 %v542, 4294901760
  %1659 = vmatpush1.msra.mxu0 %v1658
  %1660 = vmatprep.subr.mxu0 0.0
  %v1661 = vand.u32 %v543, 4294901760
  %1662 = vmatpush1.msra.mxu0 %v1661
  %1663 = vmatprep.subr.mxu0 0.0
  %v1664 = vand.u32 %v544, 4294901760
  %1665 = vmatpush1.msra.mxu0 %v1664
  %1666 = vmatprep.subr.mxu0 0.0
  %v1667 = vand.u32 %v545, 4294901760
  %1668 = vmatpush1.msra.mxu0 %v1667
  %1669 = vmatprep.subr.mxu0 0.0
  %1670 = vmatpush1.msra.mxu0 0.0
  %1671 = vmatprep.subr.mxu0 0.0
  %1672 = vmatpush1.msra.mxu0 0.0
  %1673 = vmatprep.subr.mxu0 0.0
  %1674 = vmatpush1.msra.mxu0 0.0
  %1675 = vmatprep.subr.mxu0 0.0
  %1676 = vmatpush1.msra.mxu0 0.0
  %1677 = vmatprep.subr.mxu0 0.0
  %1678 = vmatpush1.msra.mxu0 0.0
  %1679 = vmatprep.subr.mxu0 0.0
  %1680 = vmatpush1.msra.mxu0 0.0
  %1681 = vmatprep.subr.mxu0 0.0
  %1682 = vmatpush1.msra.mxu0 0.0
  %1683 = vmatprep.subr.mxu0 0.0
  %1684 = vmatpush1.msra.mxu0 0.0
  %1685 = vmatprep.subr.mxu0 0.0
  %1686 = vmatpush1.msra.mxu0 0.0
  %1687 = vmatprep.subr.mxu0 0.0
  %1688 = vmatpush1.msra.mxu0 0.0
  %1689 = vmatprep.subr.mxu0 0.0
  %1690 = vmatpush1.msra.mxu0 0.0
  %1691 = vmatprep.subr.mxu0 0.0
  %1692 = vmatpush1.msra.mxu0 0.0
  %1693 = vmatprep.subr.mxu0 0.0
  %1694 = vmatpush1.msra.mxu0 0.0
  %1695 = vmatprep.subr.mxu0 0.0
  %1696 = vmatpush1.msra.mxu0 0.0
  %1697 = vmatprep.subr.mxu0 0.0
  %1698 = vmatpush1.msra.mxu0 0.0
  %1699 = vmatprep.subr.mxu0 0.0
  %1700 = vmatpush1.msra.mxu0 0.0
  %1701 = vmatprep.subr.mxu0 0.0
  %1702 = vmatpush1.msra.mxu0 0.0
  %1703 = vmatprep.subr.mxu0 0.0
  %1704 = vmatpush1.msra.mxu0 0.0
  %1705 = vmatprep.subr.mxu0 0.0
  %1706 = vmatpush1.msra.mxu0 0.0
  %1707 = vmatprep.subr.mxu0 0.0
  %1708 = vmatpush1.msra.mxu0 0.0
  %1709 = vmatprep.subr.mxu0 0.0
  %1710 = vmatpush1.msra.mxu0 0.0
  %1711 = vmatprep.subr.mxu0 0.0
  %1712 = vmatpush1.msra.mxu0 0.0
  %1713 = vmatprep.subr.mxu0 0.0
  %1714 = vmatpush1.msra.mxu0 0.0
  %1715 = vmatprep.subr.mxu0 0.0
  %1716 = vmatpush1.msra.mxu0 0.0
  %1717 = vmatprep.mubr.f32.mxu0 0.0
  %v1718 = vand.u32 %v1643, 4294901760
  %v1719 = vsub.f32 %v1643, %v1718
  %v1720 = vand.u32 %v1719, 4294901760
  %v1721 = vsub.f32 %v1719, %v1720
  %v1722 = vand.u32 %v1721, 4294901760
  %1723 = vmatmul.mubr.f32.gmra.mrb[0].mxu0 %v1722
  %v1724 = vpop.f32.mrb[0].mxu0
  %v1725 = vadd.f32 0.0, %v1724
  %v1726 = vpop.f32.mrb[0].mxu0
  %1727 = vdwg.mxu0
  %1728 = vmatprep.subr.mxu0 0.0
  %v1729 = vand.u32 %v538, 4294901760
  %v1730 = vsub.f32 %v538, %v1729
  %v1731 = vand.u32 %v1730, 4294901760
  %v1732 = vsub.f32 %v1730, %v1731
  %v1733 = vand.u32 %v1732, 4294901760
  %1734 = vmatpush1.msra.mxu0 %v1733
  %1735 = vmatprep.subr.mxu0 0.0
  %v1736 = vand.u32 %v539, 4294901760
  %v1737 = vsub.f32 %v539, %v1736
  %v1738 = vand.u32 %v1737, 4294901760
  %v1739 = vsub.f32 %v1737, %v1738
  %v1740 = vand.u32 %v1739, 4294901760
  %1741 = vmatpush1.msra.mxu0 %v1740
  %1742 = vmatprep.subr.mxu0 0.0
  %v1743 = vand.u32 %v540, 4294901760
  %v1744 = vsub.f32 %v540, %v1743
  %v1745 = vand.u32 %v1744, 4294901760
  %v1746 = vsub.f32 %v1744, %v1745
  %v1747 = vand.u32 %v1746, 4294901760
  %1748 = vmatpush1.msra.mxu0 %v1747
  %1749 = vmatprep.subr.mxu0 0.0
  %v1750 = vand.u32 %v541, 4294901760
  %v1751 = vsub.f32 %v541, %v1750
  %v1752 = vand.u32 %v1751, 4294901760
  %v1753 = vsub.f32 %v1751, %v1752
  %v1754 = vand.u32 %v1753, 4294901760
  %1755 = vmatpush1.msra.mxu0 %v1754
  %1756 = vmatprep.subr.mxu0 0.0
  %v1757 = vand.u32 %v542, 4294901760
  %v1758 = vsub.f32 %v542, %v1757
  %v1759 = vand.u32 %v1758, 4294901760
  %v1760 = vsub.f32 %v1758, %v1759
  %v1761 = vand.u32 %v1760, 4294901760
  %1762 = vmatpush1.msra.mxu0 %v1761
  %1763 = vmatprep.subr.mxu0 0.0
  %v1764 = vand.u32 %v543, 4294901760
  %v1765 = vsub.f32 %v543, %v1764
  %v1766 = vand.u32 %v1765, 4294901760
  %v1767 = vsub.f32 %v1765, %v1766
  %v1768 = vand.u32 %v1767, 4294901760
  %1769 = vmatpush1.msra.mxu0 %v1768
  %1770 = vmatprep.subr.mxu0 0.0
  %v1771 = vand.u32 %v544, 4294901760
  %v1772 = vsub.f32 %v544, %v1771
  %v1773 = vand.u32 %v1772, 4294901760
  %v1774 = vsub.f32 %v1772, %v1773
  %v1775 = vand.u32 %v1774, 4294901760
  %1776 = vmatpush1.msra.mxu0 %v1775
  %1777 = vmatprep.subr.mxu0 0.0
  %v1778 = vand.u32 %v545, 4294901760
  %v1779 = vsub.f32 %v545, %v1778
  %v1780 = vand.u32 %v1779, 4294901760
  %v1781 = vsub.f32 %v1779, %v1780
  %v1782 = vand.u32 %v1781, 4294901760
  %1783 = vmatpush1.msra.mxu0 %v1782
  %1784 = vmatprep.subr.mxu0 0.0
  %1785 = vmatpush1.msra.mxu0 0.0
  %1786 = vmatprep.subr.mxu0 0.0
  %1787 = vmatpush1.msra.mxu0 0.0
  %1788 = vmatprep.subr.mxu0 0.0
  %1789 = vmatpush1.msra.mxu0 0.0
  %1790 = vmatprep.subr.mxu0 0.0
  %1791 = vmatpush1.msra.mxu0 0.0
  %1792 = vmatprep.subr.mxu0 0.0
  %1793 = vmatpush1.msra.mxu0 0.0
  %1794 = vmatprep.subr.mxu0 0.0
  %1795 = vmatpush1.msra.mxu0 0.0
  %1796 = vmatprep.subr.mxu0 0.0
  %1797 = vmatpush1.msra.mxu0 0.0
  %1798 = vmatprep.subr.mxu0 0.0
  %1799 = vmatpush1.msra.mxu0 0.0
  %1800 = vmatprep.subr.mxu0 0.0
  %1801 = vmatpush1.msra.mxu0 0.0
  %1802 = vmatprep.subr.mxu0 0.0
  %1803 = vmatpush1.msra.mxu0 0.0
  %1804 = vmatprep.subr.mxu0 0.0
  %1805 = vmatpush1.msra.mxu0 0.0
  %1806 = vmatprep.subr.mxu0 0.0
  %1807 = vmatpush1.msra.mxu0 0.0
  %1808 = vmatprep.subr.mxu0 0.0
  %1809 = vmatpush1.msra.mxu0 0.0
  %1810 = vmatprep.subr.mxu0 0.0
  %1811 = vmatpush1.msra.mxu0 0.0
  %1812 = vmatprep.subr.mxu0 0.0
  %1813 = vmatpush1.msra.mxu0 0.0
  %1814 = vmatprep.subr.mxu0 0.0
  %1815 = vmatpush1.msra.mxu0 0.0
  %1816 = vmatprep.subr.mxu0 0.0
  %1817 = vmatpush1.msra.mxu0 0.0
  %1818 = vmatprep.subr.mxu0 0.0
  %1819 = vmatpush1.msra.mxu0 0.0
  %1820 = vmatprep.subr.mxu0 0.0
  %1821 = vmatpush1.msra.mxu0 0.0
  %1822 = vmatprep.subr.mxu0 0.0
  %1823 = vmatpush1.msra.mxu0 0.0
  %1824 = vmatprep.subr.mxu0 0.0
  %1825 = vmatpush1.msra.mxu0 0.0
  %1826 = vmatprep.subr.mxu0 0.0
  %1827 = vmatpush1.msra.mxu0 0.0
  %1828 = vmatprep.subr.mxu0 0.0
  %1829 = vmatpush1.msra.mxu0 0.0
  %1830 = vmatprep.subr.mxu0 0.0
  %1831 = vmatpush1.msra.mxu0 0.0
  %1832 = vmatprep.mubr.f32.mxu0 0.0
  %v1833 = vand.u32 %v1643, 4294901760
  %1834 = vmatmul.mubr.f32.gmra.mrb[0].mxu0 %v1833
  %v1835 = vpop.f32.mrb[0].mxu0
  %v1836 = vadd.f32 %v1725, %v1835
  %v1837 = vpop.f32.mrb[0].mxu0
  %1838 = vdwg.mxu0
  %1839 = vmatprep.subr.mxu0 0.0
  %v1840 = vand.u32 %v538, 4294901760
  %v1841 = vsub.f32 %v538, %v1840
  %1842 = vmatpush1.msra.mxu0 %v1841
  %1843 = vmatprep.subr.mxu0 0.0
  %v1844 = vand.u32 %v539, 4294901760
  %v1845 = vsub.f32 %v539, %v1844
  %1846 = vmatpush1.msra.mxu0 %v1845
  %1847 = vmatprep.subr.mxu0 0.0
  %v1848 = vand.u32 %v540, 4294901760
  %v1849 = vsub.f32 %v540, %v1848
  %1850 = vmatpush1.msra.mxu0 %v1849
  %1851 = vmatprep.subr.mxu0 0.0
  %v1852 = vand.u32 %v541, 4294901760
  %v1853 = vsub.f32 %v541, %v1852
  %1854 = vmatpush1.msra.mxu0 %v1853
  %1855 = vmatprep.subr.mxu0 0.0
  %v1856 = vand.u32 %v542, 4294901760
  %v1857 = vsub.f32 %v542, %v1856
  %1858 = vmatpush1.msra.mxu0 %v1857
  %1859 = vmatprep.subr.mxu0 0.0
  %v1860 = vand.u32 %v543, 4294901760
  %v1861 = vsub.f32 %v543, %v1860
  %1862 = vmatpush1.msra.mxu0 %v1861
  %1863 = vmatprep.subr.mxu0 0.0
  %v1864 = vand.u32 %v544, 4294901760
  %v1865 = vsub.f32 %v544, %v1864
  %1866 = vmatpush1.msra.mxu0 %v1865
  %1867 = vmatprep.subr.mxu0 0.0
  %v1868 = vand.u32 %v545, 4294901760
  %v1869 = vsub.f32 %v545, %v1868
  %1870 = vmatpush1.msra.mxu0 %v1869
  %1871 = vmatprep.subr.mxu0 0.0
  %1872 = vmatpush1.msra.mxu0 0.0
  %1873 = vmatprep.subr.mxu0 0.0
  %1874 = vmatpush1.msra.mxu0 0.0
  %1875 = vmatprep.subr.mxu0 0.0
  %1876 = vmatpush1.msra.mxu0 0.0
  %1877 = vmatprep.subr.mxu0 0.0
  %1878 = vmatpush1.msra.mxu0 0.0
  %1879 = vmatprep.subr.mxu0 0.0
  %1880 = vmatpush1.msra.mxu0 0.0
  %1881 = vmatprep.subr.mxu0 0.0
  %1882 = vmatpush1.msra.mxu0 0.0
  %1883 = vmatprep.subr.mxu0 0.0
  %1884 = vmatpush1.msra.mxu0 0.0
  %1885 = vmatprep.subr.mxu0 0.0
  %1886 = vmatpush1.msra.mxu0 0.0
  %1887 = vmatprep.subr.mxu0 0.0
  %1888 = vmatpush1.msra.mxu0 0.0
  %1889 = vmatprep.subr.mxu0 0.0
  %1890 = vmatpush1.msra.mxu0 0.0
  %1891 = vmatprep.subr.mxu0 0.0
  %1892 = vmatpush1.msra.mxu0 0.0
  %1893 = vmatprep.subr.mxu0 0.0
  %1894 = vmatpush1.msra.mxu0 0.0
  %1895 = vmatprep.subr.mxu0 0.0
  %1896 = vmatpush1.msra.mxu0 0.0
  %1897 = vmatprep.subr.mxu0 0.0
  %1898 = vmatpush1.msra.mxu0 0.0
  %1899 = vmatprep.subr.mxu0 0.0
  %1900 = vmatpush1.msra.mxu0 0.0
  %1901 = vmatprep.subr.mxu0 0.0
  %1902 = vmatpush1.msra.mxu0 0.0
  %1903 = vmatprep.subr.mxu0 0.0
  %1904 = vmatpush1.msra.mxu0 0.0
  %1905 = vmatprep.subr.mxu0 0.0
  %1906 = vmatpush1.msra.mxu0 0.0
  %1907 = vmatprep.subr.mxu0 0.0
  %1908 = vmatpush1.msra.mxu0 0.0
  %1909 = vmatprep.subr.mxu0 0.0
  %1910 = vmatpush1.msra.mxu0 0.0
  %1911 = vmatprep.subr.mxu0 0.0
  %1912 = vmatpush1.msra.mxu0 0.0
  %1913 = vmatprep.subr.mxu0 0.0
  %1914 = vmatpush1.msra.mxu0 0.0
  %1915 = vmatprep.subr.mxu0 0.0
  %1916 = vmatpush1.msra.mxu0 0.0
  %1917 = vmatprep.subr.mxu0 0.0
  %1918 = vmatpush1.msra.mxu0 0.0
  %1919 = vmatprep.mubr.f32.mxu0 0.0
  %v1920 = vand.u32 %v1643, 4294901760
  %v1921 = vsub.f32 %v1643, %v1920
  %1922 = vmatmul.mubr.f32.gmra.mrb[0].mxu0 %v1921
  %v1923 = vpop.f32.mrb[0].mxu0
  %v1924 = vadd.f32 %v1836, %v1923
  %v1925 = vpop.f32.mrb[0].mxu0
  %1926 = vdwg.mxu0
  %1927 = vmatprep.subr.mxu0 0.0
  %v1928 = vand.u32 %v538, 4294901760
  %1929 = vmatpush1.msra.mxu0 %v1928
  %1930 = vmatprep.subr.mxu0 0.0
  %v1931 = vand.u32 %v539, 4294901760
  %1932 = vmatpush1.msra.mxu0 %v1931
  %1933 = vmatprep.subr.mxu0 0.0
  %v1934 = vand.u32 %v540, 4294901760
  %1935 = vmatpush1.msra.mxu0 %v1934
  %1936 = vmatprep.subr.mxu0 0.0
  %v1937 = vand.u32 %v541, 4294901760
  %1938 = vmatpush1.msra.mxu0 %v1937
  %1939 = vmatprep.subr.mxu0 0.0
  %v1940 = vand.u32 %v542, 4294901760
  %1941 = vmatpush1.msra.mxu0 %v1940
  %1942 = vmatprep.subr.mxu0 0.0
  %v1943 = vand.u32 %v543, 4294901760
  %1944 = vmatpush1.msra.mxu0 %v1943
  %1945 = vmatprep.subr.mxu0 0.0
  %v1946 = vand.u32 %v544, 4294901760
  %1947 = vmatpush1.msra.mxu0 %v1946
  %1948 = vmatprep.subr.mxu0 0.0
  %v1949 = vand.u32 %v545, 4294901760
  %1950 = vmatpush1.msra.mxu0 %v1949
  %1951 = vmatprep.subr.mxu0 0.0
  %1952 = vmatpush1.msra.mxu0 0.0
  %1953 = vmatprep.subr.mxu0 0.0
  %1954 = vmatpush1.msra.mxu0 0.0
  %1955 = vmatprep.subr.mxu0 0.0
  %1956 = vmatpush1.msra.mxu0 0.0
  %1957 = vmatprep.subr.mxu0 0.0
  %1958 = vmatpush1.msra.mxu0 0.0
  %1959 = vmatprep.subr.mxu0 0.0
  %1960 = vmatpush1.msra.mxu0 0.0
  %1961 = vmatprep.subr.mxu0 0.0
  %1962 = vmatpush1.msra.mxu0 0.0
  %1963 = vmatprep.subr.mxu0 0.0
  %1964 = vmatpush1.msra.mxu0 0.0
  %1965 = vmatprep.subr.mxu0 0.0
  %1966 = vmatpush1.msra.mxu0 0.0
  %1967 = vmatprep.subr.mxu0 0.0
  %1968 = vmatpush1.msra.mxu0 0.0
  %1969 = vmatprep.subr.mxu0 0.0
  %1970 = vmatpush1.msra.mxu0 0.0
  %1971 = vmatprep.subr.mxu0 0.0
  %1972 = vmatpush1.msra.mxu0 0.0
  %1973 = vmatprep.subr.mxu0 0.0
  %1974 = vmatpush1.msra.mxu0 0.0
  %1975 = vmatprep.subr.mxu0 0.0
  %1976 = vmatpush1.msra.mxu0 0.0
  %1977 = vmatprep.subr.mxu0 0.0
  %1978 = vmatpush1.msra.mxu0 0.0
  %1979 = vmatprep.subr.mxu0 0.0
  %1980 = vmatpush1.msra.mxu0 0.0
  %1981 = vmatprep.subr.mxu0 0.0
  %1982 = vmatpush1.msra.mxu0 0.0
  %1983 = vmatprep.subr.mxu0 0.0
  %1984 = vmatpush1.msra.mxu0 0.0
  %1985 = vmatprep.subr.mxu0 0.0
  %1986 = vmatpush1.msra.mxu0 0.0
  %1987 = vmatprep.subr.mxu0 0.0
  %1988 = vmatpush1.msra.mxu0 0.0
  %1989 = vmatprep.subr.mxu0 0.0
  %1990 = vmatpush1.msra.mxu0 0.0
  %1991 = vmatprep.subr.mxu0 0.0
  %1992 = vmatpush1.msra.mxu0 0.0
  %1993 = vmatprep.subr.mxu0 0.0
  %1994 = vmatpush1.msra.mxu0 0.0
  %1995 = vmatprep.subr.mxu0 0.0
  %1996 = vmatpush1.msra.mxu0 0.0
  %1997 = vmatprep.subr.mxu0 0.0
  %1998 = vmatpush1.msra.mxu0 0.0
  %1999 = vmatprep.mubr.f32.mxu0 0.0
  %v2000 = vand.u32 %v1643, 4294901760
  %v2001 = vsub.f32 %v1643, %v2000
  %v2002 = vand.u32 %v2001, 4294901760
  %2003 = vmatmul.mubr.f32.gmra.mrb[0].mxu0 %v2002
  %v2004 = vpop.f32.mrb[0].mxu0
  %v2005 = vadd.f32 %v1924, %v2004
  %v2006 = vpop.f32.mrb[0].mxu0
  %2007 = vdwg.mxu0
  %2008 = vmatprep.subr.mxu0 0.0
  %v2009 = vand.u32 %v538, 4294901760
  %v2010 = vsub.f32 %v538, %v2009
  %v2011 = vand.u32 %v2010, 4294901760
  %2012 = vmatpush1.msra.mxu0 %v2011
  %2013 = vmatprep.subr.mxu0 0.0
  %v2014 = vand.u32 %v539, 4294901760
  %v2015 = vsub.f32 %v539, %v2014
  %v2016 = vand.u32 %v2015, 4294901760
  %2017 = vmatpush1.msra.mxu0 %v2016
  %2018 = vmatprep.subr.mxu0 0.0
  %v2019 = vand.u32 %v540, 4294901760
  %v2020 = vsub.f32 %v540, %v2019
  %v2021 = vand.u32 %v2020, 4294901760
  %2022 = vmatpush1.msra.mxu0 %v2021
  %2023 = vmatprep.subr.mxu0 0.0
  %v2024 = vand.u32 %v541, 4294901760
  %v2025 = vsub.f32 %v541, %v2024
  %v2026 = vand.u32 %v2025, 4294901760
  %2027 = vmatpush1.msra.mxu0 %v2026
  %2028 = vmatprep.subr.mxu0 0.0
  %v2029 = vand.u32 %v542, 4294901760
  %v2030 = vsub.f32 %v542, %v2029
  %v2031 = vand.u32 %v2030, 4294901760
  %2032 = vmatpush1.msra.mxu0 %v2031
  %2033 = vmatprep.subr.mxu0 0.0
  %v2034 = vand.u32 %v543, 4294901760
  %v2035 = vsub.f32 %v543, %v2034
  %v2036 = vand.u32 %v2035, 4294901760
  %2037 = vmatpush1.msra.mxu0 %v2036
  %2038 = vmatprep.subr.mxu0 0.0
  %v2039 = vand.u32 %v544, 4294901760
  %v2040 = vsub.f32 %v544, %v2039
  %v2041 = vand.u32 %v2040, 4294901760
  %2042 = vmatpush1.msra.mxu0 %v2041
  %2043 = vmatprep.subr.mxu0 0.0
  %v2044 = vand.u32 %v545, 4294901760
  %v2045 = vsub.f32 %v545, %v2044
  %v2046 = vand.u32 %v2045, 4294901760
  %2047 = vmatpush1.msra.mxu0 %v2046
  %2048 = vmatprep.subr.mxu0 0.0
  %2049 = vmatpush1.msra.mxu0 0.0
  %2050 = vmatprep.subr.mxu0 0.0
  %2051 = vmatpush1.msra.mxu0 0.0
  %2052 = vmatprep.subr.mxu0 0.0
  %2053 = vmatpush1.msra.mxu0 0.0
  %2054 = vmatprep.subr.mxu0 0.0
  %2055 = vmatpush1.msra.mxu0 0.0
  %2056 = vmatprep.subr.mxu0 0.0
  %2057 = vmatpush1.msra.mxu0 0.0
  %2058 = vmatprep.subr.mxu0 0.0
  %2059 = vmatpush1.msra.mxu0 0.0
  %2060 = vmatprep.subr.mxu0 0.0
  %2061 = vmatpush1.msra.mxu0 0.0
  %2062 = vmatprep.subr.mxu0 0.0
  %2063 = vmatpush1.msra.mxu0 0.0
  %2064 = vmatprep.subr.mxu0 0.0
  %2065 = vmatpush1.msra.mxu0 0.0
  %2066 = vmatprep.subr.mxu0 0.0
  %2067 = vmatpush1.msra.mxu0 0.0
  %2068 = vmatprep.subr.mxu0 0.0
  %2069 = vmatpush1.msra.mxu0 0.0
  %2070 = vmatprep.subr.mxu0 0.0
  %2071 = vmatpush1.msra.mxu0 0.0
  %2072 = vmatprep.subr.mxu0 0.0
  %2073 = vmatpush1.msra.mxu0 0.0
  %2074 = vmatprep.subr.mxu0 0.0
  %2075 = vmatpush1.msra.mxu0 0.0
  %2076 = vmatprep.subr.mxu0 0.0
  %2077 = vmatpush1.msra.mxu0 0.0
  %2078 = vmatprep.subr.mxu0 0.0
  %2079 = vmatpush1.msra.mxu0 0.0
  %2080 = vmatprep.subr.mxu0 0.0
  %2081 = vmatpush1.msra.mxu0 0.0
  %2082 = vmatprep.subr.mxu0 0.0
  %2083 = vmatpush1.msra.mxu0 0.0
  %2084 = vmatprep.subr.mxu0 0.0
  %2085 = vmatpush1.msra.mxu0 0.0
  %2086 = vmatprep.subr.mxu0 0.0
  %2087 = vmatpush1.msra.mxu0 0.0
  %2088 = vmatprep.subr.mxu0 0.0
  %2089 = vmatpush1.msra.mxu0 0.0
  %2090 = vmatprep.subr.mxu0 0.0
  %2091 = vmatpush1.msra.mxu0 0.0
  %2092 = vmatprep.subr.mxu0 0.0
  %2093 = vmatpush1.msra.mxu0 0.0
  %2094 = vmatprep.subr.mxu0 0.0
  %2095 = vmatpush1.msra.mxu0 0.0
  %2096 = vmatprep.mubr.f32.mxu0 0.0
  %v2097 = vand.u32 %v1643, 4294901760
  %2098 = vmatmul.mubr.f32.gmra.mrb[0].mxu0 %v2097
  %v2099 = vpop.f32.mrb[0].mxu0
  %v2100 = vadd.f32 %v2005, %v2099
  %v2101 = vpop.f32.mrb[0].mxu0
  %2102 = vdwg.mxu0
  %2103 = vmatprep.subr.mxu0 0.0
  %v2104 = vand.u32 %v538, 4294901760
  %2105 = vmatpush1.msra.mxu0 %v2104
  %2106 = vmatprep.subr.mxu0 0.0
  %v2107 = vand.u32 %v539, 4294901760
  %2108 = vmatpush1.msra.mxu0 %v2107
  %2109 = vmatprep.subr.mxu0 0.0
  %v2110 = vand.u32 %v540, 4294901760
  %2111 = vmatpush1.msra.mxu0 %v2110
  %2112 = vmatprep.subr.mxu0 0.0
  %v2113 = vand.u32 %v541, 4294901760
  %2114 = vmatpush1.msra.mxu0 %v2113
  %2115 = vmatprep.subr.mxu0 0.0
  %v2116 = vand.u32 %v542, 4294901760
  %2117 = vmatpush1.msra.mxu0 %v2116
  %2118 = vmatprep.subr.mxu0 0.0
  %v2119 = vand.u32 %v543, 4294901760
  %2120 = vmatpush1.msra.mxu0 %v2119
  %2121 = vmatprep.subr.mxu0 0.0
  %v2122 = vand.u32 %v544, 4294901760
  %2123 = vmatpush1.msra.mxu0 %v2122
  %2124 = vmatprep.subr.mxu0 0.0
  %v2125 = vand.u32 %v545, 4294901760
  %2126 = vmatpush1.msra.mxu0 %v2125
  %2127 = vmatprep.subr.mxu0 0.0
  %2128 = vmatpush1.msra.mxu0 0.0
  %2129 = vmatprep.subr.mxu0 0.0
  %2130 = vmatpush1.msra.mxu0 0.0
  %2131 = vmatprep.subr.mxu0 0.0
  %2132 = vmatpush1.msra.mxu0 0.0
  %2133 = vmatprep.subr.mxu0 0.0
  %2134 = vmatpush1.msra.mxu0 0.0
  %2135 = vmatprep.subr.mxu0 0.0
  %2136 = vmatpush1.msra.mxu0 0.0
  %2137 = vmatprep.subr.mxu0 0.0
  %2138 = vmatpush1.msra.mxu0 0.0
  %2139 = vmatprep.subr.mxu0 0.0
  %2140 = vmatpush1.msra.mxu0 0.0
  %2141 = vmatprep.subr.mxu0 0.0
  %2142 = vmatpush1.msra.mxu0 0.0
  %2143 = vmatprep.subr.mxu0 0.0
  %2144 = vmatpush1.msra.mxu0 0.0
  %2145 = vmatprep.subr.mxu0 0.0
  %2146 = vmatpush1.msra.mxu0 0.0
  %2147 = vmatprep.subr.mxu0 0.0
  %2148 = vmatpush1.msra.mxu0 0.0
  %2149 = vmatprep.subr.mxu0 0.0
  %2150 = vmatpush1.msra.mxu0 0.0
  %2151 = vmatprep.subr.mxu0 0.0
  %2152 = vmatpush1.msra.mxu0 0.0
  %2153 = vmatprep.subr.mxu0 0.0
  %2154 = vmatpush1.msra.mxu0 0.0
  %2155 = vmatprep.subr.mxu0 0.0
  %2156 = vmatpush1.msra.mxu0 0.0
  %2157 = vmatprep.subr.mxu0 0.0
  %2158 = vmatpush1.msra.mxu0 0.0
  %2159 = vmatprep.subr.mxu0 0.0
  %2160 = vmatpush1.msra.mxu0 0.0
  %2161 = vmatprep.subr.mxu0 0.0
  %2162 = vmatpush1.msra.mxu0 0.0
  %2163 = vmatprep.subr.mxu0 0.0
  %2164 = vmatpush1.msra.mxu0 0.0
  %2165 = vmatprep.subr.mxu0 0.0
  %2166 = vmatpush1.msra.mxu0 0.0
  %2167 = vmatprep.subr.mxu0 0.0
  %2168 = vmatpush1.msra.mxu0 0.0
  %2169 = vmatprep.subr.mxu0 0.0
  %2170 = vmatpush1.msra.mxu0 0.0
  %2171 = vmatprep.subr.mxu0 0.0
  %2172 = vmatpush1.msra.mxu0 0.0
  %2173 = vmatprep.subr.mxu0 0.0
  %2174 = vmatpush1.msra.mxu0 0.0
  %2175 = vmatprep.mubr.f32.mxu0 0.0
  %v2176 = vand.u32 %v1643, 4294901760
  %2177 = vmatmul.mubr.f32.gmra.mrb[0].mxu0 %v2176
  %v2178 = vpop.f32.mrb[0].mxu0
  %v2179 = vadd.f32 %v2100, %v2178
  %v2180 = vpop.f32.mrb[0].mxu0
  %2181 = vdwg.mxu0
  %v2182 = vadd.f32 %v1642, %v2179
  %v2183 = vtanh.pop %v2182
  %2185 = vrot.lane.b32.xlu0 %v2183, 96
  %v2186 = vpop.permute.xlu0 %2185
  %2188 = vst.msk [vmem:[#allocation3] sm:$0x2] %vm1640, %v2186
  %v2189 = vld [vmem:[#allocation2 + $0x6] sm:$0x3]
  %v2190 = vsel %vm535, %v2183, 0
  %2192 = vmatprep.subr.mxu0 0.0
  %v2193 = vand.u32 %v538, 4294901760
  %2194 = vmatpush1.msra.mxu0 %v2193
  %2195 = vmatprep.subr.mxu0 0.0
  %v2196 = vand.u32 %v539, 4294901760
  %2197 = vmatpush1.msra.mxu0 %v2196
  %2198 = vmatprep.subr.mxu0 0.0
  %v2199 = vand.u32 %v540, 4294901760
  %2200 = vmatpush1.msra.mxu0 %v2199
  %2201 = vmatprep.subr.mxu0 0.0
  %v2202 = vand.u32 %v541, 4294901760
  %2203 = vmatpush1.msra.mxu0 %v2202
  %2204 = vmatprep.subr.mxu0 0.0
  %v2205 = vand.u32 %v542, 4294901760
  %2206 = vmatpush1.msra.mxu0 %v2205
  %2207 = vmatprep.subr.mxu0 0.0
  %v2208 = vand.u32 %v543, 4294901760
  %2209 = vmatpush1.msra.mxu0 %v2208
  %2210 = vmatprep.subr.mxu0 0.0
  %v2211 = vand.u32 %v544, 4294901760
  %2212 = vmatpush1.msra.mxu0 %v2211
  %2213 = vmatprep.subr.mxu0 0.0
  %v2214 = vand.u32 %v545, 4294901760
  %2215 = vmatpush1.msra.mxu0 %v2214
  %2216 = vmatprep.subr.mxu0 0.0
  %2217 = vmatpush1.msra.mxu0 0.0
  %2218 = vmatprep.subr.mxu0 0.0
  %2219 = vmatpush1.msra.mxu0 0.0
  %2220 = vmatprep.subr.mxu0 0.0
  %2221 = vmatpush1.msra.mxu0 0.0
  %2222 = vmatprep.subr.mxu0 0.0
  %2223 = vmatpush1.msra.mxu0 0.0
  %2224 = vmatprep.subr.mxu0 0.0
  %2225 = vmatpush1.msra.mxu0 0.0
  %2226 = vmatprep.subr.mxu0 0.0
  %2227 = vmatpush1.msra.mxu0 0.0
  %2228 = vmatprep.subr.mxu0 0.0
  %2229 = vmatpush1.msra.mxu0 0.0
  %2230 = vmatprep.subr.mxu0 0.0
  %2231 = vmatpush1.msra.mxu0 0.0
  %2232 = vmatprep.subr.mxu0 0.0
  %2233 = vmatpush1.msra.mxu0 0.0
  %2234 = vmatprep.subr.mxu0 0.0
  %2235 = vmatpush1.msra.mxu0 0.0
  %2236 = vmatprep.subr.mxu0 0.0
  %2237 = vmatpush1.msra.mxu0 0.0
  %2238 = vmatprep.subr.mxu0 0.0
  %2239 = vmatpush1.msra.mxu0 0.0
  %2240 = vmatprep.subr.mxu0 0.0
  %2241 = vmatpush1.msra.mxu0 0.0
  %2242 = vmatprep.subr.mxu0 0.0
  %2243 = vmatpush1.msra.mxu0 0.0
  %2244 = vmatprep.subr.mxu0 0.0
  %2245 = vmatpush1.msra.mxu0 0.0
  %2246 = vmatprep.subr.mxu0 0.0
  %2247 = vmatpush1.msra.mxu0 0.0
  %2248 = vmatprep.subr.mxu0 0.0
  %2249 = vmatpush1.msra.mxu0 0.0
  %2250 = vmatprep.subr.mxu0 0.0
  %2251 = vmatpush1.msra.mxu0 0.0
  %2252 = vmatprep.subr.mxu0 0.0
  %2253 = vmatpush1.msra.mxu0 0.0
  %2254 = vmatprep.subr.mxu0 0.0
  %2255 = vmatpush1.msra.mxu0 0.0
  %2256 = vmatprep.subr.mxu0 0.0
  %2257 = vmatpush1.msra.mxu0 0.0
  %2258 = vmatprep.subr.mxu0 0.0
  %2259 = vmatpush1.msra.mxu0 0.0
  %2260 = vmatprep.subr.mxu0 0.0
  %2261 = vmatpush1.msra.mxu0 0.0
  %2262 = vmatprep.subr.mxu0 0.0
  %2263 = vmatpush1.msra.mxu0 0.0
  %2264 = vmatprep.mubr.f32.mxu0 0.0
  %v2265 = vand.u32 %v2190, 4294901760
  %v2266 = vsub.f32 %v2190, %v2265
  %v2267 = vand.u32 %v2266, 4294901760
  %v2268 = vsub.f32 %v2266, %v2267
  %v2269 = vand.u32 %v2268, 4294901760
  %2270 = vmatmul.mubr.f32.gmra.mrb[0].mxu0 %v2269
  %v2271 = vpop.f32.mrb[0].mxu0
  %v2272 = vadd.f32 0.0, %v2271
  %v2273 = vpop.f32.mrb[0].mxu0
  %2274 = vdwg.mxu0
  %2275 = vmatprep.subr.mxu0 0.0
  %v2276 = vand.u32 %v538, 4294901760
  %v2277 = vsub.f32 %v538, %v2276
  %v2278 = vand.u32 %v2277, 4294901760
  %v2279 = vsub.f32 %v2277, %v2278
  %v2280 = vand.u32 %v2279, 4294901760
  %2281 = vmatpush1.msra.mxu0 %v2280
  %2282 = vmatprep.subr.mxu0 0.0
  %v2283 = vand.u32 %v539, 4294901760
  %v2284 = vsub.f32 %v539, %v2283
  %v2285 = vand.u32 %v2284, 4294901760
  %v2286 = vsub.f32 %v2284, %v2285
  %v2287 = vand.u32 %v2286, 4294901760
  %2288 = vmatpush1.msra.mxu0 %v2287
  %2289 = vmatprep.subr.mxu0 0.0
  %v2290 = vand.u32 %v540, 4294901760
  %v2291 = vsub.f32 %v540, %v2290
  %v2292 = vand.u32 %v2291, 4294901760
  %v2293 = vsub.f32 %v2291, %v2292
  %v2294 = vand.u32 %v2293, 4294901760
  %2295 = vmatpush1.msra.mxu0 %v2294
  %2296 = vmatprep.subr.mxu0 0.0
  %v2297 = vand.u32 %v541, 4294901760
  %v2298 = vsub.f32 %v541, %v2297
  %v2299 = vand.u32 %v2298, 4294901760
  %v2300 = vsub.f32 %v2298, %v2299
  %v2301 = vand.u32 %v2300, 4294901760
  %2302 = vmatpush1.msra.mxu0 %v2301
  %2303 = vmatprep.subr.mxu0 0.0
  %v2304 = vand.u32 %v542, 4294901760
  %v2305 = vsub.f32 %v542, %v2304
  %v2306 = vand.u32 %v2305, 4294901760
  %v2307 = vsub.f32 %v2305, %v2306
  %v2308 = vand.u32 %v2307, 4294901760
  %2309 = vmatpush1.msra.mxu0 %v2308
  %2310 = vmatprep.subr.mxu0 0.0
  %v2311 = vand.u32 %v543, 4294901760
  %v2312 = vsub.f32 %v543, %v2311
  %v2313 = vand.u32 %v2312, 4294901760
  %v2314 = vsub.f32 %v2312, %v2313
  %v2315 = vand.u32 %v2314, 4294901760
  %2316 = vmatpush1.msra.mxu0 %v2315
  %2317 = vmatprep.subr.mxu0 0.0
  %v2318 = vand.u32 %v544, 4294901760
  %v2319 = vsub.f32 %v544, %v2318
  %v2320 = vand.u32 %v2319, 4294901760
  %v2321 = vsub.f32 %v2319, %v2320
  %v2322 = vand.u32 %v2321, 4294901760
  %2323 = vmatpush1.msra.mxu0 %v2322
  %2324 = vmatprep.subr.mxu0 0.0
  %v2325 = vand.u32 %v545, 4294901760
  %v2326 = vsub.f32 %v545, %v2325
  %v2327 = vand.u32 %v2326, 4294901760
  %v2328 = vsub.f32 %v2326, %v2327
  %v2329 = vand.u32 %v2328, 4294901760
  %2330 = vmatpush1.msra.mxu0 %v2329
  %2331 = vmatprep.subr.mxu0 0.0
  %2332 = vmatpush1.msra.mxu0 0.0
  %2333 = vmatprep.subr.mxu0 0.0
  %2334 = vmatpush1.msra.mxu0 0.0
  %2335 = vmatprep.subr.mxu0 0.0
  %2336 = vmatpush1.msra.mxu0 0.0
  %2337 = vmatprep.subr.mxu0 0.0
  %2338 = vmatpush1.msra.mxu0 0.0
  %2339 = vmatprep.subr.mxu0 0.0
  %2340 = vmatpush1.msra.mxu0 0.0
  %2341 = vmatprep.subr.mxu0 0.0
  %2342 = vmatpush1.msra.mxu0 0.0
  %2343 = vmatprep.subr.mxu0 0.0
  %2344 = vmatpush1.msra.mxu0 0.0
  %2345 = vmatprep.subr.mxu0 0.0
  %2346 = vmatpush1.msra.mxu0 0.0
  %2347 = vmatprep.subr.mxu0 0.0
  %2348 = vmatpush1.msra.mxu0 0.0
  %2349 = vmatprep.subr.mxu0 0.0
  %2350 = vmatpush1.msra.mxu0 0.0
  %2351 = vmatprep.subr.mxu0 0.0
  %2352 = vmatpush1.msra.mxu0 0.0
  %2353 = vmatprep.subr.mxu0 0.0
  %2354 = vmatpush1.msra.mxu0 0.0
  %2355 = vmatprep.subr.mxu0 0.0
  %2356 = vmatpush1.msra.mxu0 0.0
  %2357 = vmatprep.subr.mxu0 0.0
  %2358 = vmatpush1.msra.mxu0 0.0
  %2359 = vmatprep.subr.mxu0 0.0
  %2360 = vmatpush1.msra.mxu0 0.0
  %2361 = vmatprep.subr.mxu0 0.0
  %2362 = vmatpush1.msra.mxu0 0.0
  %2363 = vmatprep.subr.mxu0 0.0
  %2364 = vmatpush1.msra.mxu0 0.0
  %2365 = vmatprep.subr.mxu0 0.0
  %2366 = vmatpush1.msra.mxu0 0.0
  %2367 = vmatprep.subr.mxu0 0.0
  %2368 = vmatpush1.msra.mxu0 0.0
  %2369 = vmatprep.subr.mxu0 0.0
  %2370 = vmatpush1.msra.mxu0 0.0
  %2371 = vmatprep.subr.mxu0 0.0
  %2372 = vmatpush1.msra.mxu0 0.0
  %2373 = vmatprep.subr.mxu0 0.0
  %2374 = vmatpush1.msra.mxu0 0.0
  %2375 = vmatprep.subr.mxu0 0.0
  %2376 = vmatpush1.msra.mxu0 0.0
  %2377 = vmatprep.subr.mxu0 0.0
  %2378 = vmatpush1.msra.mxu0 0.0
  %2379 = vmatprep.mubr.f32.mxu0 0.0
  %v2380 = vand.u32 %v2190, 4294901760
  %2381 = vmatmul.mubr.f32.gmra.mrb[0].mxu0 %v2380
  %v2382 = vpop.f32.mrb[0].mxu0
  %v2383 = vadd.f32 %v2272, %v2382
  %v2384 = vpop.f32.mrb[0].mxu0
  %2385 = vdwg.mxu0
  %2386 = vmatprep.subr.mxu0 0.0
  %v2387 = vand.u32 %v538, 4294901760
  %v2388 = vsub.f32 %v538, %v2387
  %2389 = vmatpush1.msra.mxu0 %v2388
  %2390 = vmatprep.subr.mxu0 0.0
  %v2391 = vand.u32 %v539, 4294901760
  %v2392 = vsub.f32 %v539, %v2391
  %2393 = vmatpush1.msra.mxu0 %v2392
  %2394 = vmatprep.subr.mxu0 0.0
  %v2395 = vand.u32 %v540, 4294901760
  %v2396 = vsub.f32 %v540, %v2395
  %2397 = vmatpush1.msra.mxu0 %v2396
  %2398 = vmatprep.subr.mxu0 0.0
  %v2399 = vand.u32 %v541, 4294901760
  %v2400 = vsub.f32 %v541, %v2399
  %2401 = vmatpush1.msra.mxu0 %v2400
  %2402 = vmatprep.subr.mxu0 0.0
  %v2403 = vand.u32 %v542, 4294901760
  %v2404 = vsub.f32 %v542, %v2403
  %2405 = vmatpush1.msra.mxu0 %v2404
  %2406 = vmatprep.subr.mxu0 0.0
  %v2407 = vand.u32 %v543, 4294901760
  %v2408 = vsub.f32 %v543, %v2407
  %2409 = vmatpush1.msra.mxu0 %v2408
  %2410 = vmatprep.subr.mxu0 0.0
  %v2411 = vand.u32 %v544, 4294901760
  %v2412 = vsub.f32 %v544, %v2411
  %2413 = vmatpush1.msra.mxu0 %v2412
  %2414 = vmatprep.subr.mxu0 0.0
  %v2415 = vand.u32 %v545, 4294901760
  %v2416 = vsub.f32 %v545, %v2415
  %2417 = vmatpush1.msra.mxu0 %v2416
  %2418 = vmatprep.subr.mxu0 0.0
  %2419 = vmatpush1.msra.mxu0 0.0
  %2420 = vmatprep.subr.mxu0 0.0
  %2421 = vmatpush1.msra.mxu0 0.0
  %2422 = vmatprep.subr.mxu0 0.0
  %2423 = vmatpush1.msra.mxu0 0.0
  %2424 = vmatprep.subr.mxu0 0.0
  %2425 = vmatpush1.msra.mxu0 0.0
  %2426 = vmatprep.subr.mxu0 0.0
  %2427 = vmatpush1.msra.mxu0 0.0
  %2428 = vmatprep.subr.mxu0 0.0
  %2429 = vmatpush1.msra.mxu0 0.0
  %2430 = vmatprep.subr.mxu0 0.0
  %2431 = vmatpush1.msra.mxu0 0.0
  %2432 = vmatprep.subr.mxu0 0.0
  %2433 = vmatpush1.msra.mxu0 0.0
  %2434 = vmatprep.subr.mxu0 0.0
  %2435 = vmatpush1.msra.mxu0 0.0
  %2436 = vmatprep.subr.mxu0 0.0
  %2437 = vmatpush1.msra.mxu0 0.0
  %2438 = vmatprep.subr.mxu0 0.0
  %2439 = vmatpush1.msra.mxu0 0.0
  %2440 = vmatprep.subr.mxu0 0.0
  %2441 = vmatpush1.msra.mxu0 0.0
  %2442 = vmatprep.subr.mxu0 0.0
  %2443 = vmatpush1.msra.mxu0 0.0
  %2444 = vmatprep.subr.mxu0 0.0
  %2445 = vmatpush1.msra.mxu0 0.0
  %2446 = vmatprep.subr.mxu0 0.0
  %2447 = vmatpush1.msra.mxu0 0.0
  %2448 = vmatprep.subr.mxu0 0.0
  %2449 = vmatpush1.msra.mxu0 0.0
  %2450 = vmatprep.subr.mxu0 0.0
  %2451 = vmatpush1.msra.mxu0 0.0
  %2452 = vmatprep.subr.mxu0 0.0
  %2453 = vmatpush1.msra.mxu0 0.0
  %2454 = vmatprep.subr.mxu0 0.0
  %2455 = vmatpush1.msra.mxu0 0.0
  %2456 = vmatprep.subr.mxu0 0.0
  %2457 = vmatpush1.msra.mxu0 0.0
  %2458 = vmatprep.subr.mxu0 0.0
  %2459 = vmatpush1.msra.mxu0 0.0
  %2460 = vmatprep.subr.mxu0 0.0
  %2461 = vmatpush1.msra.mxu0 0.0
  %2462 = vmatprep.subr.mxu0 0.0
  %2463 = vmatpush1.msra.mxu0 0.0
  %2464 = vmatprep.subr.mxu0 0.0
  %2465 = vmatpush1.msra.mxu0 0.0
  %2466 = vmatprep.mubr.f32.mxu0 0.0
  %v2467 = vand.u32 %v2190, 4294901760
  %v2468 = vsub.f32 %v2190, %v2467
  %2469 = vmatmul.mubr.f32.gmra.mrb[0].mxu0 %v2468
  %v2470 = vpop.f32.mrb[0].mxu0
  %v2471 = vadd.f32 %v2383, %v2470
  %v2472 = vpop.f32.mrb[0].mxu0
  %2473 = vdwg.mxu0
  %2474 = vmatprep.subr.mxu0 0.0
  %v2475 = vand.u32 %v538, 4294901760
  %2476 = vmatpush1.msra.mxu0 %v2475
  %2477 = vmatprep.subr.mxu0 0.0
  %v2478 = vand.u32 %v539, 4294901760
  %2479 = vmatpush1.msra.mxu0 %v2478
  %2480 = vmatprep.subr.mxu0 0.0
  %v2481 = vand.u32 %v540, 4294901760
  %2482 = vmatpush1.msra.mxu0 %v2481
  %2483 = vmatprep.subr.mxu0 0.0
  %v2484 = vand.u32 %v541, 4294901760
  %2485 = vmatpush1.msra.mxu0 %v2484
  %2486 = vmatprep.subr.mxu0 0.0
  %v2487 = vand.u32 %v542, 4294901760
  %2488 = vmatpush1.msra.mxu0 %v2487
  %2489 = vmatprep.subr.mxu0 0.0
  %v2490 = vand.u32 %v543, 4294901760
  %2491 = vmatpush1.msra.mxu0 %v2490
  %2492 = vmatprep.subr.mxu0 0.0
  %v2493 = vand.u32 %v544, 4294901760
  %2494 = vmatpush1.msra.mxu0 %v2493
  %2495 = vmatprep.subr.mxu0 0.0
  %v2496 = vand.u32 %v545, 4294901760
  %2497 = vmatpush1.msra.mxu0 %v2496
  %2498 = vmatprep.subr.mxu0 0.0
  %2499 = vmatpush1.msra.mxu0 0.0
  %2500 = vmatprep.subr.mxu0 0.0
  %2501 = vmatpush1.msra.mxu0 0.0
  %2502 = vmatprep.subr.mxu0 0.0
  %2503 = vmatpush1.msra.mxu0 0.0
  %2504 = vmatprep.subr.mxu0 0.0
  %2505 = vmatpush1.msra.mxu0 0.0
  %2506 = vmatprep.subr.mxu0 0.0
  %2507 = vmatpush1.msra.mxu0 0.0
  %2508 = vmatprep.subr.mxu0 0.0
  %2509 = vmatpush1.msra.mxu0 0.0
  %2510 = vmatprep.subr.mxu0 0.0
  %2511 = vmatpush1.msra.mxu0 0.0
  %2512 = vmatprep.subr.mxu0 0.0
  %2513 = vmatpush1.msra.mxu0 0.0
  %2514 = vmatprep.subr.mxu0 0.0
  %2515 = vmatpush1.msra.mxu0 0.0
  %2516 = vmatprep.subr.mxu0 0.0
  %2517 = vmatpush1.msra.mxu0 0.0
  %2518 = vmatprep.subr.mxu0 0.0
  %2519 = vmatpush1.msra.mxu0 0.0
  %2520 = vmatprep.subr.mxu0 0.0
  %2521 = vmatpush1.msra.mxu0 0.0
  %2522 = vmatprep.subr.mxu0 0.0
  %2523 = vmatpush1.msra.mxu0 0.0
  %2524 = vmatprep.subr.mxu0 0.0
  %2525 = vmatpush1.msra.mxu0 0.0
  %2526 = vmatprep.subr.mxu0 0.0
  %2527 = vmatpush1.msra.mxu0 0.0
  %2528 = vmatprep.subr.mxu0 0.0
  %2529 = vmatpush1.msra.mxu0 0.0
  %2530 = vmatprep.subr.mxu0 0.0
  %2531 = vmatpush1.msra.mxu0 0.0
  %2532 = vmatprep.subr.mxu0 0.0
  %2533 = vmatpush1.msra.mxu0 0.0
  %2534 = vmatprep.subr.mxu0 0.0
  %2535 = vmatpush1.msra.mxu0 0.0
  %2536 = vmatprep.subr.mxu0 0.0
  %2537 = vmatpush1.msra.mxu0 0.0
  %2538 = vmatprep.subr.mxu0 0.0
  %2539 = vmatpush1.msra.mxu0 0.0
  %2540 = vmatprep.subr.mxu0 0.0
  %2541 = vmatpush1.msra.mxu0 0.0
  %2542 = vmatprep.subr.mxu0 0.0
  %2543 = vmatpush1.msra.mxu0 0.0
  %2544 = vmatprep.subr.mxu0 0.0
  %2545 = vmatpush1.msra.mxu0 0.0
  %2546 = vmatprep.mubr.f32.mxu0 0.0
  %v2547 = vand.u32 %v2190, 4294901760
  %v2548 = vsub.f32 %v2190, %v2547
  %v2549 = vand.u32 %v2548, 4294901760
  %2550 = vmatmul.mubr.f32.gmra.mrb[0].mxu0 %v2549
  %v2551 = vpop.f32.mrb[0].mxu0
  %v2552 = vadd.f32 %v2471, %v2551
  %v2553 = vpop.f32.mrb[0].mxu0
  %2554 = vdwg.mxu0
  %2555 = vmatprep.subr.mxu0 0.0
  %v2556 = vand.u32 %v538, 4294901760
  %v2557 = vsub.f32 %v538, %v2556
  %v2558 = vand.u32 %v2557, 4294901760
  %2559 = vmatpush1.msra.mxu0 %v2558
  %2560 = vmatprep.subr.mxu0 0.0
  %v2561 = vand.u32 %v539, 4294901760
  %v2562 = vsub.f32 %v539, %v2561
  %v2563 = vand.u32 %v2562, 4294901760
  %2564 = vmatpush1.msra.mxu0 %v2563
  %2565 = vmatprep.subr.mxu0 0.0
  %v2566 = vand.u32 %v540, 4294901760
  %v2567 = vsub.f32 %v540, %v2566
  %v2568 = vand.u32 %v2567, 4294901760
  %2569 = vmatpush1.msra.mxu0 %v2568
  %2570 = vmatprep.subr.mxu0 0.0
  %v2571 = vand.u32 %v541, 4294901760
  %v2572 = vsub.f32 %v541, %v2571
  %v2573 = vand.u32 %v2572, 4294901760
  %2574 = vmatpush1.msra.mxu0 %v2573
  %2575 = vmatprep.subr.mxu0 0.0
  %v2576 = vand.u32 %v542, 4294901760
  %v2577 = vsub.f32 %v542, %v2576
  %v2578 = vand.u32 %v2577, 4294901760
  %2579 = vmatpush1.msra.mxu0 %v2578
  %2580 = vmatprep.subr.mxu0 0.0
  %v2581 = vand.u32 %v543, 4294901760
  %v2582 = vsub.f32 %v543, %v2581
  %v2583 = vand.u32 %v2582, 4294901760
  %2584 = vmatpush1.msra.mxu0 %v2583
  %2585 = vmatprep.subr.mxu0 0.0
  %v2586 = vand.u32 %v544, 4294901760
  %v2587 = vsub.f32 %v544, %v2586
  %v2588 = vand.u32 %v2587, 4294901760
  %2589 = vmatpush1.msra.mxu0 %v2588
  %2590 = vmatprep.subr.mxu0 0.0
  %v2591 = vand.u32 %v545, 4294901760
  %v2592 = vsub.f32 %v545, %v2591
  %v2593 = vand.u32 %v2592, 4294901760
  %2594 = vmatpush1.msra.mxu0 %v2593
  %2595 = vmatprep.subr.mxu0 0.0
  %2596 = vmatpush1.msra.mxu0 0.0
  %2597 = vmatprep.subr.mxu0 0.0
  %2598 = vmatpush1.msra.mxu0 0.0
  %2599 = vmatprep.subr.mxu0 0.0
  %2600 = vmatpush1.msra.mxu0 0.0
  %2601 = vmatprep.subr.mxu0 0.0
  %2602 = vmatpush1.msra.mxu0 0.0
  %2603 = vmatprep.subr.mxu0 0.0
  %2604 = vmatpush1.msra.mxu0 0.0
  %2605 = vmatprep.subr.mxu0 0.0
  %2606 = vmatpush1.msra.mxu0 0.0
  %2607 = vmatprep.subr.mxu0 0.0
  %2608 = vmatpush1.msra.mxu0 0.0
  %2609 = vmatprep.subr.mxu0 0.0
  %2610 = vmatpush1.msra.mxu0 0.0
  %2611 = vmatprep.subr.mxu0 0.0
  %2612 = vmatpush1.msra.mxu0 0.0
  %2613 = vmatprep.subr.mxu0 0.0
  %2614 = vmatpush1.msra.mxu0 0.0
  %2615 = vmatprep.subr.mxu0 0.0
  %2616 = vmatpush1.msra.mxu0 0.0
  %2617 = vmatprep.subr.mxu0 0.0
  %2618 = vmatpush1.msra.mxu0 0.0
  %2619 = vmatprep.subr.mxu0 0.0
  %2620 = vmatpush1.msra.mxu0 0.0
  %2621 = vmatprep.subr.mxu0 0.0
  %2622 = vmatpush1.msra.mxu0 0.0
  %2623 = vmatprep.subr.mxu0 0.0
  %2624 = vmatpush1.msra.mxu0 0.0
  %2625 = vmatprep.subr.mxu0 0.0
  %2626 = vmatpush1.msra.mxu0 0.0
  %2627 = vmatprep.subr.mxu0 0.0
  %2628 = vmatpush1.msra.mxu0 0.0
  %2629 = vmatprep.subr.mxu0 0.0
  %2630 = vmatpush1.msra.mxu0 0.0
  %2631 = vmatprep.subr.mxu0 0.0
  %2632 = vmatpush1.msra.mxu0 0.0
  %2633 = vmatprep.subr.mxu0 0.0
  %2634 = vmatpush1.msra.mxu0 0.0
  %2635 = vmatprep.subr.mxu0 0.0
  %2636 = vmatpush1.msra.mxu0 0.0
  %2637 = vmatprep.subr.mxu0 0.0
  %2638 = vmatpush1.msra.mxu0 0.0
  %2639 = vmatprep.subr.mxu0 0.0
  %2640 = vmatpush1.msra.mxu0 0.0
  %2641 = vmatprep.subr.mxu0 0.0
  %2642 = vmatpush1.msra.mxu0 0.0
  %2643 = vmatprep.mubr.f32.mxu0 0.0
  %v2644 = vand.u32 %v2190, 4294901760
  %2645 = vmatmul.mubr.f32.gmra.mrb[0].mxu0 %v2644
  %v2646 = vpop.f32.mrb[0].mxu0
  %v2647 = vadd.f32 %v2552, %v2646
  %v2648 = vpop.f32.mrb[0].mxu0
  %2649 = vdwg.mxu0
  %2650 = vmatprep.subr.mxu0 0.0
  %v2651 = vand.u32 %v538, 4294901760
  %2652 = vmatpush1.msra.mxu0 %v2651
  %2653 = vmatprep.subr.mxu0 0.0
  %v2654 = vand.u32 %v539, 4294901760
  %2655 = vmatpush1.msra.mxu0 %v2654
  %2656 = vmatprep.subr.mxu0 0.0
  %v2657 = vand.u32 %v540, 4294901760
  %2658 = vmatpush1.msra.mxu0 %v2657
  %2659 = vmatprep.subr.mxu0 0.0
  %v2660 = vand.u32 %v541, 4294901760
  %2661 = vmatpush1.msra.mxu0 %v2660
  %2662 = vmatprep.subr.mxu0 0.0
  %v2663 = vand.u32 %v542, 4294901760
  %2664 = vmatpush1.msra.mxu0 %v2663
  %2665 = vmatprep.subr.mxu0 0.0
  %v2666 = vand.u32 %v543, 4294901760
  %2667 = vmatpush1.msra.mxu0 %v2666
  %2668 = vmatprep.subr.mxu0 0.0
  %v2669 = vand.u32 %v544, 4294901760
  %2670 = vmatpush1.msra.mxu0 %v2669
  %2671 = vmatprep.subr.mxu0 0.0
  %v2672 = vand.u32 %v545, 4294901760
  %2673 = vmatpush1.msra.mxu0 %v2672
  %2674 = vmatprep.subr.mxu0 0.0
  %2675 = vmatpush1.msra.mxu0 0.0
  %2676 = vmatprep.subr.mxu0 0.0
  %2677 = vmatpush1.msra.mxu0 0.0
  %2678 = vmatprep.subr.mxu0 0.0
  %2679 = vmatpush1.msra.mxu0 0.0
  %2680 = vmatprep.subr.mxu0 0.0
  %2681 = vmatpush1.msra.mxu0 0.0
  %2682 = vmatprep.subr.mxu0 0.0
  %2683 = vmatpush1.msra.mxu0 0.0
  %2684 = vmatprep.subr.mxu0 0.0
  %2685 = vmatpush1.msra.mxu0 0.0
  %2686 = vmatprep.subr.mxu0 0.0
  %2687 = vmatpush1.msra.mxu0 0.0
  %2688 = vmatprep.subr.mxu0 0.0
  %2689 = vmatpush1.msra.mxu0 0.0
  %2690 = vmatprep.subr.mxu0 0.0
  %2691 = vmatpush1.msra.mxu0 0.0
  %2692 = vmatprep.subr.mxu0 0.0
  %2693 = vmatpush1.msra.mxu0 0.0
  %2694 = vmatprep.subr.mxu0 0.0
  %2695 = vmatpush1.msra.mxu0 0.0
  %2696 = vmatprep.subr.mxu0 0.0
  %2697 = vmatpush1.msra.mxu0 0.0
  %2698 = vmatprep.subr.mxu0 0.0
  %2699 = vmatpush1.msra.mxu0 0.0
  %2700 = vmatprep.subr.mxu0 0.0
  %2701 = vmatpush1.msra.mxu0 0.0
  %2702 = vmatprep.subr.mxu0 0.0
  %2703 = vmatpush1.msra.mxu0 0.0
  %2704 = vmatprep.subr.mxu0 0.0
  %2705 = vmatpush1.msra.mxu0 0.0
  %2706 = vmatprep.subr.mxu0 0.0
  %2707 = vmatpush1.msra.mxu0 0.0
  %2708 = vmatprep.subr.mxu0 0.0
  %2709 = vmatpush1.msra.mxu0 0.0
  %2710 = vmatprep.subr.mxu0 0.0
  %2711 = vmatpush1.msra.mxu0 0.0
  %2712 = vmatprep.subr.mxu0 0.0
  %2713 = vmatpush1.msra.mxu0 0.0
  %2714 = vmatprep.subr.mxu0 0.0
  %2715 = vmatpush1.msra.mxu0 0.0
  %2716 = vmatprep.subr.mxu0 0.0
  %2717 = vmatpush1.msra.mxu0 0.0
  %2718 = vmatprep.subr.mxu0 0.0
  %2719 = vmatpush1.msra.mxu0 0.0
  %2720 = vmatprep.subr.mxu0 0.0
  %2721 = vmatpush1.msra.mxu0 0.0
  %2722 = vmatprep.mubr.f32.mxu0 0.0
  %v2723 = vand.u32 %v2190, 4294901760
  %2724 = vmatmul.mubr.f32.gmra.mrb[0].mxu0 %v2723
  %v2725 = vpop.f32.mrb[0].mxu0
  %v2726 = vadd.f32 %v2647, %v2725
  %v2727 = vpop.f32.mrb[0].mxu0
  %2728 = vdwg.mxu0
  %v2729 = vadd.f32 %v2189, %v2726
  %v2730 = vtanh.pop %v2729
  %2732 = vrot.lane.b32.xlu0 %v2730, 96
  %v2733 = vpop.permute.xlu0 %2732
  %2735 = vst.msk [vmem:[#allocation3 + $0x1] sm:$0x2] %vm1640, %v2733
  %v2736 = vld [vmem:[#allocation2 + $0x8] sm:$0x3]
  %v2737 = vsel %vm535, %v2730, 0
  %2739 = vmatprep.subr.mxu0 0.0
  %v2740 = vand.u32 %v538, 4294901760
  %2741 = vmatpush1.msra.mxu0 %v2740
  %2742 = vmatprep.subr.mxu0 0.0
  %v2743 = vand.u32 %v539, 4294901760
  %2744 = vmatpush1.msra.mxu0 %v2743
  %2745 = vmatprep.subr.mxu0 0.0
  %v2746 = vand.u32 %v540, 4294901760
  %2747 = vmatpush1.msra.mxu0 %v2746
  %2748 = vmatprep.subr.mxu0 0.0
  %v2749 = vand.u32 %v541, 4294901760
  %2750 = vmatpush1.msra.mxu0 %v2749
  %2751 = vmatprep.subr.mxu0 0.0
  %v2752 = vand.u32 %v542, 4294901760
  %2753 = vmatpush1.msra.mxu0 %v2752
  %2754 = vmatprep.subr.mxu0 0.0
  %v2755 = vand.u32 %v543, 4294901760
  %2756 = vmatpush1.msra.mxu0 %v2755
  %2757 = vmatprep.subr.mxu0 0.0
  %v2758 = vand.u32 %v544, 4294901760
  %2759 = vmatpush1.msra.mxu0 %v2758
  %2760 = vmatprep.subr.mxu0 0.0
  %v2761 = vand.u32 %v545, 4294901760
  %2762 = vmatpush1.msra.mxu0 %v2761
  %2763 = vmatprep.subr.mxu0 0.0
  %2764 = vmatpush1.msra.mxu0 0.0
  %2765 = vmatprep.subr.mxu0 0.0
  %2766 = vmatpush1.msra.mxu0 0.0
  %2767 = vmatprep.subr.mxu0 0.0
  %2768 = vmatpush1.msra.mxu0 0.0
  %2769 = vmatprep.subr.mxu0 0.0
  %2770 = vmatpush1.msra.mxu0 0.0
  %2771 = vmatprep.subr.mxu0 0.0
  %2772 = vmatpush1.msra.mxu0 0.0
  %2773 = vmatprep.subr.mxu0 0.0
  %2774 = vmatpush1.msra.mxu0 0.0
  %2775 = vmatprep.subr.mxu0 0.0
  %2776 = vmatpush1.msra.mxu0 0.0
  %2777 = vmatprep.subr.mxu0 0.0
  %2778 = vmatpush1.msra.mxu0 0.0
  %2779 = vmatprep.subr.mxu0 0.0
  %2780 = vmatpush1.msra.mxu0 0.0
  %2781 = vmatprep.subr.mxu0 0.0
  %2782 = vmatpush1.msra.mxu0 0.0
  %2783 = vmatprep.subr.mxu0 0.0
  %2784 = vmatpush1.msra.mxu0 0.0
  %2785 = vmatprep.subr.mxu0 0.0
  %2786 = vmatpush1.msra.mxu0 0.0
  %2787 = vmatprep.subr.mxu0 0.0
  %2788 = vmatpush1.msra.mxu0 0.0
  %2789 = vmatprep.subr.mxu0 0.0
  %2790 = vmatpush1.msra.mxu0 0.0
  %2791 = vmatprep.subr.mxu0 0.0
  %2792 = vmatpush1.msra.mxu0 0.0
  %2793 = vmatprep.subr.mxu0 0.0
  %2794 = vmatpush1.msra.mxu0 0.0
  %2795 = vmatprep.subr.mxu0 0.0
  %2796 = vmatpush1.msra.mxu0 0.0
  %2797 = vmatprep.subr.mxu0 0.0
  %2798 = vmatpush1.msra.mxu0 0.0
  %2799 = vmatprep.subr.mxu0 0.0
  %2800 = vmatpush1.msra.mxu0 0.0
  %2801 = vmatprep.subr.mxu0 0.0
  %2802 = vmatpush1.msra.mxu0 0.0
  %2803 = vmatprep.subr.mxu0 0.0
  %2804 = vmatpush1.msra.mxu0 0.0
  %2805 = vmatprep.subr.mxu0 0.0
  %2806 = vmatpush1.msra.mxu0 0.0
  %2807 = vmatprep.subr.mxu0 0.0
  %2808 = vmatpush1.msra.mxu0 0.0
  %2809 = vmatprep.subr.mxu0 0.0
  %2810 = vmatpush1.msra.mxu0 0.0
  %2811 = vmatprep.mubr.f32.mxu0 0.0
  %v2812 = vand.u32 %v2737, 4294901760
  %v2813 = vsub.f32 %v2737, %v2812
  %v2814 = vand.u32 %v2813, 4294901760
  %v2815 = vsub.f32 %v2813, %v2814
  %v2816 = vand.u32 %v2815, 4294901760
  %2817 = vmatmul.mubr.f32.gmra.mrb[0].mxu0 %v2816
  %v2818 = vpop.f32.mrb[0].mxu0
  %v2819 = vadd.f32 0.0, %v2818
  %v2820 = vpop.f32.mrb[0].mxu0
  %2821 = vdwg.mxu0
  %2822 = vmatprep.subr.mxu0 0.0
  %v2823 = vand.u32 %v538, 4294901760
  %v2824 = vsub.f32 %v538, %v2823
  %v2825 = vand.u32 %v2824, 4294901760
  %v2826 = vsub.f32 %v2824, %v2825
  %v2827 = vand.u32 %v2826, 4294901760
  %2828 = vmatpush1.msra.mxu0 %v2827
  %2829 = vmatprep.subr.mxu0 0.0
  %v2830 = vand.u32 %v539, 4294901760
  %v2831 = vsub.f32 %v539, %v2830
  %v2832 = vand.u32 %v2831, 4294901760
  %v2833 = vsub.f32 %v2831, %v2832
  %v2834 = vand.u32 %v2833, 4294901760
  %2835 = vmatpush1.msra.mxu0 %v2834
  %2836 = vmatprep.subr.mxu0 0.0
  %v2837 = vand.u32 %v540, 4294901760
  %v2838 = vsub.f32 %v540, %v2837
  %v2839 = vand.u32 %v2838, 4294901760
  %v2840 = vsub.f32 %v2838, %v2839
  %v2841 = vand.u32 %v2840, 4294901760
  %2842 = vmatpush1.msra.mxu0 %v2841
  %2843 = vmatprep.subr.mxu0 0.0
  %v2844 = vand.u32 %v541, 4294901760
  %v2845 = vsub.f32 %v541, %v2844
  %v2846 = vand.u32 %v2845, 4294901760
  %v2847 = vsub.f32 %v2845, %v2846
  %v2848 = vand.u32 %v2847, 4294901760
  %2849 = vmatpush1.msra.mxu0 %v2848
  %2850 = vmatprep.subr.mxu0 0.0
  %v2851 = vand.u32 %v542, 4294901760
  %v2852 = vsub.f32 %v542, %v2851
  %v2853 = vand.u32 %v2852, 4294901760
  %v2854 = vsub.f32 %v2852, %v2853
  %v2855 = vand.u32 %v2854, 4294901760
  %2856 = vmatpush1.msra.mxu0 %v2855
  %2857 = vmatprep.subr.mxu0 0.0
  %v2858 = vand.u32 %v543, 4294901760
  %v2859 = vsub.f32 %v543, %v2858
  %v2860 = vand.u32 %v2859, 4294901760
  %v2861 = vsub.f32 %v2859, %v2860
  %v2862 = vand.u32 %v2861, 4294901760
  %2863 = vmatpush1.msra.mxu0 %v2862
  %2864 = vmatprep.subr.mxu0 0.0
  %v2865 = vand.u32 %v544, 4294901760
  %v2866 = vsub.f32 %v544, %v2865
  %v2867 = vand.u32 %v2866, 4294901760
  %v2868 = vsub.f32 %v2866, %v2867
  %v2869 = vand.u32 %v2868, 4294901760
  %2870 = vmatpush1.msra.mxu0 %v2869
  %2871 = vmatprep.subr.mxu0 0.0
  %v2872 = vand.u32 %v545, 4294901760
  %v2873 = vsub.f32 %v545, %v2872
  %v2874 = vand.u32 %v2873, 4294901760
  %v2875 = vsub.f32 %v2873, %v2874
  %v2876 = vand.u32 %v2875, 4294901760
  %2877 = vmatpush1.msra.mxu0 %v2876
  %2878 = vmatprep.subr.mxu0 0.0
  %2879 = vmatpush1.msra.mxu0 0.0
  %2880 = vmatprep.subr.mxu0 0.0
  %2881 = vmatpush1.msra.mxu0 0.0
  %2882 = vmatprep.subr.mxu0 0.0
  %2883 = vmatpush1.msra.mxu0 0.0
  %2884 = vmatprep.subr.mxu0 0.0
  %2885 = vmatpush1.msra.mxu0 0.0
  %2886 = vmatprep.subr.mxu0 0.0
  %2887 = vmatpush1.msra.mxu0 0.0
  %2888 = vmatprep.subr.mxu0 0.0
  %2889 = vmatpush1.msra.mxu0 0.0
  %2890 = vmatprep.subr.mxu0 0.0
  %2891 = vmatpush1.msra.mxu0 0.0
  %2892 = vmatprep.subr.mxu0 0.0
  %2893 = vmatpush1.msra.mxu0 0.0
  %2894 = vmatprep.subr.mxu0 0.0
  %2895 = vmatpush1.msra.mxu0 0.0
  %2896 = vmatprep.subr.mxu0 0.0
  %2897 = vmatpush1.msra.mxu0 0.0
  %2898 = vmatprep.subr.mxu0 0.0
  %2899 = vmatpush1.msra.mxu0 0.0
  %2900 = vmatprep.subr.mxu0 0.0
  %2901 = vmatpush1.msra.mxu0 0.0
  %2902 = vmatprep.subr.mxu0 0.0
  %2903 = vmatpush1.msra.mxu0 0.0
  %2904 = vmatprep.subr.mxu0 0.0
  %2905 = vmatpush1.msra.mxu0 0.0
  %2906 = vmatprep.subr.mxu0 0.0
  %2907 = vmatpush1.msra.mxu0 0.0
  %2908 = vmatprep.subr.mxu0 0.0
  %2909 = vmatpush1.msra.mxu0 0.0
  %2910 = vmatprep.subr.mxu0 0.0
  %2911 = vmatpush1.msra.mxu0 0.0
  %2912 = vmatprep.subr.mxu0 0.0
  %2913 = vmatpush1.msra.mxu0 0.0
  %2914 = vmatprep.subr.mxu0 0.0
  %2915 = vmatpush1.msra.mxu0 0.0
  %2916 = vmatprep.subr.mxu0 0.0
  %2917 = vmatpush1.msra.mxu0 0.0
  %2918 = vmatprep.subr.mxu0 0.0
  %2919 = vmatpush1.msra.mxu0 0.0
  %2920 = vmatprep.subr.mxu0 0.0
  %2921 = vmatpush1.msra.mxu0 0.0
  %2922 = vmatprep.subr.mxu0 0.0
  %2923 = vmatpush1.msra.mxu0 0.0
  %2924 = vmatprep.subr.mxu0 0.0
  %2925 = vmatpush1.msra.mxu0 0.0
  %2926 = vmatprep.mubr.f32.mxu0 0.0
  %v2927 = vand.u32 %v2737, 4294901760
  %2928 = vmatmul.mubr.f32.gmra.mrb[0].mxu0 %v2927
  %v2929 = vpop.f32.mrb[0].mxu0
  %v2930 = vadd.f32 %v2819, %v2929
  %v2931 = vpop.f32.mrb[0].mxu0
  %2932 = vdwg.mxu0
  %2933 = vmatprep.subr.mxu0 0.0
  %v2934 = vand.u32 %v538, 4294901760
  %v2935 = vsub.f32 %v538, %v2934
  %2936 = vmatpush1.msra.mxu0 %v2935
  %2937 = vmatprep.subr.mxu0 0.0
  %v2938 = vand.u32 %v539, 4294901760
  %v2939 = vsub.f32 %v539, %v2938
  %2940 = vmatpush1.msra.mxu0 %v2939
  %2941 = vmatprep.subr.mxu0 0.0
  %v2942 = vand.u32 %v540, 4294901760
  %v2943 = vsub.f32 %v540, %v2942
  %2944 = vmatpush1.msra.mxu0 %v2943
  %2945 = vmatprep.subr.mxu0 0.0
  %v2946 = vand.u32 %v541, 4294901760
  %v2947 = vsub.f32 %v541, %v2946
  %2948 = vmatpush1.msra.mxu0 %v2947
  %2949 = vmatprep.subr.mxu0 0.0
  %v2950 = vand.u32 %v542, 4294901760
  %v2951 = vsub.f32 %v542, %v2950
  %2952 = vmatpush1.msra.mxu0 %v2951
  %2953 = vmatprep.subr.mxu0 0.0
  %v2954 = vand.u32 %v543, 4294901760
  %v2955 = vsub.f32 %v543, %v2954
  %2956 = vmatpush1.msra.mxu0 %v2955
  %2957 = vmatprep.subr.mxu0 0.0
  %v2958 = vand.u32 %v544, 4294901760
  %v2959 = vsub.f32 %v544, %v2958
  %2960 = vmatpush1.msra.mxu0 %v2959
  %2961 = vmatprep.subr.mxu0 0.0
  %v2962 = vand.u32 %v545, 4294901760
  %v2963 = vsub.f32 %v545, %v2962
  %2964 = vmatpush1.msra.mxu0 %v2963
  %2965 = vmatprep.subr.mxu0 0.0
  %2966 = vmatpush1.msra.mxu0 0.0
  %2967 = vmatprep.subr.mxu0 0.0
  %2968 = vmatpush1.msra.mxu0 0.0
  %2969 = vmatprep.subr.mxu0 0.0
  %2970 = vmatpush1.msra.mxu0 0.0
  %2971 = vmatprep.subr.mxu0 0.0
  %2972 = vmatpush1.msra.mxu0 0.0
  %2973 = vmatprep.subr.mxu0 0.0
  %2974 = vmatpush1.msra.mxu0 0.0
  %2975 = vmatprep.subr.mxu0 0.0
  %2976 = vmatpush1.msra.mxu0 0.0
  %2977 = vmatprep.subr.mxu0 0.0
  %2978 = vmatpush1.msra.mxu0 0.0
  %2979 = vmatprep.subr.mxu0 0.0
  %2980 = vmatpush1.msra.mxu0 0.0
  %2981 = vmatprep.subr.mxu0 0.0
  %2982 = vmatpush1.msra.mxu0 0.0
  %2983 = vmatprep.subr.mxu0 0.0
  %2984 = vmatpush1.msra.mxu0 0.0
  %2985 = vmatprep.subr.mxu0 0.0
  %2986 = vmatpush1.msra.mxu0 0.0
  %2987 = vmatprep.subr.mxu0 0.0
  %2988 = vmatpush1.msra.mxu0 0.0
  %2989 = vmatprep.subr.mxu0 0.0
  %2990 = vmatpush1.msra.mxu0 0.0
  %2991 = vmatprep.subr.mxu0 0.0
  %2992 = vmatpush1.msra.mxu0 0.0
  %2993 = vmatprep.subr.mxu0 0.0
  %2994 = vmatpush1.msra.mxu0 0.0
  %2995 = vmatprep.subr.mxu0 0.0
  %2996 = vmatpush1.msra.mxu0 0.0
  %2997 = vmatprep.subr.mxu0 0.0
  %2998 = vmatpush1.msra.mxu0 0.0
  %2999 = vmatprep.subr.mxu0 0.0
  %3000 = vmatpush1.msra.mxu0 0.0
  %3001 = vmatprep.subr.mxu0 0.0
  %3002 = vmatpush1.msra.mxu0 0.0
  %3003 = vmatprep.subr.mxu0 0.0
  %3004 = vmatpush1.msra.mxu0 0.0
  %3005 = vmatprep.subr.mxu0 0.0
  %3006 = vmatpush1.msra.mxu0 0.0
  %3007 = vmatprep.subr.mxu0 0.0
  %3008 = vmatpush1.msra.mxu0 0.0
  %3009 = vmatprep.subr.mxu0 0.0
  %3010 = vmatpush1.msra.mxu0 0.0
  %3011 = vmatprep.subr.mxu0 0.0
  %3012 = vmatpush1.msra.mxu0 0.0
  %3013 = vmatprep.mubr.f32.mxu0 0.0
  %v3014 = vand.u32 %v2737, 4294901760
  %v3015 = vsub.f32 %v2737, %v3014
  %3016 = vmatmul.mubr.f32.gmra.mrb[0].mxu0 %v3015
  %v3017 = vpop.f32.mrb[0].mxu0
  %v3018 = vadd.f32 %v2930, %v3017
  %v3019 = vpop.f32.mrb[0].mxu0
  %3020 = vdwg.mxu0
  %3021 = vmatprep.subr.mxu0 0.0
  %v3022 = vand.u32 %v538, 4294901760
  %3023 = vmatpush1.msra.mxu0 %v3022
  %3024 = vmatprep.subr.mxu0 0.0
  %v3025 = vand.u32 %v539, 4294901760
  %3026 = vmatpush1.msra.mxu0 %v3025
  %3027 = vmatprep.subr.mxu0 0.0
  %v3028 = vand.u32 %v540, 4294901760
  %3029 = vmatpush1.msra.mxu0 %v3028
  %3030 = vmatprep.subr.mxu0 0.0
  %v3031 = vand.u32 %v541, 4294901760
  %3032 = vmatpush1.msra.mxu0 %v3031
  %3033 = vmatprep.subr.mxu0 0.0
  %v3034 = vand.u32 %v542, 4294901760
  %3035 = vmatpush1.msra.mxu0 %v3034
  %3036 = vmatprep.subr.mxu0 0.0
  %v3037 = vand.u32 %v543, 4294901760
  %3038 = vmatpush1.msra.mxu0 %v3037
  %3039 = vmatprep.subr.mxu0 0.0
  %v3040 = vand.u32 %v544, 4294901760
  %3041 = vmatpush1.msra.mxu0 %v3040
  %3042 = vmatprep.subr.mxu0 0.0
  %v3043 = vand.u32 %v545, 4294901760
  %3044 = vmatpush1.msra.mxu0 %v3043
  %3045 = vmatprep.subr.mxu0 0.0
  %3046 = vmatpush1.msra.mxu0 0.0
  %3047 = vmatprep.subr.mxu0 0.0
  %3048 = vmatpush1.msra.mxu0 0.0
  %3049 = vmatprep.subr.mxu0 0.0
  %3050 = vmatpush1.msra.mxu0 0.0
  %3051 = vmatprep.subr.mxu0 0.0
  %3052 = vmatpush1.msra.mxu0 0.0
  %3053 = vmatprep.subr.mxu0 0.0
  %3054 = vmatpush1.msra.mxu0 0.0
  %3055 = vmatprep.subr.mxu0 0.0
  %3056 = vmatpush1.msra.mxu0 0.0
  %3057 = vmatprep.subr.mxu0 0.0
  %3058 = vmatpush1.msra.mxu0 0.0
  %3059 = vmatprep.subr.mxu0 0.0
  %3060 = vmatpush1.msra.mxu0 0.0
  %3061 = vmatprep.subr.mxu0 0.0
  %3062 = vmatpush1.msra.mxu0 0.0
  %3063 = vmatprep.subr.mxu0 0.0
  %3064 = vmatpush1.msra.mxu0 0.0
  %3065 = vmatprep.subr.mxu0 0.0
  %3066 = vmatpush1.msra.mxu0 0.0
  %3067 = vmatprep.subr.mxu0 0.0
  %3068 = vmatpush1.msra.mxu0 0.0
  %3069 = vmatprep.subr.mxu0 0.0
  %3070 = vmatpush1.msra.mxu0 0.0
  %3071 = vmatprep.subr.mxu0 0.0
  %3072 = vmatpush1.msra.mxu0 0.0
  %3073 = vmatprep.subr.mxu0 0.0
  %3074 = vmatpush1.msra.mxu0 0.0
  %3075 = vmatprep.subr.mxu0 0.0
  %3076 = vmatpush1.msra.mxu0 0.0
  %3077 = vmatprep.subr.mxu0 0.0
  %3078 = vmatpush1.msra.mxu0 0.0
  %3079 = vmatprep.subr.mxu0 0.0
  %3080 = vmatpush1.msra.mxu0 0.0
  %3081 = vmatprep.subr.mxu0 0.0
  %3082 = vmatpush1.msra.mxu0 0.0
  %3083 = vmatprep.subr.mxu0 0.0
  %3084 = vmatpush1.msra.mxu0 0.0
  %3085 = vmatprep.subr.mxu0 0.0
  %3086 = vmatpush1.msra.mxu0 0.0
  %3087 = vmatprep.subr.mxu0 0.0
  %3088 = vmatpush1.msra.mxu0 0.0
  %3089 = vmatprep.subr.mxu0 0.0
  %3090 = vmatpush1.msra.mxu0 0.0
  %3091 = vmatprep.subr.mxu0 0.0
  %3092 = vmatpush1.msra.mxu0 0.0
  %3093 = vmatprep.mubr.f32.mxu0 0.0
  %v3094 = vand.u32 %v2737, 4294901760
  %v3095 = vsub.f32 %v2737, %v3094
  %v3096 = vand.u32 %v3095, 4294901760
  %3097 = vmatmul.mubr.f32.gmra.mrb[0].mxu0 %v3096
  %v3098 = vpop.f32.mrb[0].mxu0
  %v3099 = vadd.f32 %v3018, %v3098
  %v3100 = vpop.f32.mrb[0].mxu0
  %3101 = vdwg.mxu0
  %3102 = vmatprep.subr.mxu0 0.0
  %v3103 = vand.u32 %v538, 4294901760
  %v3104 = vsub.f32 %v538, %v3103
  %v3105 = vand.u32 %v3104, 4294901760
  %3106 = vmatpush1.msra.mxu0 %v3105
  %3107 = vmatprep.subr.mxu0 0.0
  %v3108 = vand.u32 %v539, 4294901760
  %v3109 = vsub.f32 %v539, %v3108
  %v3110 = vand.u32 %v3109, 4294901760
  %3111 = vmatpush1.msra.mxu0 %v3110
  %3112 = vmatprep.subr.mxu0 0.0
  %v3113 = vand.u32 %v540, 4294901760
  %v3114 = vsub.f32 %v540, %v3113
  %v3115 = vand.u32 %v3114, 4294901760
  %3116 = vmatpush1.msra.mxu0 %v3115
  %3117 = vmatprep.subr.mxu0 0.0
  %v3118 = vand.u32 %v541, 4294901760
  %v3119 = vsub.f32 %v541, %v3118
  %v3120 = vand.u32 %v3119, 4294901760
  %3121 = vmatpush1.msra.mxu0 %v3120
  %3122 = vmatprep.subr.mxu0 0.0
  %v3123 = vand.u32 %v542, 4294901760
  %v3124 = vsub.f32 %v542, %v3123
  %v3125 = vand.u32 %v3124, 4294901760
  %3126 = vmatpush1.msra.mxu0 %v3125
  %3127 = vmatprep.subr.mxu0 0.0
  %v3128 = vand.u32 %v543, 4294901760
  %v3129 = vsub.f32 %v543, %v3128
  %v3130 = vand.u32 %v3129, 4294901760
  %3131 = vmatpush1.msra.mxu0 %v3130
  %3132 = vmatprep.subr.mxu0 0.0
  %v3133 = vand.u32 %v544, 4294901760
  %v3134 = vsub.f32 %v544, %v3133
  %v3135 = vand.u32 %v3134, 4294901760
  %3136 = vmatpush1.msra.mxu0 %v3135
  %3137 = vmatprep.subr.mxu0 0.0
  %v3138 = vand.u32 %v545, 4294901760
  %v3139 = vsub.f32 %v545, %v3138
  %v3140 = vand.u32 %v3139, 4294901760
  %3141 = vmatpush1.msra.mxu0 %v3140
  %3142 = vmatprep.subr.mxu0 0.0
  %3143 = vmatpush1.msra.mxu0 0.0
  %3144 = vmatprep.subr.mxu0 0.0
  %3145 = vmatpush1.msra.mxu0 0.0
  %3146 = vmatprep.subr.mxu0 0.0
  %3147 = vmatpush1.msra.mxu0 0.0
  %3148 = vmatprep.subr.mxu0 0.0
  %3149 = vmatpush1.msra.mxu0 0.0
  %3150 = vmatprep.subr.mxu0 0.0
  %3151 = vmatpush1.msra.mxu0 0.0
  %3152 = vmatprep.subr.mxu0 0.0
  %3153 = vmatpush1.msra.mxu0 0.0
  %3154 = vmatprep.subr.mxu0 0.0
  %3155 = vmatpush1.msra.mxu0 0.0
  %3156 = vmatprep.subr.mxu0 0.0
  %3157 = vmatpush1.msra.mxu0 0.0
  %3158 = vmatprep.subr.mxu0 0.0
  %3159 = vmatpush1.msra.mxu0 0.0
  %3160 = vmatprep.subr.mxu0 0.0
  %3161 = vmatpush1.msra.mxu0 0.0
  %3162 = vmatprep.subr.mxu0 0.0
  %3163 = vmatpush1.msra.mxu0 0.0
  %3164 = vmatprep.subr.mxu0 0.0
  %3165 = vmatpush1.msra.mxu0 0.0
  %3166 = vmatprep.subr.mxu0 0.0
  %3167 = vmatpush1.msra.mxu0 0.0
  %3168 = vmatprep.subr.mxu0 0.0
  %3169 = vmatpush1.msra.mxu0 0.0
  %3170 = vmatprep.subr.mxu0 0.0
  %3171 = vmatpush1.msra.mxu0 0.0
  %3172 = vmatprep.subr.mxu0 0.0
  %3173 = vmatpush1.msra.mxu0 0.0
  %3174 = vmatprep.subr.mxu0 0.0
  %3175 = vmatpush1.msra.mxu0 0.0
  %3176 = vmatprep.subr.mxu0 0.0
  %3177 = vmatpush1.msra.mxu0 0.0
  %3178 = vmatprep.subr.mxu0 0.0
  %3179 = vmatpush1.msra.mxu0 0.0
  %3180 = vmatprep.subr.mxu0 0.0
  %3181 = vmatpush1.msra.mxu0 0.0
  %3182 = vmatprep.subr.mxu0 0.0
  %3183 = vmatpush1.msra.mxu0 0.0
  %3184 = vmatprep.subr.mxu0 0.0
  %3185 = vmatpush1.msra.mxu0 0.0
  %3186 = vmatprep.subr.mxu0 0.0
  %3187 = vmatpush1.msra.mxu0 0.0
  %3188 = vmatprep.subr.mxu0 0.0
  %3189 = vmatpush1.msra.mxu0 0.0
  %3190 = vmatprep.mubr.f32.mxu0 0.0
  %v3191 = vand.u32 %v2737, 4294901760
  %3192 = vmatmul.mubr.f32.gmra.mrb[0].mxu0 %v3191
  %v3193 = vpop.f32.mrb[0].mxu0
  %v3194 = vadd.f32 %v3099, %v3193
  %v3195 = vpop.f32.mrb[0].mxu0
  %3196 = vdwg.mxu0
  %3197 = vmatprep.subr.mxu0 0.0
  %v3198 = vand.u32 %v538, 4294901760
  %3199 = vmatpush1.msra.mxu0 %v3198
  %3200 = vmatprep.subr.mxu0 0.0
  %v3201 = vand.u32 %v539, 4294901760
  %3202 = vmatpush1.msra.mxu0 %v3201
  %3203 = vmatprep.subr.mxu0 0.0
  %v3204 = vand.u32 %v540, 4294901760
  %3205 = vmatpush1.msra.mxu0 %v3204
  %3206 = vmatprep.subr.mxu0 0.0
  %v3207 = vand.u32 %v541, 4294901760
  %3208 = vmatpush1.msra.mxu0 %v3207
  %3209 = vmatprep.subr.mxu0 0.0
  %v3210 = vand.u32 %v542, 4294901760
  %3211 = vmatpush1.msra.mxu0 %v3210
  %3212 = vmatprep.subr.mxu0 0.0
  %v3213 = vand.u32 %v543, 4294901760
  %3214 = vmatpush1.msra.mxu0 %v3213
  %3215 = vmatprep.subr.mxu0 0.0
  %v3216 = vand.u32 %v544, 4294901760
  %3217 = vmatpush1.msra.mxu0 %v3216
  %3218 = vmatprep.subr.mxu0 0.0
  %v3219 = vand.u32 %v545, 4294901760
  %3220 = vmatpush1.msra.mxu0 %v3219
  %3221 = vmatprep.subr.mxu0 0.0
  %3222 = vmatpush1.msra.mxu0 0.0
  %3223 = vmatprep.subr.mxu0 0.0
  %3224 = vmatpush1.msra.mxu0 0.0
  %3225 = vmatprep.subr.mxu0 0.0
  %3226 = vmatpush1.msra.mxu0 0.0
  %3227 = vmatprep.subr.mxu0 0.0
  %3228 = vmatpush1.msra.mxu0 0.0
  %3229 = vmatprep.subr.mxu0 0.0
  %3230 = vmatpush1.msra.mxu0 0.0
  %3231 = vmatprep.subr.mxu0 0.0
  %3232 = vmatpush1.msra.mxu0 0.0
  %3233 = vmatprep.subr.mxu0 0.0
  %3234 = vmatpush1.msra.mxu0 0.0
  %3235 = vmatprep.subr.mxu0 0.0
  %3236 = vmatpush1.msra.mxu0 0.0
  %3237 = vmatprep.subr.mxu0 0.0
  %3238 = vmatpush1.msra.mxu0 0.0
  %3239 = vmatprep.subr.mxu0 0.0
  %3240 = vmatpush1.msra.mxu0 0.0
  %3241 = vmatprep.subr.mxu0 0.0
  %3242 = vmatpush1.msra.mxu0 0.0
  %3243 = vmatprep.subr.mxu0 0.0
  %3244 = vmatpush1.msra.mxu0 0.0
  %3245 = vmatprep.subr.mxu0 0.0
  %3246 = vmatpush1.msra.mxu0 0.0
  %3247 = vmatprep.subr.mxu0 0.0
  %3248 = vmatpush1.msra.mxu0 0.0
  %3249 = vmatprep.subr.mxu0 0.0
  %3250 = vmatpush1.msra.mxu0 0.0
  %3251 = vmatprep.subr.mxu0 0.0
  %3252 = vmatpush1.msra.mxu0 0.0
  %3253 = vmatprep.subr.mxu0 0.0
  %3254 = vmatpush1.msra.mxu0 0.0
  %3255 = vmatprep.subr.mxu0 0.0
  %3256 = vmatpush1.msra.mxu0 0.0
  %3257 = vmatprep.subr.mxu0 0.0
  %3258 = vmatpush1.msra.mxu0 0.0
  %3259 = vmatprep.subr.mxu0 0.0
  %3260 = vmatpush1.msra.mxu0 0.0
  %3261 = vmatprep.subr.mxu0 0.0
  %3262 = vmatpush1.msra.mxu0 0.0
  %3263 = vmatprep.subr.mxu0 0.0
  %3264 = vmatpush1.msra.mxu0 0.0
  %3265 = vmatprep.subr.mxu0 0.0
  %3266 = vmatpush1.msra.mxu0 0.0
  %3267 = vmatprep.subr.mxu0 0.0
  %3268 = vmatpush1.msra.mxu0 0.0
  %3269 = vmatprep.mubr.f32.mxu0 0.0
  %v3270 = vand.u32 %v2737, 4294901760
  %3271 = vmatmul.mubr.f32.gmra.mrb[0].mxu0 %v3270
  %v3272 = vpop.f32.mrb[0].mxu0
  %v3273 = vadd.f32 %v3194, %v3272
  %v3274 = vpop.f32.mrb[0].mxu0
  %3275 = vdwg.mxu0
  %v3276 = vadd.f32 %v2736, %v3273
  %v3277 = vtanh.pop %v3276
  %3279 = vrot.lane.b32.xlu0 %v3277, 96
  %v3280 = vpop.permute.xlu0 %3279
  %3282 = vst.msk [vmem:[#allocation3 + $0x2] sm:$0x2] %vm1640, %v3280
  %v3283 = vld [vmem:[#allocation2 + $0xa] sm:$0x3]
  %v3284 = vsel %vm535, %v3277, 0
  %3286 = vmatprep.subr.mxu0 0.0
  %v3287 = vand.u32 %v538, 4294901760
  %3288 = vmatpush1.msra.mxu0 %v3287
  %3289 = vmatprep.subr.mxu0 0.0
  %v3290 = vand.u32 %v539, 4294901760
  %3291 = vmatpush1.msra.mxu0 %v3290
  %3292 = vmatprep.subr.mxu0 0.0
  %v3293 = vand.u32 %v540, 4294901760
  %3294 = vmatpush1.msra.mxu0 %v3293
  %3295 = vmatprep.subr.mxu0 0.0
  %v3296 = vand.u32 %v541, 4294901760
  %3297 = vmatpush1.msra.mxu0 %v3296
  %3298 = vmatprep.subr.mxu0 0.0
  %v3299 = vand.u32 %v542, 4294901760
  %3300 = vmatpush1.msra.mxu0 %v3299
  %3301 = vmatprep.subr.mxu0 0.0
  %v3302 = vand.u32 %v543, 4294901760
  %3303 = vmatpush1.msra.mxu0 %v3302
  %3304 = vmatprep.subr.mxu0 0.0
  %v3305 = vand.u32 %v544, 4294901760
  %3306 = vmatpush1.msra.mxu0 %v3305
  %3307 = vmatprep.subr.mxu0 0.0
  %v3308 = vand.u32 %v545, 4294901760
  %3309 = vmatpush1.msra.mxu0 %v3308
  %3310 = vmatprep.subr.mxu0 0.0
  %3311 = vmatpush1.msra.mxu0 0.0
  %3312 = vmatprep.subr.mxu0 0.0
  %3313 = vmatpush1.msra.mxu0 0.0
  %3314 = vmatprep.subr.mxu0 0.0
  %3315 = vmatpush1.msra.mxu0 0.0
  %3316 = vmatprep.subr.mxu0 0.0
  %3317 = vmatpush1.msra.mxu0 0.0
  %3318 = vmatprep.subr.mxu0 0.0
  %3319 = vmatpush1.msra.mxu0 0.0
  %3320 = vmatprep.subr.mxu0 0.0
  %3321 = vmatpush1.msra.mxu0 0.0
  %3322 = vmatprep.subr.mxu0 0.0
  %3323 = vmatpush1.msra.mxu0 0.0
  %3324 = vmatprep.subr.mxu0 0.0
  %3325 = vmatpush1.msra.mxu0 0.0
  %3326 = vmatprep.subr.mxu0 0.0
  %3327 = vmatpush1.msra.mxu0 0.0
  %3328 = vmatprep.subr.mxu0 0.0
  %3329 = vmatpush1.msra.mxu0 0.0
  %3330 = vmatprep.subr.mxu0 0.0
  %3331 = vmatpush1.msra.mxu0 0.0
  %3332 = vmatprep.subr.mxu0 0.0
  %3333 = vmatpush1.msra.mxu0 0.0
  %3334 = vmatprep.subr.mxu0 0.0
  %3335 = vmatpush1.msra.mxu0 0.0
  %3336 = vmatprep.subr.mxu0 0.0
  %3337 = vmatpush1.msra.mxu0 0.0
  %3338 = vmatprep.subr.mxu0 0.0
  %3339 = vmatpush1.msra.mxu0 0.0
  %3340 = vmatprep.subr.mxu0 0.0
  %3341 = vmatpush1.msra.mxu0 0.0
  %3342 = vmatprep.subr.mxu0 0.0
  %3343 = vmatpush1.msra.mxu0 0.0
  %3344 = vmatprep.subr.mxu0 0.0
  %3345 = vmatpush1.msra.mxu0 0.0
  %3346 = vmatprep.subr.mxu0 0.0
  %3347 = vmatpush1.msra.mxu0 0.0
  %3348 = vmatprep.subr.mxu0 0.0
  %3349 = vmatpush1.msra.mxu0 0.0
  %3350 = vmatprep.subr.mxu0 0.0
  %3351 = vmatpush1.msra.mxu0 0.0
  %3352 = vmatprep.subr.mxu0 0.0
  %3353 = vmatpush1.msra.mxu0 0.0
  %3354 = vmatprep.subr.mxu0 0.0
  %3355 = vmatpush1.msra.mxu0 0.0
  %3356 = vmatprep.subr.mxu0 0.0
  %3357 = vmatpush1.msra.mxu0 0.0
  %3358 = vmatprep.mubr.f32.mxu0 0.0
  %v3359 = vand.u32 %v3284, 4294901760
  %v3360 = vsub.f32 %v3284, %v3359
  %v3361 = vand.u32 %v3360, 4294901760
  %v3362 = vsub.f32 %v3360, %v3361
  %v3363 = vand.u32 %v3362, 4294901760
  %3364 = vmatmul.mubr.f32.gmra.mrb[0].mxu0 %v3363
  %v3365 = vpop.f32.mrb[0].mxu0
  %v3366 = vadd.f32 0.0, %v3365
  %v3367 = vpop.f32.mrb[0].mxu0
  %3368 = vdwg.mxu0
  %3369 = vmatprep.subr.mxu0 0.0
  %v3370 = vand.u32 %v538, 4294901760
  %v3371 = vsub.f32 %v538, %v3370
  %v3372 = vand.u32 %v3371, 4294901760
  %v3373 = vsub.f32 %v3371, %v3372
  %v3374 = vand.u32 %v3373, 4294901760
  %3375 = vmatpush1.msra.mxu0 %v3374
  %3376 = vmatprep.subr.mxu0 0.0
  %v3377 = vand.u32 %v539, 4294901760
  %v3378 = vsub.f32 %v539, %v3377
  %v3379 = vand.u32 %v3378, 4294901760
  %v3380 = vsub.f32 %v3378, %v3379
  %v3381 = vand.u32 %v3380, 4294901760
  %3382 = vmatpush1.msra.mxu0 %v3381
  %3383 = vmatprep.subr.mxu0 0.0
  %v3384 = vand.u32 %v540, 4294901760
  %v3385 = vsub.f32 %v540, %v3384
  %v3386 = vand.u32 %v3385, 4294901760
  %v3387 = vsub.f32 %v3385, %v3386
  %v3388 = vand.u32 %v3387, 4294901760
  %3389 = vmatpush1.msra.mxu0 %v3388
  %3390 = vmatprep.subr.mxu0 0.0
  %v3391 = vand.u32 %v541, 4294901760
  %v3392 = vsub.f32 %v541, %v3391
  %v3393 = vand.u32 %v3392, 4294901760
  %v3394 = vsub.f32 %v3392, %v3393
  %v3395 = vand.u32 %v3394, 4294901760
  %3396 = vmatpush1.msra.mxu0 %v3395
  %3397 = vmatprep.subr.mxu0 0.0
  %v3398 = vand.u32 %v542, 4294901760
  %v3399 = vsub.f32 %v542, %v3398
  %v3400 = vand.u32 %v3399, 4294901760
  %v3401 = vsub.f32 %v3399, %v3400
  %v3402 = vand.u32 %v3401, 4294901760
  %3403 = vmatpush1.msra.mxu0 %v3402
  %3404 = vmatprep.subr.mxu0 0.0
  %v3405 = vand.u32 %v543, 4294901760
  %v3406 = vsub.f32 %v543, %v3405
  %v3407 = vand.u32 %v3406, 4294901760
  %v3408 = vsub.f32 %v3406, %v3407
  %v3409 = vand.u32 %v3408, 4294901760
  %3410 = vmatpush1.msra.mxu0 %v3409
  %3411 = vmatprep.subr.mxu0 0.0
  %v3412 = vand.u32 %v544, 4294901760
  %v3413 = vsub.f32 %v544, %v3412
  %v3414 = vand.u32 %v3413, 4294901760
  %v3415 = vsub.f32 %v3413, %v3414
  %v3416 = vand.u32 %v3415, 4294901760
  %3417 = vmatpush1.msra.mxu0 %v3416
  %3418 = vmatprep.subr.mxu0 0.0
  %v3419 = vand.u32 %v545, 4294901760
  %v3420 = vsub.f32 %v545, %v3419
  %v3421 = vand.u32 %v3420, 4294901760
  %v3422 = vsub.f32 %v3420, %v3421
  %v3423 = vand.u32 %v3422, 4294901760
  %3424 = vmatpush1.msra.mxu0 %v3423
  %3425 = vmatprep.subr.mxu0 0.0
  %3426 = vmatpush1.msra.mxu0 0.0
  %3427 = vmatprep.subr.mxu0 0.0
  %3428 = vmatpush1.msra.mxu0 0.0
  %3429 = vmatprep.subr.mxu0 0.0
  %3430 = vmatpush1.msra.mxu0 0.0
  %3431 = vmatprep.subr.mxu0 0.0
  %3432 = vmatpush1.msra.mxu0 0.0
  %3433 = vmatprep.subr.mxu0 0.0
  %3434 = vmatpush1.msra.mxu0 0.0
  %3435 = vmatprep.subr.mxu0 0.0
  %3436 = vmatpush1.msra.mxu0 0.0
  %3437 = vmatprep.subr.mxu0 0.0
  %3438 = vmatpush1.msra.mxu0 0.0
  %3439 = vmatprep.subr.mxu0 0.0
  %3440 = vmatpush1.msra.mxu0 0.0
  %3441 = vmatprep.subr.mxu0 0.0
  %3442 = vmatpush1.msra.mxu0 0.0
  %3443 = vmatprep.subr.mxu0 0.0
  %3444 = vmatpush1.msra.mxu0 0.0
  %3445 = vmatprep.subr.mxu0 0.0
  %3446 = vmatpush1.msra.mxu0 0.0
  %3447 = vmatprep.subr.mxu0 0.0
  %3448 = vmatpush1.msra.mxu0 0.0
  %3449 = vmatprep.subr.mxu0 0.0
  %3450 = vmatpush1.msra.mxu0 0.0
  %3451 = vmatprep.subr.mxu0 0.0
  %3452 = vmatpush1.msra.mxu0 0.0
  %3453 = vmatprep.subr.mxu0 0.0
  %3454 = vmatpush1.msra.mxu0 0.0
  %3455 = vmatprep.subr.mxu0 0.0
  %3456 = vmatpush1.msra.mxu0 0.0
  %3457 = vmatprep.subr.mxu0 0.0
  %3458 = vmatpush1.msra.mxu0 0.0
  %3459 = vmatprep.subr.mxu0 0.0
  %3460 = vmatpush1.msra.mxu0 0.0
  %3461 = vmatprep.subr.mxu0 0.0
  %3462 = vmatpush1.msra.mxu0 0.0
  %3463 = vmatprep.subr.mxu0 0.0
  %3464 = vmatpush1.msra.mxu0 0.0
  %3465 = vmatprep.subr.mxu0 0.0
  %3466 = vmatpush1.msra.mxu0 0.0
  %3467 = vmatprep.subr.mxu0 0.0
  %3468 = vmatpush1.msra.mxu0 0.0
  %3469 = vmatprep.subr.mxu0 0.0
  %3470 = vmatpush1.msra.mxu0 0.0
  %3471 = vmatprep.subr.mxu0 0.0
  %3472 = vmatpush1.msra.mxu0 0.0
  %3473 = vmatprep.mubr.f32.mxu0 0.0
  %v3474 = vand.u32 %v3284, 4294901760
  %3475 = vmatmul.mubr.f32.gmra.mrb[0].mxu0 %v3474
  %v3476 = vpop.f32.mrb[0].mxu0
  %v3477 = vadd.f32 %v3366, %v3476
  %v3478 = vpop.f32.mrb[0].mxu0
  %3479 = vdwg.mxu0
  %3480 = vmatprep.subr.mxu0 0.0
  %v3481 = vand.u32 %v538, 4294901760
  %v3482 = vsub.f32 %v538, %v3481
  %3483 = vmatpush1.msra.mxu0 %v3482
  %3484 = vmatprep.subr.mxu0 0.0
  %v3485 = vand.u32 %v539, 4294901760
  %v3486 = vsub.f32 %v539, %v3485
  %3487 = vmatpush1.msra.mxu0 %v3486
  %3488 = vmatprep.subr.mxu0 0.0
  %v3489 = vand.u32 %v540, 4294901760
  %v3490 = vsub.f32 %v540, %v3489
  %3491 = vmatpush1.msra.mxu0 %v3490
  %3492 = vmatprep.subr.mxu0 0.0
  %v3493 = vand.u32 %v541, 4294901760
  %v3494 = vsub.f32 %v541, %v3493
  %3495 = vmatpush1.msra.mxu0 %v3494
  %3496 = vmatprep.subr.mxu0 0.0
  %v3497 = vand.u32 %v542, 4294901760
  %v3498 = vsub.f32 %v542, %v3497
  %3499 = vmatpush1.msra.mxu0 %v3498
  %3500 = vmatprep.subr.mxu0 0.0
  %v3501 = vand.u32 %v543, 4294901760
  %v3502 = vsub.f32 %v543, %v3501
  %3503 = vmatpush1.msra.mxu0 %v3502
  %3504 = vmatprep.subr.mxu0 0.0
  %v3505 = vand.u32 %v544, 4294901760
  %v3506 = vsub.f32 %v544, %v3505
  %3507 = vmatpush1.msra.mxu0 %v3506
  %3508 = vmatprep.subr.mxu0 0.0
  %v3509 = vand.u32 %v545, 4294901760
  %v3510 = vsub.f32 %v545, %v3509
  %3511 = vmatpush1.msra.mxu0 %v3510
  %3512 = vmatprep.subr.mxu0 0.0
  %3513 = vmatpush1.msra.mxu0 0.0
  %3514 = vmatprep.subr.mxu0 0.0
  %3515 = vmatpush1.msra.mxu0 0.0
  %3516 = vmatprep.subr.mxu0 0.0
  %3517 = vmatpush1.msra.mxu0 0.0
  %3518 = vmatprep.subr.mxu0 0.0
  %3519 = vmatpush1.msra.mxu0 0.0
  %3520 = vmatprep.subr.mxu0 0.0
  %3521 = vmatpush1.msra.mxu0 0.0
  %3522 = vmatprep.subr.mxu0 0.0
  %3523 = vmatpush1.msra.mxu0 0.0
  %3524 = vmatprep.subr.mxu0 0.0
  %3525 = vmatpush1.msra.mxu0 0.0
  %3526 = vmatprep.subr.mxu0 0.0
  %3527 = vmatpush1.msra.mxu0 0.0
  %3528 = vmatprep.subr.mxu0 0.0
  %3529 = vmatpush1.msra.mxu0 0.0
  %3530 = vmatprep.subr.mxu0 0.0
  %3531 = vmatpush1.msra.mxu0 0.0
  %3532 = vmatprep.subr.mxu0 0.0
  %3533 = vmatpush1.msra.mxu0 0.0
  %3534 = vmatprep.subr.mxu0 0.0
  %3535 = vmatpush1.msra.mxu0 0.0
  %3536 = vmatprep.subr.mxu0 0.0
  %3537 = vmatpush1.msra.mxu0 0.0
  %3538 = vmatprep.subr.mxu0 0.0
  %3539 = vmatpush1.msra.mxu0 0.0
  %3540 = vmatprep.subr.mxu0 0.0
  %3541 = vmatpush1.msra.mxu0 0.0
  %3542 = vmatprep.subr.mxu0 0.0
  %3543 = vmatpush1.msra.mxu0 0.0
  %3544 = vmatprep.subr.mxu0 0.0
  %3545 = vmatpush1.msra.mxu0 0.0
  %3546 = vmatprep.subr.mxu0 0.0
  %3547 = vmatpush1.msra.mxu0 0.0
  %3548 = vmatprep.subr.mxu0 0.0
  %3549 = vmatpush1.msra.mxu0 0.0
  %3550 = vmatprep.subr.mxu0 0.0
  %3551 = vmatpush1.msra.mxu0 0.0
  %3552 = vmatprep.subr.mxu0 0.0
  %3553 = vmatpush1.msra.mxu0 0.0
  %3554 = vmatprep.subr.mxu0 0.0
  %3555 = vmatpush1.msra.mxu0 0.0
  %3556 = vmatprep.subr.mxu0 0.0
  %3557 = vmatpush1.msra.mxu0 0.0
  %3558 = vmatprep.subr.mxu0 0.0
  %3559 = vmatpush1.msra.mxu0 0.0
  %3560 = vmatprep.mubr.f32.mxu0 0.0
  %v3561 = vand.u32 %v3284, 4294901760
  %v3562 = vsub.f32 %v3284, %v3561
  %3563 = vmatmul.mubr.f32.gmra.mrb[0].mxu0 %v3562
  %v3564 = vpop.f32.mrb[0].mxu0
  %v3565 = vadd.f32 %v3477, %v3564
  %v3566 = vpop.f32.mrb[0].mxu0
  %3567 = vdwg.mxu0
  %3568 = vmatprep.subr.mxu0 0.0
  %v3569 = vand.u32 %v538, 4294901760
  %3570 = vmatpush1.msra.mxu0 %v3569
  %3571 = vmatprep.subr.mxu0 0.0
  %v3572 = vand.u32 %v539, 4294901760
  %3573 = vmatpush1.msra.mxu0 %v3572
  %3574 = vmatprep.subr.mxu0 0.0
  %v3575 = vand.u32 %v540, 4294901760
  %3576 = vmatpush1.msra.mxu0 %v3575
  %3577 = vmatprep.subr.mxu0 0.0
  %v3578 = vand.u32 %v541, 4294901760
  %3579 = vmatpush1.msra.mxu0 %v3578
  %3580 = vmatprep.subr.mxu0 0.0
  %v3581 = vand.u32 %v542, 4294901760
  %3582 = vmatpush1.msra.mxu0 %v3581
  %3583 = vmatprep.subr.mxu0 0.0
  %v3584 = vand.u32 %v543, 4294901760
  %3585 = vmatpush1.msra.mxu0 %v3584
  %3586 = vmatprep.subr.mxu0 0.0
  %v3587 = vand.u32 %v544, 4294901760
  %3588 = vmatpush1.msra.mxu0 %v3587
  %3589 = vmatprep.subr.mxu0 0.0
  %v3590 = vand.u32 %v545, 4294901760
  %3591 = vmatpush1.msra.mxu0 %v3590
  %3592 = vmatprep.subr.mxu0 0.0
  %3593 = vmatpush1.msra.mxu0 0.0
  %3594 = vmatprep.subr.mxu0 0.0
  %3595 = vmatpush1.msra.mxu0 0.0
  %3596 = vmatprep.subr.mxu0 0.0
  %3597 = vmatpush1.msra.mxu0 0.0
  %3598 = vmatprep.subr.mxu0 0.0
  %3599 = vmatpush1.msra.mxu0 0.0
  %3600 = vmatprep.subr.mxu0 0.0
  %3601 = vmatpush1.msra.mxu0 0.0
  %3602 = vmatprep.subr.mxu0 0.0
  %3603 = vmatpush1.msra.mxu0 0.0
  %3604 = vmatprep.subr.mxu0 0.0
  %3605 = vmatpush1.msra.mxu0 0.0
  %3606 = vmatprep.subr.mxu0 0.0
  %3607 = vmatpush1.msra.mxu0 0.0
  %3608 = vmatprep.subr.mxu0 0.0
  %3609 = vmatpush1.msra.mxu0 0.0
  %3610 = vmatprep.subr.mxu0 0.0
  %3611 = vmatpush1.msra.mxu0 0.0
  %3612 = vmatprep.subr.mxu0 0.0
  %3613 = vmatpush1.msra.mxu0 0.0
  %3614 = vmatprep.subr.mxu0 0.0
  %3615 = vmatpush1.msra.mxu0 0.0
  %3616 = vmatprep.subr.mxu0 0.0
  %3617 = vmatpush1.msra.mxu0 0.0
  %3618 = vmatprep.subr.mxu0 0.0
  %3619 = vmatpush1.msra.mxu0 0.0
  %3620 = vmatprep.subr.mxu0 0.0
  %3621 = vmatpush1.msra.mxu0 0.0
  %3622 = vmatprep.subr.mxu0 0.0
  %3623 = vmatpush1.msra.mxu0 0.0
  %3624 = vmatprep.subr.mxu0 0.0
  %3625 = vmatpush1.msra.mxu0 0.0
  %3626 = vmatprep.subr.mxu0 0.0
  %3627 = vmatpush1.msra.mxu0 0.0
  %3628 = vmatprep.subr.mxu0 0.0
  %3629 = vmatpush1.msra.mxu0 0.0
  %3630 = vmatprep.subr.mxu0 0.0
  %3631 = vmatpush1.msra.mxu0 0.0
  %3632 = vmatprep.subr.mxu0 0.0
  %3633 = vmatpush1.msra.mxu0 0.0
  %3634 = vmatprep.subr.mxu0 0.0
  %3635 = vmatpush1.msra.mxu0 0.0
  %3636 = vmatprep.subr.mxu0 0.0
  %3637 = vmatpush1.msra.mxu0 0.0
  %3638 = vmatprep.subr.mxu0 0.0
  %3639 = vmatpush1.msra.mxu0 0.0
  %3640 = vmatprep.mubr.f32.mxu0 0.0
  %v3641 = vand.u32 %v3284, 4294901760
  %v3642 = vsub.f32 %v3284, %v3641
  %v3643 = vand.u32 %v3642, 4294901760
  %3644 = vmatmul.mubr.f32.gmra.mrb[0].mxu0 %v3643
  %v3645 = vpop.f32.mrb[0].mxu0
  %v3646 = vadd.f32 %v3565, %v3645
  %v3647 = vpop.f32.mrb[0].mxu0
  %3648 = vdwg.mxu0
  %3649 = vmatprep.subr.mxu0 0.0
  %v3650 = vand.u32 %v538, 4294901760
  %v3651 = vsub.f32 %v538, %v3650
  %v3652 = vand.u32 %v3651, 4294901760
  %3653 = vmatpush1.msra.mxu0 %v3652
  %3654 = vmatprep.subr.mxu0 0.0
  %v3655 = vand.u32 %v539, 4294901760
  %v3656 = vsub.f32 %v539, %v3655
  %v3657 = vand.u32 %v3656, 4294901760
  %3658 = vmatpush1.msra.mxu0 %v3657
  %3659 = vmatprep.subr.mxu0 0.0
  %v3660 = vand.u32 %v540, 4294901760
  %v3661 = vsub.f32 %v540, %v3660
  %v3662 = vand.u32 %v3661, 4294901760
  %3663 = vmatpush1.msra.mxu0 %v3662
  %3664 = vmatprep.subr.mxu0 0.0
  %v3665 = vand.u32 %v541, 4294901760
  %v3666 = vsub.f32 %v541, %v3665
  %v3667 = vand.u32 %v3666, 4294901760
  %3668 = vmatpush1.msra.mxu0 %v3667
  %3669 = vmatprep.subr.mxu0 0.0
  %v3670 = vand.u32 %v542, 4294901760
  %v3671 = vsub.f32 %v542, %v3670
  %v3672 = vand.u32 %v3671, 4294901760
  %3673 = vmatpush1.msra.mxu0 %v3672
  %3674 = vmatprep.subr.mxu0 0.0
  %v3675 = vand.u32 %v543, 4294901760
  %v3676 = vsub.f32 %v543, %v3675
  %v3677 = vand.u32 %v3676, 4294901760
  %3678 = vmatpush1.msra.mxu0 %v3677
  %3679 = vmatprep.subr.mxu0 0.0
  %v3680 = vand.u32 %v544, 4294901760
  %v3681 = vsub.f32 %v544, %v3680
  %v3682 = vand.u32 %v3681, 4294901760
  %3683 = vmatpush1.msra.mxu0 %v3682
  %3684 = vmatprep.subr.mxu0 0.0
  %v3685 = vand.u32 %v545, 4294901760
  %v3686 = vsub.f32 %v545, %v3685
  %v3687 = vand.u32 %v3686, 4294901760
  %3688 = vmatpush1.msra.mxu0 %v3687
  %3689 = vmatprep.subr.mxu0 0.0
  %3690 = vmatpush1.msra.mxu0 0.0
  %3691 = vmatprep.subr.mxu0 0.0
  %3692 = vmatpush1.msra.mxu0 0.0
  %3693 = vmatprep.subr.mxu0 0.0
  %3694 = vmatpush1.msra.mxu0 0.0
  %3695 = vmatprep.subr.mxu0 0.0
  %3696 = vmatpush1.msra.mxu0 0.0
  %3697 = vmatprep.subr.mxu0 0.0
  %3698 = vmatpush1.msra.mxu0 0.0
  %3699 = vmatprep.subr.mxu0 0.0
  %3700 = vmatpush1.msra.mxu0 0.0
  %3701 = vmatprep.subr.mxu0 0.0
  %3702 = vmatpush1.msra.mxu0 0.0
  %3703 = vmatprep.subr.mxu0 0.0
  %3704 = vmatpush1.msra.mxu0 0.0
  %3705 = vmatprep.subr.mxu0 0.0
  %3706 = vmatpush1.msra.mxu0 0.0
  %3707 = vmatprep.subr.mxu0 0.0
  %3708 = vmatpush1.msra.mxu0 0.0
  %3709 = vmatprep.subr.mxu0 0.0
  %3710 = vmatpush1.msra.mxu0 0.0
  %3711 = vmatprep.subr.mxu0 0.0
  %3712 = vmatpush1.msra.mxu0 0.0
  %3713 = vmatprep.subr.mxu0 0.0
  %3714 = vmatpush1.msra.mxu0 0.0
  %3715 = vmatprep.subr.mxu0 0.0
  %3716 = vmatpush1.msra.mxu0 0.0
  %3717 = vmatprep.subr.mxu0 0.0
  %3718 = vmatpush1.msra.mxu0 0.0
  %3719 = vmatprep.subr.mxu0 0.0
  %3720 = vmatpush1.msra.mxu0 0.0
  %3721 = vmatprep.subr.mxu0 0.0
  %3722 = vmatpush1.msra.mxu0 0.0
  %3723 = vmatprep.subr.mxu0 0.0
  %3724 = vmatpush1.msra.mxu0 0.0
  %3725 = vmatprep.subr.mxu0 0.0
  %3726 = vmatpush1.msra.mxu0 0.0
  %3727 = vmatprep.subr.mxu0 0.0
  %3728 = vmatpush1.msra.mxu0 0.0
  %3729 = vmatprep.subr.mxu0 0.0
  %3730 = vmatpush1.msra.mxu0 0.0
  %3731 = vmatprep.subr.mxu0 0.0
  %3732 = vmatpush1.msra.mxu0 0.0
  %3733 = vmatprep.subr.mxu0 0.0
  %3734 = vmatpush1.msra.mxu0 0.0
  %3735 = vmatprep.subr.mxu0 0.0
  %3736 = vmatpush1.msra.mxu0 0.0
  %3737 = vmatprep.mubr.f32.mxu0 0.0
  %v3738 = vand.u32 %v3284, 4294901760
  %3739 = vmatmul.mubr.f32.gmra.mrb[0].mxu0 %v3738
  %v3740 = vpop.f32.mrb[0].mxu0
  %v3741 = vadd.f32 %v3646, %v3740
  %v3742 = vpop.f32.mrb[0].mxu0
  %3743 = vdwg.mxu0
  %3744 = vmatprep.subr.mxu0 0.0
  %v3745 = vand.u32 %v538, 4294901760
  %3746 = vmatpush1.msra.mxu0 %v3745
  %3747 = vmatprep.subr.mxu0 0.0
  %v3748 = vand.u32 %v539, 4294901760
  %3749 = vmatpush1.msra.mxu0 %v3748
  %3750 = vmatprep.subr.mxu0 0.0
  %v3751 = vand.u32 %v540, 4294901760
  %3752 = vmatpush1.msra.mxu0 %v3751
  %3753 = vmatprep.subr.mxu0 0.0
  %v3754 = vand.u32 %v541, 4294901760
  %3755 = vmatpush1.msra.mxu0 %v3754
  %3756 = vmatprep.subr.mxu0 0.0
  %v3757 = vand.u32 %v542, 4294901760
  %3758 = vmatpush1.msra.mxu0 %v3757
  %3759 = vmatprep.subr.mxu0 0.0
  %v3760 = vand.u32 %v543, 4294901760
  %3761 = vmatpush1.msra.mxu0 %v3760
  %3762 = vmatprep.subr.mxu0 0.0
  %v3763 = vand.u32 %v544, 4294901760
  %3764 = vmatpush1.msra.mxu0 %v3763
  %3765 = vmatprep.subr.mxu0 0.0
  %v3766 = vand.u32 %v545, 4294901760
  %3767 = vmatpush1.msra.mxu0 %v3766
  %3768 = vmatprep.subr.mxu0 0.0
  %3769 = vmatpush1.msra.mxu0 0.0
  %3770 = vmatprep.subr.mxu0 0.0
  %3771 = vmatpush1.msra.mxu0 0.0
  %3772 = vmatprep.subr.mxu0 0.0
  %3773 = vmatpush1.msra.mxu0 0.0
  %3774 = vmatprep.subr.mxu0 0.0
  %3775 = vmatpush1.msra.mxu0 0.0
  %3776 = vmatprep.subr.mxu0 0.0
  %3777 = vmatpush1.msra.mxu0 0.0
  %3778 = vmatprep.subr.mxu0 0.0
  %3779 = vmatpush1.msra.mxu0 0.0
  %3780 = vmatprep.subr.mxu0 0.0
  %3781 = vmatpush1.msra.mxu0 0.0
  %3782 = vmatprep.subr.mxu0 0.0
  %3783 = vmatpush1.msra.mxu0 0.0
  %3784 = vmatprep.subr.mxu0 0.0
  %3785 = vmatpush1.msra.mxu0 0.0
  %3786 = vmatprep.subr.mxu0 0.0
  %3787 = vmatpush1.msra.mxu0 0.0
  %3788 = vmatprep.subr.mxu0 0.0
  %3789 = vmatpush1.msra.mxu0 0.0
  %3790 = vmatprep.subr.mxu0 0.0
  %3791 = vmatpush1.msra.mxu0 0.0
  %3792 = vmatprep.subr.mxu0 0.0
  %3793 = vmatpush1.msra.mxu0 0.0
  %3794 = vmatprep.subr.mxu0 0.0
  %3795 = vmatpush1.msra.mxu0 0.0
  %3796 = vmatprep.subr.mxu0 0.0
  %3797 = vmatpush1.msra.mxu0 0.0
  %3798 = vmatprep.subr.mxu0 0.0
  %3799 = vmatpush1.msra.mxu0 0.0
  %3800 = vmatprep.subr.mxu0 0.0
  %3801 = vmatpush1.msra.mxu0 0.0
  %3802 = vmatprep.subr.mxu0 0.0
  %3803 = vmatpush1.msra.mxu0 0.0
  %3804 = vmatprep.subr.mxu0 0.0
  %3805 = vmatpush1.msra.mxu0 0.0
  %3806 = vmatprep.subr.mxu0 0.0
  %3807 = vmatpush1.msra.mxu0 0.0
  %3808 = vmatprep.subr.mxu0 0.0
  %3809 = vmatpush1.msra.mxu0 0.0
  %3810 = vmatprep.subr.mxu0 0.0
  %3811 = vmatpush1.msra.mxu0 0.0
  %3812 = vmatprep.subr.mxu0 0.0
  %3813 = vmatpush1.msra.mxu0 0.0
  %3814 = vmatprep.subr.mxu0 0.0
  %3815 = vmatpush1.msra.mxu0 0.0
  %3816 = vmatprep.mubr.f32.mxu0 0.0
  %v3817 = vand.u32 %v3284, 4294901760
  %3818 = vmatmul.mubr.f32.gmra.mrb[0].mxu0 %v3817
  %v3819 = vpop.f32.mrb[0].mxu0
  %v3820 = vadd.f32 %v3741, %v3819
  %v3821 = vpop.f32.mrb[0].mxu0
  %3822 = vdwg.mxu0
  %v3823 = vadd.f32 %v3283, %v3820
  %v3824 = vtanh.pop %v3823
  %3826 = vrot.lane.b32.xlu0 %v3824, 96
  %v3827 = vpop.permute.xlu0 %3826
  %3829 = vst.msk [vmem:[#allocation3 + $0x3] sm:$0x2] %vm1640, %v3827
  %v3830 = vld [vmem:[#allocation2 + $0xc] sm:$0x3]
  %v3831 = vsel %vm535, %v3824, 0
  %3833 = vmatprep.subr.mxu0 0.0
  %v3834 = vand.u32 %v538, 4294901760
  %3835 = vmatpush1.msra.mxu0 %v3834
  %3836 = vmatprep.subr.mxu0 0.0
  %v3837 = vand.u32 %v539, 4294901760
  %3838 = vmatpush1.msra.mxu0 %v3837
  %3839 = vmatprep.subr.mxu0 0.0
  %v3840 = vand.u32 %v540, 4294901760
  %3841 = vmatpush1.msra.mxu0 %v3840
  %3842 = vmatprep.subr.mxu0 0.0
  %v3843 = vand.u32 %v541, 4294901760
  %3844 = vmatpush1.msra.mxu0 %v3843
  %3845 = vmatprep.subr.mxu0 0.0
  %v3846 = vand.u32 %v542, 4294901760
  %3847 = vmatpush1.msra.mxu0 %v3846
  %3848 = vmatprep.subr.mxu0 0.0
  %v3849 = vand.u32 %v543, 4294901760
  %3850 = vmatpush1.msra.mxu0 %v3849
  %3851 = vmatprep.subr.mxu0 0.0
  %v3852 = vand.u32 %v544, 4294901760
  %3853 = vmatpush1.msra.mxu0 %v3852
  %3854 = vmatprep.subr.mxu0 0.0
  %v3855 = vand.u32 %v545, 4294901760
  %3856 = vmatpush1.msra.mxu0 %v3855
  %3857 = vmatprep.subr.mxu0 0.0
  %3858 = vmatpush1.msra.mxu0 0.0
  %3859 = vmatprep.subr.mxu0 0.0
  %3860 = vmatpush1.msra.mxu0 0.0
  %3861 = vmatprep.subr.mxu0 0.0
  %3862 = vmatpush1.msra.mxu0 0.0
  %3863 = vmatprep.subr.mxu0 0.0
  %3864 = vmatpush1.msra.mxu0 0.0
  %3865 = vmatprep.subr.mxu0 0.0
  %3866 = vmatpush1.msra.mxu0 0.0
  %3867 = vmatprep.subr.mxu0 0.0
  %3868 = vmatpush1.msra.mxu0 0.0
  %3869 = vmatprep.subr.mxu0 0.0
  %3870 = vmatpush1.msra.mxu0 0.0
  %3871 = vmatprep.subr.mxu0 0.0
  %3872 = vmatpush1.msra.mxu0 0.0
  %3873 = vmatprep.subr.mxu0 0.0
  %3874 = vmatpush1.msra.mxu0 0.0
  %3875 = vmatprep.subr.mxu0 0.0
  %3876 = vmatpush1.msra.mxu0 0.0
  %3877 = vmatprep.subr.mxu0 0.0
  %3878 = vmatpush1.msra.mxu0 0.0
  %3879 = vmatprep.subr.mxu0 0.0
  %3880 = vmatpush1.msra.mxu0 0.0
  %3881 = vmatprep.subr.mxu0 0.0
  %3882 = vmatpush1.msra.mxu0 0.0
  %3883 = vmatprep.subr.mxu0 0.0
  %3884 = vmatpush1.msra.mxu0 0.0
  %3885 = vmatprep.subr.mxu0 0.0
  %3886 = vmatpush1.msra.mxu0 0.0
  %3887 = vmatprep.subr.mxu0 0.0
  %3888 = vmatpush1.msra.mxu0 0.0
  %3889 = vmatprep.subr.mxu0 0.0
  %3890 = vmatpush1.msra.mxu0 0.0
  %3891 = vmatprep.subr.mxu0 0.0
  %3892 = vmatpush1.msra.mxu0 0.0
  %3893 = vmatprep.subr.mxu0 0.0
  %3894 = vmatpush1.msra.mxu0 0.0
  %3895 = vmatprep.subr.mxu0 0.0
  %3896 = vmatpush1.msra.mxu0 0.0
  %3897 = vmatprep.subr.mxu0 0.0
  %3898 = vmatpush1.msra.mxu0 0.0
  %3899 = vmatprep.subr.mxu0 0.0
  %3900 = vmatpush1.msra.mxu0 0.0
  %3901 = vmatprep.subr.mxu0 0.0
  %3902 = vmatpush1.msra.mxu0 0.0
  %3903 = vmatprep.subr.mxu0 0.0
  %3904 = vmatpush1.msra.mxu0 0.0
  %3905 = vmatprep.mubr.f32.mxu0 0.0
  %v3906 = vand.u32 %v3831, 4294901760
  %v3907 = vsub.f32 %v3831, %v3906
  %v3908 = vand.u32 %v3907, 4294901760
  %v3909 = vsub.f32 %v3907, %v3908
  %v3910 = vand.u32 %v3909, 4294901760
  %3911 = vmatmul.mubr.f32.gmra.mrb[0].mxu0 %v3910
  %v3912 = vpop.f32.mrb[0].mxu0
  %v3913 = vadd.f32 0.0, %v3912
  %v3914 = vpop.f32.mrb[0].mxu0
  %3915 = vdwg.mxu0
  %3916 = vmatprep.subr.mxu0 0.0
  %v3917 = vand.u32 %v538, 4294901760
  %v3918 = vsub.f32 %v538, %v3917
  %v3919 = vand.u32 %v3918, 4294901760
  %v3920 = vsub.f32 %v3918, %v3919
  %v3921 = vand.u32 %v3920, 4294901760
  %3922 = vmatpush1.msra.mxu0 %v3921
  %3923 = vmatprep.subr.mxu0 0.0
  %v3924 = vand.u32 %v539, 4294901760
  %v3925 = vsub.f32 %v539, %v3924
  %v3926 = vand.u32 %v3925, 4294901760
  %v3927 = vsub.f32 %v3925, %v3926
  %v3928 = vand.u32 %v3927, 4294901760
  %3929 = vmatpush1.msra.mxu0 %v3928
  %3930 = vmatprep.subr.mxu0 0.0
  %v3931 = vand.u32 %v540, 4294901760
  %v3932 = vsub.f32 %v540, %v3931
  %v3933 = vand.u32 %v3932, 4294901760
  %v3934 = vsub.f32 %v3932, %v3933
  %v3935 = vand.u32 %v3934, 4294901760
  %3936 = vmatpush1.msra.mxu0 %v3935
  %3937 = vmatprep.subr.mxu0 0.0
  %v3938 = vand.u32 %v541, 4294901760
  %v3939 = vsub.f32 %v541, %v3938
  %v3940 = vand.u32 %v3939, 4294901760
  %v3941 = vsub.f32 %v3939, %v3940
  %v3942 = vand.u32 %v3941, 4294901760
  %3943 = vmatpush1.msra.mxu0 %v3942
  %3944 = vmatprep.subr.mxu0 0.0
  %v3945 = vand.u32 %v542, 4294901760
  %v3946 = vsub.f32 %v542, %v3945
  %v3947 = vand.u32 %v3946, 4294901760
  %v3948 = vsub.f32 %v3946, %v3947
  %v3949 = vand.u32 %v3948, 4294901760
  %3950 = vmatpush1.msra.mxu0 %v3949
  %3951 = vmatprep.subr.mxu0 0.0
  %v3952 = vand.u32 %v543, 4294901760
  %v3953 = vsub.f32 %v543, %v3952
  %v3954 = vand.u32 %v3953, 4294901760
  %v3955 = vsub.f32 %v3953, %v3954
  %v3956 = vand.u32 %v3955, 4294901760
  %3957 = vmatpush1.msra.mxu0 %v3956
  %3958 = vmatprep.subr.mxu0 0.0
  %v3959 = vand.u32 %v544, 4294901760
  %v3960 = vsub.f32 %v544, %v3959
  %v3961 = vand.u32 %v3960, 4294901760
  %v3962 = vsub.f32 %v3960, %v3961
  %v3963 = vand.u32 %v3962, 4294901760
  %3964 = vmatpush1.msra.mxu0 %v3963
  %3965 = vmatprep.subr.mxu0 0.0
  %v3966 = vand.u32 %v545, 4294901760
  %v3967 = vsub.f32 %v545, %v3966
  %v3968 = vand.u32 %v3967, 4294901760
  %v3969 = vsub.f32 %v3967, %v3968
  %v3970 = vand.u32 %v3969, 4294901760
  %3971 = vmatpush1.msra.mxu0 %v3970
  %3972 = vmatprep.subr.mxu0 0.0
  %3973 = vmatpush1.msra.mxu0 0.0
  %3974 = vmatprep.subr.mxu0 0.0
  %3975 = vmatpush1.msra.mxu0 0.0
  %3976 = vmatprep.subr.mxu0 0.0
  %3977 = vmatpush1.msra.mxu0 0.0
  %3978 = vmatprep.subr.mxu0 0.0
  %3979 = vmatpush1.msra.mxu0 0.0
  %3980 = vmatprep.subr.mxu0 0.0
  %3981 = vmatpush1.msra.mxu0 0.0
  %3982 = vmatprep.subr.mxu0 0.0
  %3983 = vmatpush1.msra.mxu0 0.0
  %3984 = vmatprep.subr.mxu0 0.0
  %3985 = vmatpush1.msra.mxu0 0.0
  %3986 = vmatprep.subr.mxu0 0.0
  %3987 = vmatpush1.msra.mxu0 0.0
  %3988 = vmatprep.subr.mxu0 0.0
  %3989 = vmatpush1.msra.mxu0 0.0
  %3990 = vmatprep.subr.mxu0 0.0
  %3991 = vmatpush1.msra.mxu0 0.0
  %3992 = vmatprep.subr.mxu0 0.0
  %3993 = vmatpush1.msra.mxu0 0.0
  %3994 = vmatprep.subr.mxu0 0.0
  %3995 = vmatpush1.msra.mxu0 0.0
  %3996 = vmatprep.subr.mxu0 0.0
  %3997 = vmatpush1.msra.mxu0 0.0
  %3998 = vmatprep.subr.mxu0 0.0
  %3999 = vmatpush1.msra.mxu0 0.0
  %4000 = vmatprep.subr.mxu0 0.0
  %4001 = vmatpush1.msra.mxu0 0.0
  %4002 = vmatprep.subr.mxu0 0.0
  %4003 = vmatpush1.msra.mxu0 0.0
  %4004 = vmatprep.subr.mxu0 0.0
  %4005 = vmatpush1.msra.mxu0 0.0
  %4006 = vmatprep.subr.mxu0 0.0
  %4007 = vmatpush1.msra.mxu0 0.0
  %4008 = vmatprep.subr.mxu0 0.0
  %4009 = vmatpush1.msra.mxu0 0.0
  %4010 = vmatprep.subr.mxu0 0.0
  %4011 = vmatpush1.msra.mxu0 0.0
  %4012 = vmatprep.subr.mxu0 0.0
  %4013 = vmatpush1.msra.mxu0 0.0
  %4014 = vmatprep.subr.mxu0 0.0
  %4015 = vmatpush1.msra.mxu0 0.0
  %4016 = vmatprep.subr.mxu0 0.0
  %4017 = vmatpush1.msra.mxu0 0.0
  %4018 = vmatprep.subr.mxu0 0.0
  %4019 = vmatpush1.msra.mxu0 0.0
  %4020 = vmatprep.mubr.f32.mxu0 0.0
  %v4021 = vand.u32 %v3831, 4294901760
  %4022 = vmatmul.mubr.f32.gmra.mrb[0].mxu0 %v4021
  %v4023 = vpop.f32.mrb[0].mxu0
  %v4024 = vadd.f32 %v3913, %v4023
  %v4025 = vpop.f32.mrb[0].mxu0
  %4026 = vdwg.mxu0
  %4027 = vmatprep.subr.mxu0 0.0
  %v4028 = vand.u32 %v538, 4294901760
  %v4029 = vsub.f32 %v538, %v4028
  %4030 = vmatpush1.msra.mxu0 %v4029
  %4031 = vmatprep.subr.mxu0 0.0
  %v4032 = vand.u32 %v539, 4294901760
  %v4033 = vsub.f32 %v539, %v4032
  %4034 = vmatpush1.msra.mxu0 %v4033
  %4035 = vmatprep.subr.mxu0 0.0
  %v4036 = vand.u32 %v540, 4294901760
  %v4037 = vsub.f32 %v540, %v4036
  %4038 = vmatpush1.msra.mxu0 %v4037
  %4039 = vmatprep.subr.mxu0 0.0
  %v4040 = vand.u32 %v541, 4294901760
  %v4041 = vsub.f32 %v541, %v4040
  %4042 = vmatpush1.msra.mxu0 %v4041
  %4043 = vmatprep.subr.mxu0 0.0
  %v4044 = vand.u32 %v542, 4294901760
  %v4045 = vsub.f32 %v542, %v4044
  %4046 = vmatpush1.msra.mxu0 %v4045
  %4047 = vmatprep.subr.mxu0 0.0
  %v4048 = vand.u32 %v543, 4294901760
  %v4049 = vsub.f32 %v543, %v4048
  %4050 = vmatpush1.msra.mxu0 %v4049
  %4051 = vmatprep.subr.mxu0 0.0
  %v4052 = vand.u32 %v544, 4294901760
  %v4053 = vsub.f32 %v544, %v4052
  %4054 = vmatpush1.msra.mxu0 %v4053
  %4055 = vmatprep.subr.mxu0 0.0
  %v4056 = vand.u32 %v545, 4294901760
  %v4057 = vsub.f32 %v545, %v4056
  %4058 = vmatpush1.msra.mxu0 %v4057
  %4059 = vmatprep.subr.mxu0 0.0
  %4060 = vmatpush1.msra.mxu0 0.0
  %4061 = vmatprep.subr.mxu0 0.0
  %4062 = vmatpush1.msra.mxu0 0.0
  %4063 = vmatprep.subr.mxu0 0.0
  %4064 = vmatpush1.msra.mxu0 0.0
  %4065 = vmatprep.subr.mxu0 0.0
  %4066 = vmatpush1.msra.mxu0 0.0
  %4067 = vmatprep.subr.mxu0 0.0
  %4068 = vmatpush1.msra.mxu0 0.0
  %4069 = vmatprep.subr.mxu0 0.0
  %4070 = vmatpush1.msra.mxu0 0.0
  %4071 = vmatprep.subr.mxu0 0.0
  %4072 = vmatpush1.msra.mxu0 0.0
  %4073 = vmatprep.subr.mxu0 0.0
  %4074 = vmatpush1.msra.mxu0 0.0
  %4075 = vmatprep.subr.mxu0 0.0
  %4076 = vmatpush1.msra.mxu0 0.0
  %4077 = vmatprep.subr.mxu0 0.0
  %4078 = vmatpush1.msra.mxu0 0.0
  %4079 = vmatprep.subr.mxu0 0.0
  %4080 = vmatpush1.msra.mxu0 0.0
  %4081 = vmatprep.subr.mxu0 0.0
  %4082 = vmatpush1.msra.mxu0 0.0
  %4083 = vmatprep.subr.mxu0 0.0
  %4084 = vmatpush1.msra.mxu0 0.0
  %4085 = vmatprep.subr.mxu0 0.0
  %4086 = vmatpush1.msra.mxu0 0.0
  %4087 = vmatprep.subr.mxu0 0.0
  %4088 = vmatpush1.msra.mxu0 0.0
  %4089 = vmatprep.subr.mxu0 0.0
  %4090 = vmatpush1.msra.mxu0 0.0
  %4091 = vmatprep.subr.mxu0 0.0
  %4092 = vmatpush1.msra.mxu0 0.0
  %4093 = vmatprep.subr.mxu0 0.0
  %4094 = vmatpush1.msra.mxu0 0.0
  %4095 = vmatprep.subr.mxu0 0.0
  %4096 = vmatpush1.msra.mxu0 0.0
  %4097 = vmatprep.subr.mxu0 0.0
  %4098 = vmatpush1.msra.mxu0 0.0
  %4099 = vmatprep.subr.mxu0 0.0
  %4100 = vmatpush1.msra.mxu0 0.0
  %4101 = vmatprep.subr.mxu0 0.0
  %4102 = vmatpush1.msra.mxu0 0.0
  %4103 = vmatprep.subr.mxu0 0.0
  %4104 = vmatpush1.msra.mxu0 0.0
  %4105 = vmatprep.subr.mxu0 0.0
  %4106 = vmatpush1.msra.mxu0 0.0
  %4107 = vmatprep.mubr.f32.mxu0 0.0
  %v4108 = vand.u32 %v3831, 4294901760
  %v4109 = vsub.f32 %v3831, %v4108
  %4110 = vmatmul.mubr.f32.gmra.mrb[0].mxu0 %v4109
  %v4111 = vpop.f32.mrb[0].mxu0
  %v4112 = vadd.f32 %v4024, %v4111
  %v4113 = vpop.f32.mrb[0].mxu0
  %4114 = vdwg.mxu0
  %4115 = vmatprep.subr.mxu0 0.0
  %v4116 = vand.u32 %v538, 4294901760
  %4117 = vmatpush1.msra.mxu0 %v4116
  %4118 = vmatprep.subr.mxu0 0.0
  %v4119 = vand.u32 %v539, 4294901760
  %4120 = vmatpush1.msra.mxu0 %v4119
  %4121 = vmatprep.subr.mxu0 0.0
  %v4122 = vand.u32 %v540, 4294901760
  %4123 = vmatpush1.msra.mxu0 %v4122
  %4124 = vmatprep.subr.mxu0 0.0
  %v4125 = vand.u32 %v541, 4294901760
  %4126 = vmatpush1.msra.mxu0 %v4125
  %4127 = vmatprep.subr.mxu0 0.0
  %v4128 = vand.u32 %v542, 4294901760
  %4129 = vmatpush1.msra.mxu0 %v4128
  %4130 = vmatprep.subr.mxu0 0.0
  %v4131 = vand.u32 %v543, 4294901760
  %4132 = vmatpush1.msra.mxu0 %v4131
  %4133 = vmatprep.subr.mxu0 0.0
  %v4134 = vand.u32 %v544, 4294901760
  %4135 = vmatpush1.msra.mxu0 %v4134
  %4136 = vmatprep.subr.mxu0 0.0
  %v4137 = vand.u32 %v545, 4294901760
  %4138 = vmatpush1.msra.mxu0 %v4137
  %4139 = vmatprep.subr.mxu0 0.0
  %4140 = vmatpush1.msra.mxu0 0.0
  %4141 = vmatprep.subr.mxu0 0.0
  %4142 = vmatpush1.msra.mxu0 0.0
  %4143 = vmatprep.subr.mxu0 0.0
  %4144 = vmatpush1.msra.mxu0 0.0
  %4145 = vmatprep.subr.mxu0 0.0
  %4146 = vmatpush1.msra.mxu0 0.0
  %4147 = vmatprep.subr.mxu0 0.0
  %4148 = vmatpush1.msra.mxu0 0.0
  %4149 = vmatprep.subr.mxu0 0.0
  %4150 = vmatpush1.msra.mxu0 0.0
  %4151 = vmatprep.subr.mxu0 0.0
  %4152 = vmatpush1.msra.mxu0 0.0
  %4153 = vmatprep.subr.mxu0 0.0
  %4154 = vmatpush1.msra.mxu0 0.0
  %4155 = vmatprep.subr.mxu0 0.0
  %4156 = vmatpush1.msra.mxu0 0.0
  %4157 = vmatprep.subr.mxu0 0.0
  %4158 = vmatpush1.msra.mxu0 0.0
  %4159 = vmatprep.subr.mxu0 0.0
  %4160 = vmatpush1.msra.mxu0 0.0
  %4161 = vmatprep.subr.mxu0 0.0
  %4162 = vmatpush1.msra.mxu0 0.0
  %4163 = vmatprep.subr.mxu0 0.0
  %4164 = vmatpush1.msra.mxu0 0.0
  %4165 = vmatprep.subr.mxu0 0.0
  %4166 = vmatpush1.msra.mxu0 0.0
  %4167 = vmatprep.subr.mxu0 0.0
  %4168 = vmatpush1.msra.mxu0 0.0
  %4169 = vmatprep.subr.mxu0 0.0
  %4170 = vmatpush1.msra.mxu0 0.0
  %4171 = vmatprep.subr.mxu0 0.0
  %4172 = vmatpush1.msra.mxu0 0.0
  %4173 = vmatprep.subr.mxu0 0.0
  %4174 = vmatpush1.msra.mxu0 0.0
  %4175 = vmatprep.subr.mxu0 0.0
  %4176 = vmatpush1.msra.mxu0 0.0
  %4177 = vmatprep.subr.mxu0 0.0
  %4178 = vmatpush1.msra.mxu0 0.0
  %4179 = vmatprep.subr.mxu0 0.0
  %4180 = vmatpush1.msra.mxu0 0.0
  %4181 = vmatprep.subr.mxu0 0.0
  %4182 = vmatpush1.msra.mxu0 0.0
  %4183 = vmatprep.subr.mxu0 0.0
  %4184 = vmatpush1.msra.mxu0 0.0
  %4185 = vmatprep.subr.mxu0 0.0
  %4186 = vmatpush1.msra.mxu0 0.0
  %4187 = vmatprep.mubr.f32.mxu0 0.0
  %v4188 = vand.u32 %v3831, 4294901760
  %v4189 = vsub.f32 %v3831, %v4188
  %v4190 = vand.u32 %v4189, 4294901760
  %4191 = vmatmul.mubr.f32.gmra.mrb[0].mxu0 %v4190
  %v4192 = vpop.f32.mrb[0].mxu0
  %v4193 = vadd.f32 %v4112, %v4192
  %v4194 = vpop.f32.mrb[0].mxu0
  %4195 = vdwg.mxu0
  %4196 = vmatprep.subr.mxu0 0.0
  %v4197 = vand.u32 %v538, 4294901760
  %v4198 = vsub.f32 %v538, %v4197
  %v4199 = vand.u32 %v4198, 4294901760
  %4200 = vmatpush1.msra.mxu0 %v4199
  %4201 = vmatprep.subr.mxu0 0.0
  %v4202 = vand.u32 %v539, 4294901760
  %v4203 = vsub.f32 %v539, %v4202
  %v4204 = vand.u32 %v4203, 4294901760
  %4205 = vmatpush1.msra.mxu0 %v4204
  %4206 = vmatprep.subr.mxu0 0.0
  %v4207 = vand.u32 %v540, 4294901760
  %v4208 = vsub.f32 %v540, %v4207
  %v4209 = vand.u32 %v4208, 4294901760
  %4210 = vmatpush1.msra.mxu0 %v4209
  %4211 = vmatprep.subr.mxu0 0.0
  %v4212 = vand.u32 %v541, 4294901760
  %v4213 = vsub.f32 %v541, %v4212
  %v4214 = vand.u32 %v4213, 4294901760
  %4215 = vmatpush1.msra.mxu0 %v4214
  %4216 = vmatprep.subr.mxu0 0.0
  %v4217 = vand.u32 %v542, 4294901760
  %v4218 = vsub.f32 %v542, %v4217
  %v4219 = vand.u32 %v4218, 4294901760
  %4220 = vmatpush1.msra.mxu0 %v4219
  %4221 = vmatprep.subr.mxu0 0.0
  %v4222 = vand.u32 %v543, 4294901760
  %v4223 = vsub.f32 %v543, %v4222
  %v4224 = vand.u32 %v4223, 4294901760
  %4225 = vmatpush1.msra.mxu0 %v4224
  %4226 = vmatprep.subr.mxu0 0.0
  %v4227 = vand.u32 %v544, 4294901760
  %v4228 = vsub.f32 %v544, %v4227
  %v4229 = vand.u32 %v4228, 4294901760
  %4230 = vmatpush1.msra.mxu0 %v4229
  %4231 = vmatprep.subr.mxu0 0.0
  %v4232 = vand.u32 %v545, 4294901760
  %v4233 = vsub.f32 %v545, %v4232
  %v4234 = vand.u32 %v4233, 4294901760
  %4235 = vmatpush1.msra.mxu0 %v4234
  %4236 = vmatprep.subr.mxu0 0.0
  %4237 = vmatpush1.msra.mxu0 0.0
  %4238 = vmatprep.subr.mxu0 0.0
  %4239 = vmatpush1.msra.mxu0 0.0
  %4240 = vmatprep.subr.mxu0 0.0
  %4241 = vmatpush1.msra.mxu0 0.0
  %4242 = vmatprep.subr.mxu0 0.0
  %4243 = vmatpush1.msra.mxu0 0.0
  %4244 = vmatprep.subr.mxu0 0.0
  %4245 = vmatpush1.msra.mxu0 0.0
  %4246 = vmatprep.subr.mxu0 0.0
  %4247 = vmatpush1.msra.mxu0 0.0
  %4248 = vmatprep.subr.mxu0 0.0
  %4249 = vmatpush1.msra.mxu0 0.0
  %4250 = vmatprep.subr.mxu0 0.0
  %4251 = vmatpush1.msra.mxu0 0.0
  %4252 = vmatprep.subr.mxu0 0.0
  %4253 = vmatpush1.msra.mxu0 0.0
  %4254 = vmatprep.subr.mxu0 0.0
  %4255 = vmatpush1.msra.mxu0 0.0
  %4256 = vmatprep.subr.mxu0 0.0
  %4257 = vmatpush1.msra.mxu0 0.0
  %4258 = vmatprep.subr.mxu0 0.0
  %4259 = vmatpush1.msra.mxu0 0.0
  %4260 = vmatprep.subr.mxu0 0.0
  %4261 = vmatpush1.msra.mxu0 0.0
  %4262 = vmatprep.subr.mxu0 0.0
  %4263 = vmatpush1.msra.mxu0 0.0
  %4264 = vmatprep.subr.mxu0 0.0
  %4265 = vmatpush1.msra.mxu0 0.0
  %4266 = vmatprep.subr.mxu0 0.0
  %4267 = vmatpush1.msra.mxu0 0.0
  %4268 = vmatprep.subr.mxu0 0.0
  %4269 = vmatpush1.msra.mxu0 0.0
  %4270 = vmatprep.subr.mxu0 0.0
  %4271 = vmatpush1.msra.mxu0 0.0
  %4272 = vmatprep.subr.mxu0 0.0
  %4273 = vmatpush1.msra.mxu0 0.0
  %4274 = vmatprep.subr.mxu0 0.0
  %4275 = vmatpush1.msra.mxu0 0.0
  %4276 = vmatprep.subr.mxu0 0.0
  %4277 = vmatpush1.msra.mxu0 0.0
  %4278 = vmatprep.subr.mxu0 0.0
  %4279 = vmatpush1.msra.mxu0 0.0
  %4280 = vmatprep.subr.mxu0 0.0
  %4281 = vmatpush1.msra.mxu0 0.0
  %4282 = vmatprep.subr.mxu0 0.0
  %4283 = vmatpush1.msra.mxu0 0.0
  %4284 = vmatprep.mubr.f32.mxu0 0.0
  %v4285 = vand.u32 %v3831, 4294901760
  %4286 = vmatmul.mubr.f32.gmra.mrb[0].mxu0 %v4285
  %v4287 = vpop.f32.mrb[0].mxu0
  %v4288 = vadd.f32 %v4193, %v4287
  %v4289 = vpop.f32.mrb[0].mxu0
  %4290 = vdwg.mxu0
  %4291 = vmatprep.subr.mxu0 0.0
  %v4292 = vand.u32 %v538, 4294901760
  %4293 = vmatpush1.msra.mxu0 %v4292
  %4294 = vmatprep.subr.mxu0 0.0
  %v4295 = vand.u32 %v539, 4294901760
  %4296 = vmatpush1.msra.mxu0 %v4295
  %4297 = vmatprep.subr.mxu0 0.0
  %v4298 = vand.u32 %v540, 4294901760
  %4299 = vmatpush1.msra.mxu0 %v4298
  %4300 = vmatprep.subr.mxu0 0.0
  %v4301 = vand.u32 %v541, 4294901760
  %4302 = vmatpush1.msra.mxu0 %v4301
  %4303 = vmatprep.subr.mxu0 0.0
  %v4304 = vand.u32 %v542, 4294901760
  %4305 = vmatpush1.msra.mxu0 %v4304
  %4306 = vmatprep.subr.mxu0 0.0
  %v4307 = vand.u32 %v543, 4294901760
  %4308 = vmatpush1.msra.mxu0 %v4307
  %4309 = vmatprep.subr.mxu0 0.0
  %v4310 = vand.u32 %v544, 4294901760
  %4311 = vmatpush1.msra.mxu0 %v4310
  %4312 = vmatprep.subr.mxu0 0.0
  %v4313 = vand.u32 %v545, 4294901760
  %4314 = vmatpush1.msra.mxu0 %v4313
  %4315 = vmatprep.subr.mxu0 0.0
  %4316 = vmatpush1.msra.mxu0 0.0
  %4317 = vmatprep.subr.mxu0 0.0
  %4318 = vmatpush1.msra.mxu0 0.0
  %4319 = vmatprep.subr.mxu0 0.0
  %4320 = vmatpush1.msra.mxu0 0.0
  %4321 = vmatprep.subr.mxu0 0.0
  %4322 = vmatpush1.msra.mxu0 0.0
  %4323 = vmatprep.subr.mxu0 0.0
  %4324 = vmatpush1.msra.mxu0 0.0
  %4325 = vmatprep.subr.mxu0 0.0
  %4326 = vmatpush1.msra.mxu0 0.0
  %4327 = vmatprep.subr.mxu0 0.0
  %4328 = vmatpush1.msra.mxu0 0.0
  %4329 = vmatprep.subr.mxu0 0.0
  %4330 = vmatpush1.msra.mxu0 0.0
  %4331 = vmatprep.subr.mxu0 0.0
  %4332 = vmatpush1.msra.mxu0 0.0
  %4333 = vmatprep.subr.mxu0 0.0
  %4334 = vmatpush1.msra.mxu0 0.0
  %4335 = vmatprep.subr.mxu0 0.0
  %4336 = vmatpush1.msra.mxu0 0.0
  %4337 = vmatprep.subr.mxu0 0.0
  %4338 = vmatpush1.msra.mxu0 0.0
  %4339 = vmatprep.subr.mxu0 0.0
  %4340 = vmatpush1.msra.mxu0 0.0
  %4341 = vmatprep.subr.mxu0 0.0
  %4342 = vmatpush1.msra.mxu0 0.0
  %4343 = vmatprep.subr.mxu0 0.0
  %4344 = vmatpush1.msra.mxu0 0.0
  %4345 = vmatprep.subr.mxu0 0.0
  %4346 = vmatpush1.msra.mxu0 0.0
  %4347 = vmatprep.subr.mxu0 0.0
  %4348 = vmatpush1.msra.mxu0 0.0
  %4349 = vmatprep.subr.mxu0 0.0
  %4350 = vmatpush1.msra.mxu0 0.0
  %4351 = vmatprep.subr.mxu0 0.0
  %4352 = vmatpush1.msra.mxu0 0.0
  %4353 = vmatprep.subr.mxu0 0.0
  %4354 = vmatpush1.msra.mxu0 0.0
  %4355 = vmatprep.subr.mxu0 0.0
  %4356 = vmatpush1.msra.mxu0 0.0
  %4357 = vmatprep.subr.mxu0 0.0
  %4358 = vmatpush1.msra.mxu0 0.0
  %4359 = vmatprep.subr.mxu0 0.0
  %4360 = vmatpush1.msra.mxu0 0.0
  %4361 = vmatprep.subr.mxu0 0.0
  %4362 = vmatpush1.msra.mxu0 0.0
  %4363 = vmatprep.mubr.f32.mxu0 0.0
  %v4364 = vand.u32 %v3831, 4294901760
  %4365 = vmatmul.mubr.f32.gmra.mrb[0].mxu0 %v4364
  %v4366 = vpop.f32.mrb[0].mxu0
  %v4367 = vadd.f32 %v4288, %v4366
  %v4368 = vpop.f32.mrb[0].mxu0
  %4369 = vdwg.mxu0
  %v4370 = vadd.f32 %v3830, %v4367
  %v4371 = vtanh.pop %v4370
  %4373 = vrot.lane.b32.xlu0 %v4371, 96
  %v4374 = vpop.permute.xlu0 %4373
  %4376 = vst.msk [vmem:[#allocation3 + $0x4] sm:$0x2] %vm1640, %v4374
  %v4377 = vld [vmem:[#allocation2 + $0xe] sm:$0x3]
  %v4378 = vsel %vm535, %v4371, 0
  %4380 = vmatprep.subr.mxu0 0.0
  %v4381 = vand.u32 %v538, 4294901760
  %4382 = vmatpush1.msra.mxu0 %v4381
  %4383 = vmatprep.subr.mxu0 0.0
  %v4384 = vand.u32 %v539, 4294901760
  %4385 = vmatpush1.msra.mxu0 %v4384
  %4386 = vmatprep.subr.mxu0 0.0
  %v4387 = vand.u32 %v540, 4294901760
  %4388 = vmatpush1.msra.mxu0 %v4387
  %4389 = vmatprep.subr.mxu0 0.0
  %v4390 = vand.u32 %v541, 4294901760
  %4391 = vmatpush1.msra.mxu0 %v4390
  %4392 = vmatprep.subr.mxu0 0.0
  %v4393 = vand.u32 %v542, 4294901760
  %4394 = vmatpush1.msra.mxu0 %v4393
  %4395 = vmatprep.subr.mxu0 0.0
  %v4396 = vand.u32 %v543, 4294901760
  %4397 = vmatpush1.msra.mxu0 %v4396
  %4398 = vmatprep.subr.mxu0 0.0
  %v4399 = vand.u32 %v544, 4294901760
  %4400 = vmatpush1.msra.mxu0 %v4399
  %4401 = vmatprep.subr.mxu0 0.0
  %v4402 = vand.u32 %v545, 4294901760
  %4403 = vmatpush1.msra.mxu0 %v4402
  %4404 = vmatprep.subr.mxu0 0.0
  %4405 = vmatpush1.msra.mxu0 0.0
  %4406 = vmatprep.subr.mxu0 0.0
  %4407 = vmatpush1.msra.mxu0 0.0
  %4408 = vmatprep.subr.mxu0 0.0
  %4409 = vmatpush1.msra.mxu0 0.0
  %4410 = vmatprep.subr.mxu0 0.0
  %4411 = vmatpush1.msra.mxu0 0.0
  %4412 = vmatprep.subr.mxu0 0.0
  %4413 = vmatpush1.msra.mxu0 0.0
  %4414 = vmatprep.subr.mxu0 0.0
  %4415 = vmatpush1.msra.mxu0 0.0
  %4416 = vmatprep.subr.mxu0 0.0
  %4417 = vmatpush1.msra.mxu0 0.0
  %4418 = vmatprep.subr.mxu0 0.0
  %4419 = vmatpush1.msra.mxu0 0.0
  %4420 = vmatprep.subr.mxu0 0.0
  %4421 = vmatpush1.msra.mxu0 0.0
  %4422 = vmatprep.subr.mxu0 0.0
  %4423 = vmatpush1.msra.mxu0 0.0
  %4424 = vmatprep.subr.mxu0 0.0
  %4425 = vmatpush1.msra.mxu0 0.0
  %4426 = vmatprep.subr.mxu0 0.0
  %4427 = vmatpush1.msra.mxu0 0.0
  %4428 = vmatprep.subr.mxu0 0.0
  %4429 = vmatpush1.msra.mxu0 0.0
  %4430 = vmatprep.subr.mxu0 0.0
  %4431 = vmatpush1.msra.mxu0 0.0
  %4432 = vmatprep.subr.mxu0 0.0
  %4433 = vmatpush1.msra.mxu0 0.0
  %4434 = vmatprep.subr.mxu0 0.0
  %4435 = vmatpush1.msra.mxu0 0.0
  %4436 = vmatprep.subr.mxu0 0.0
  %4437 = vmatpush1.msra.mxu0 0.0
  %4438 = vmatprep.subr.mxu0 0.0
  %4439 = vmatpush1.msra.mxu0 0.0
  %4440 = vmatprep.subr.mxu0 0.0
  %4441 = vmatpush1.msra.mxu0 0.0
  %4442 = vmatprep.subr.mxu0 0.0
  %4443 = vmatpush1.msra.mxu0 0.0
  %4444 = vmatprep.subr.mxu0 0.0
  %4445 = vmatpush1.msra.mxu0 0.0
  %4446 = vmatprep.subr.mxu0 0.0
  %4447 = vmatpush1.msra.mxu0 0.0
  %4448 = vmatprep.subr.mxu0 0.0
  %4449 = vmatpush1.msra.mxu0 0.0
  %4450 = vmatprep.subr.mxu0 0.0
  %4451 = vmatpush1.msra.mxu0 0.0
  %4452 = vmatprep.mubr.f32.mxu0 0.0
  %v4453 = vand.u32 %v4378, 4294901760
  %v4454 = vsub.f32 %v4378, %v4453
  %v4455 = vand.u32 %v4454, 4294901760
  %v4456 = vsub.f32 %v4454, %v4455
  %v4457 = vand.u32 %v4456, 4294901760
  %4458 = vmatmul.mubr.f32.gmra.mrb[0].mxu0 %v4457
  %v4459 = vpop.f32.mrb[0].mxu0
  %v4460 = vadd.f32 0.0, %v4459
  %v4461 = vpop.f32.mrb[0].mxu0
  %4462 = vdwg.mxu0
  %4463 = vmatprep.subr.mxu0 0.0
  %v4464 = vand.u32 %v538, 4294901760
  %v4465 = vsub.f32 %v538, %v4464
  %v4466 = vand.u32 %v4465, 4294901760
  %v4467 = vsub.f32 %v4465, %v4466
  %v4468 = vand.u32 %v4467, 4294901760
  %4469 = vmatpush1.msra.mxu0 %v4468
  %4470 = vmatprep.subr.mxu0 0.0
  %v4471 = vand.u32 %v539, 4294901760
  %v4472 = vsub.f32 %v539, %v4471
  %v4473 = vand.u32 %v4472, 4294901760
  %v4474 = vsub.f32 %v4472, %v4473
  %v4475 = vand.u32 %v4474, 4294901760
  %4476 = vmatpush1.msra.mxu0 %v4475
  %4477 = vmatprep.subr.mxu0 0.0
  %v4478 = vand.u32 %v540, 4294901760
  %v4479 = vsub.f32 %v540, %v4478
  %v4480 = vand.u32 %v4479, 4294901760
  %v4481 = vsub.f32 %v4479, %v4480
  %v4482 = vand.u32 %v4481, 4294901760
  %4483 = vmatpush1.msra.mxu0 %v4482
  %4484 = vmatprep.subr.mxu0 0.0
  %v4485 = vand.u32 %v541, 4294901760
  %v4486 = vsub.f32 %v541, %v4485
  %v4487 = vand.u32 %v4486, 4294901760
  %v4488 = vsub.f32 %v4486, %v4487
  %v4489 = vand.u32 %v4488, 4294901760
  %4490 = vmatpush1.msra.mxu0 %v4489
  %4491 = vmatprep.subr.mxu0 0.0
  %v4492 = vand.u32 %v542, 4294901760
  %v4493 = vsub.f32 %v542, %v4492
  %v4494 = vand.u32 %v4493, 4294901760
  %v4495 = vsub.f32 %v4493, %v4494
  %v4496 = vand.u32 %v4495, 4294901760
  %4497 = vmatpush1.msra.mxu0 %v4496
  %4498 = vmatprep.subr.mxu0 0.0
  %v4499 = vand.u32 %v543, 4294901760
  %v4500 = vsub.f32 %v543, %v4499
  %v4501 = vand.u32 %v4500, 4294901760
  %v4502 = vsub.f32 %v4500, %v4501
  %v4503 = vand.u32 %v4502, 4294901760
  %4504 = vmatpush1.msra.mxu0 %v4503
  %4505 = vmatprep.subr.mxu0 0.0
  %v4506 = vand.u32 %v544, 4294901760
  %v4507 = vsub.f32 %v544, %v4506
  %v4508 = vand.u32 %v4507, 4294901760
  %v4509 = vsub.f32 %v4507, %v4508
  %v4510 = vand.u32 %v4509, 4294901760
  %4511 = vmatpush1.msra.mxu0 %v4510
  %4512 = vmatprep.subr.mxu0 0.0
  %v4513 = vand.u32 %v545, 4294901760
  %v4514 = vsub.f32 %v545, %v4513
  %v4515 = vand.u32 %v4514, 4294901760
  %v4516 = vsub.f32 %v4514, %v4515
  %v4517 = vand.u32 %v4516, 4294901760
  %4518 = vmatpush1.msra.mxu0 %v4517
  %4519 = vmatprep.subr.mxu0 0.0
  %4520 = vmatpush1.msra.mxu0 0.0
  %4521 = vmatprep.subr.mxu0 0.0
  %4522 = vmatpush1.msra.mxu0 0.0
  %4523 = vmatprep.subr.mxu0 0.0
  %4524 = vmatpush1.msra.mxu0 0.0
  %4525 = vmatprep.subr.mxu0 0.0
  %4526 = vmatpush1.msra.mxu0 0.0
  %4527 = vmatprep.subr.mxu0 0.0
  %4528 = vmatpush1.msra.mxu0 0.0
  %4529 = vmatprep.subr.mxu0 0.0
  %4530 = vmatpush1.msra.mxu0 0.0
  %4531 = vmatprep.subr.mxu0 0.0
  %4532 = vmatpush1.msra.mxu0 0.0
  %4533 = vmatprep.subr.mxu0 0.0
  %4534 = vmatpush1.msra.mxu0 0.0
  %4535 = vmatprep.subr.mxu0 0.0
  %4536 = vmatpush1.msra.mxu0 0.0
  %4537 = vmatprep.subr.mxu0 0.0
  %4538 = vmatpush1.msra.mxu0 0.0
  %4539 = vmatprep.subr.mxu0 0.0
  %4540 = vmatpush1.msra.mxu0 0.0
  %4541 = vmatprep.subr.mxu0 0.0
  %4542 = vmatpush1.msra.mxu0 0.0
  %4543 = vmatprep.subr.mxu0 0.0
  %4544 = vmatpush1.msra.mxu0 0.0
  %4545 = vmatprep.subr.mxu0 0.0
  %4546 = vmatpush1.msra.mxu0 0.0
  %4547 = vmatprep.subr.mxu0 0.0
  %4548 = vmatpush1.msra.mxu0 0.0
  %4549 = vmatprep.subr.mxu0 0.0
  %4550 = vmatpush1.msra.mxu0 0.0
  %4551 = vmatprep.subr.mxu0 0.0
  %4552 = vmatpush1.msra.mxu0 0.0
  %4553 = vmatprep.subr.mxu0 0.0
  %4554 = vmatpush1.msra.mxu0 0.0
  %4555 = vmatprep.subr.mxu0 0.0
  %4556 = vmatpush1.msra.mxu0 0.0
  %4557 = vmatprep.subr.mxu0 0.0
  %4558 = vmatpush1.msra.mxu0 0.0
  %4559 = vmatprep.subr.mxu0 0.0
  %4560 = vmatpush1.msra.mxu0 0.0
  %4561 = vmatprep.subr.mxu0 0.0
  %4562 = vmatpush1.msra.mxu0 0.0
  %4563 = vmatprep.subr.mxu0 0.0
  %4564 = vmatpush1.msra.mxu0 0.0
  %4565 = vmatprep.subr.mxu0 0.0
  %4566 = vmatpush1.msra.mxu0 0.0
  %4567 = vmatprep.mubr.f32.mxu0 0.0
  %v4568 = vand.u32 %v4378, 4294901760
  %4569 = vmatmul.mubr.f32.gmra.mrb[0].mxu0 %v4568
  %v4570 = vpop.f32.mrb[0].mxu0
  %v4571 = vadd.f32 %v4460, %v4570
  %v4572 = vpop.f32.mrb[0].mxu0
  %4573 = vdwg.mxu0
  %4574 = vmatprep.subr.mxu0 0.0
  %v4575 = vand.u32 %v538, 4294901760
  %v4576 = vsub.f32 %v538, %v4575
  %4577 = vmatpush1.msra.mxu0 %v4576
  %4578 = vmatprep.subr.mxu0 0.0
  %v4579 = vand.u32 %v539, 4294901760
  %v4580 = vsub.f32 %v539, %v4579
  %4581 = vmatpush1.msra.mxu0 %v4580
  %4582 = vmatprep.subr.mxu0 0.0
  %v4583 = vand.u32 %v540, 4294901760
  %v4584 = vsub.f32 %v540, %v4583
  %4585 = vmatpush1.msra.mxu0 %v4584
  %4586 = vmatprep.subr.mxu0 0.0
  %v4587 = vand.u32 %v541, 4294901760
  %v4588 = vsub.f32 %v541, %v4587
  %4589 = vmatpush1.msra.mxu0 %v4588
  %4590 = vmatprep.subr.mxu0 0.0
  %v4591 = vand.u32 %v542, 4294901760
  %v4592 = vsub.f32 %v542, %v4591
  %4593 = vmatpush1.msra.mxu0 %v4592
  %4594 = vmatprep.subr.mxu0 0.0
  %v4595 = vand.u32 %v543, 4294901760
  %v4596 = vsub.f32 %v543, %v4595
  %4597 = vmatpush1.msra.mxu0 %v4596
  %4598 = vmatprep.subr.mxu0 0.0
  %v4599 = vand.u32 %v544, 4294901760
  %v4600 = vsub.f32 %v544, %v4599
  %4601 = vmatpush1.msra.mxu0 %v4600
  %4602 = vmatprep.subr.mxu0 0.0
  %v4603 = vand.u32 %v545, 4294901760
  %v4604 = vsub.f32 %v545, %v4603
  %4605 = vmatpush1.msra.mxu0 %v4604
  %4606 = vmatprep.subr.mxu0 0.0
  %4607 = vmatpush1.msra.mxu0 0.0
  %4608 = vmatprep.subr.mxu0 0.0
  %4609 = vmatpush1.msra.mxu0 0.0
  %4610 = vmatprep.subr.mxu0 0.0
  %4611 = vmatpush1.msra.mxu0 0.0
  %4612 = vmatprep.subr.mxu0 0.0
  %4613 = vmatpush1.msra.mxu0 0.0
  %4614 = vmatprep.subr.mxu0 0.0
  %4615 = vmatpush1.msra.mxu0 0.0
  %4616 = vmatprep.subr.mxu0 0.0
  %4617 = vmatpush1.msra.mxu0 0.0
  %4618 = vmatprep.subr.mxu0 0.0
  %4619 = vmatpush1.msra.mxu0 0.0
  %4620 = vmatprep.subr.mxu0 0.0
  %4621 = vmatpush1.msra.mxu0 0.0
  %4622 = vmatprep.subr.mxu0 0.0
  %4623 = vmatpush1.msra.mxu0 0.0
  %4624 = vmatprep.subr.mxu0 0.0
  %4625 = vmatpush1.msra.mxu0 0.0
  %4626 = vmatprep.subr.mxu0 0.0
  %4627 = vmatpush1.msra.mxu0 0.0
  %4628 = vmatprep.subr.mxu0 0.0
  %4629 = vmatpush1.msra.mxu0 0.0
  %4630 = vmatprep.subr.mxu0 0.0
  %4631 = vmatpush1.msra.mxu0 0.0
  %4632 = vmatprep.subr.mxu0 0.0
  %4633 = vmatpush1.msra.mxu0 0.0
  %4634 = vmatprep.subr.mxu0 0.0
  %4635 = vmatpush1.msra.mxu0 0.0
  %4636 = vmatprep.subr.mxu0 0.0
  %4637 = vmatpush1.msra.mxu0 0.0
  %4638 = vmatprep.subr.mxu0 0.0
  %4639 = vmatpush1.msra.mxu0 0.0
  %4640 = vmatprep.subr.mxu0 0.0
  %4641 = vmatpush1.msra.mxu0 0.0
  %4642 = vmatprep.subr.mxu0 0.0
  %4643 = vmatpush1.msra.mxu0 0.0
  %4644 = vmatprep.subr.mxu0 0.0
  %4645 = vmatpush1.msra.mxu0 0.0
  %4646 = vmatprep.subr.mxu0 0.0
  %4647 = vmatpush1.msra.mxu0 0.0
  %4648 = vmatprep.subr.mxu0 0.0
  %4649 = vmatpush1.msra.mxu0 0.0
  %4650 = vmatprep.subr.mxu0 0.0
  %4651 = vmatpush1.msra.mxu0 0.0
  %4652 = vmatprep.subr.mxu0 0.0
  %4653 = vmatpush1.msra.mxu0 0.0
  %4654 = vmatprep.mubr.f32.mxu0 0.0
  %v4655 = vand.u32 %v4378, 4294901760
  %v4656 = vsub.f32 %v4378, %v4655
  %4657 = vmatmul.mubr.f32.gmra.mrb[0].mxu0 %v4656
  %v4658 = vpop.f32.mrb[0].mxu0
  %v4659 = vadd.f32 %v4571, %v4658
  %v4660 = vpop.f32.mrb[0].mxu0
  %4661 = vdwg.mxu0
  %4662 = vmatprep.subr.mxu0 0.0
  %v4663 = vand.u32 %v538, 4294901760
  %4664 = vmatpush1.msra.mxu0 %v4663
  %4665 = vmatprep.subr.mxu0 0.0
  %v4666 = vand.u32 %v539, 4294901760
  %4667 = vmatpush1.msra.mxu0 %v4666
  %4668 = vmatprep.subr.mxu0 0.0
  %v4669 = vand.u32 %v540, 4294901760
  %4670 = vmatpush1.msra.mxu0 %v4669
  %4671 = vmatprep.subr.mxu0 0.0
  %v4672 = vand.u32 %v541, 4294901760
  %4673 = vmatpush1.msra.mxu0 %v4672
  %4674 = vmatprep.subr.mxu0 0.0
  %v4675 = vand.u32 %v542, 4294901760
  %4676 = vmatpush1.msra.mxu0 %v4675
  %4677 = vmatprep.subr.mxu0 0.0
  %v4678 = vand.u32 %v543, 4294901760
  %4679 = vmatpush1.msra.mxu0 %v4678
  %4680 = vmatprep.subr.mxu0 0.0
  %v4681 = vand.u32 %v544, 4294901760
  %4682 = vmatpush1.msra.mxu0 %v4681
  %4683 = vmatprep.subr.mxu0 0.0
  %v4684 = vand.u32 %v545, 4294901760
  %4685 = vmatpush1.msra.mxu0 %v4684
  %4686 = vmatprep.subr.mxu0 0.0
  %4687 = vmatpush1.msra.mxu0 0.0
  %4688 = vmatprep.subr.mxu0 0.0
  %4689 = vmatpush1.msra.mxu0 0.0
  %4690 = vmatprep.subr.mxu0 0.0
  %4691 = vmatpush1.msra.mxu0 0.0
  %4692 = vmatprep.subr.mxu0 0.0
  %4693 = vmatpush1.msra.mxu0 0.0
  %4694 = vmatprep.subr.mxu0 0.0
  %4695 = vmatpush1.msra.mxu0 0.0
  %4696 = vmatprep.subr.mxu0 0.0
  %4697 = vmatpush1.msra.mxu0 0.0
  %4698 = vmatprep.subr.mxu0 0.0
  %4699 = vmatpush1.msra.mxu0 0.0
  %4700 = vmatprep.subr.mxu0 0.0
  %4701 = vmatpush1.msra.mxu0 0.0
  %4702 = vmatprep.subr.mxu0 0.0
  %4703 = vmatpush1.msra.mxu0 0.0
  %4704 = vmatprep.subr.mxu0 0.0
  %4705 = vmatpush1.msra.mxu0 0.0
  %4706 = vmatprep.subr.mxu0 0.0
  %4707 = vmatpush1.msra.mxu0 0.0
  %4708 = vmatprep.subr.mxu0 0.0
  %4709 = vmatpush1.msra.mxu0 0.0
  %4710 = vmatprep.subr.mxu0 0.0
  %4711 = vmatpush1.msra.mxu0 0.0
  %4712 = vmatprep.subr.mxu0 0.0
  %4713 = vmatpush1.msra.mxu0 0.0
  %4714 = vmatprep.subr.mxu0 0.0
  %4715 = vmatpush1.msra.mxu0 0.0
  %4716 = vmatprep.subr.mxu0 0.0
  %4717 = vmatpush1.msra.mxu0 0.0
  %4718 = vmatprep.subr.mxu0 0.0
  %4719 = vmatpush1.msra.mxu0 0.0
  %4720 = vmatprep.subr.mxu0 0.0
  %4721 = vmatpush1.msra.mxu0 0.0
  %4722 = vmatprep.subr.mxu0 0.0
  %4723 = vmatpush1.msra.mxu0 0.0
  %4724 = vmatprep.subr.mxu0 0.0
  %4725 = vmatpush1.msra.mxu0 0.0
  %4726 = vmatprep.subr.mxu0 0.0
  %4727 = vmatpush1.msra.mxu0 0.0
  %4728 = vmatprep.subr.mxu0 0.0
  %4729 = vmatpush1.msra.mxu0 0.0
  %4730 = vmatprep.subr.mxu0 0.0
  %4731 = vmatpush1.msra.mxu0 0.0
  %4732 = vmatprep.subr.mxu0 0.0
  %4733 = vmatpush1.msra.mxu0 0.0
  %4734 = vmatprep.mubr.f32.mxu0 0.0
  %v4735 = vand.u32 %v4378, 4294901760
  %v4736 = vsub.f32 %v4378, %v4735
  %v4737 = vand.u32 %v4736, 4294901760
  %4738 = vmatmul.mubr.f32.gmra.mrb[0].mxu0 %v4737
  %v4739 = vpop.f32.mrb[0].mxu0
  %v4740 = vadd.f32 %v4659, %v4739
  %v4741 = vpop.f32.mrb[0].mxu0
  %4742 = vdwg.mxu0
  %4743 = vmatprep.subr.mxu0 0.0
  %v4744 = vand.u32 %v538, 4294901760
  %v4745 = vsub.f32 %v538, %v4744
  %v4746 = vand.u32 %v4745, 4294901760
  %4747 = vmatpush1.msra.mxu0 %v4746
  %4748 = vmatprep.subr.mxu0 0.0
  %v4749 = vand.u32 %v539, 4294901760
  %v4750 = vsub.f32 %v539, %v4749
  %v4751 = vand.u32 %v4750, 4294901760
  %4752 = vmatpush1.msra.mxu0 %v4751
  %4753 = vmatprep.subr.mxu0 0.0
  %v4754 = vand.u32 %v540, 4294901760
  %v4755 = vsub.f32 %v540, %v4754
  %v4756 = vand.u32 %v4755, 4294901760
  %4757 = vmatpush1.msra.mxu0 %v4756
  %4758 = vmatprep.subr.mxu0 0.0
  %v4759 = vand.u32 %v541, 4294901760
  %v4760 = vsub.f32 %v541, %v4759
  %v4761 = vand.u32 %v4760, 4294901760
  %4762 = vmatpush1.msra.mxu0 %v4761
  %4763 = vmatprep.subr.mxu0 0.0
  %v4764 = vand.u32 %v542, 4294901760
  %v4765 = vsub.f32 %v542, %v4764
  %v4766 = vand.u32 %v4765, 4294901760
  %4767 = vmatpush1.msra.mxu0 %v4766
  %4768 = vmatprep.subr.mxu0 0.0
  %v4769 = vand.u32 %v543, 4294901760
  %v4770 = vsub.f32 %v543, %v4769
  %v4771 = vand.u32 %v4770, 4294901760
  %4772 = vmatpush1.msra.mxu0 %v4771
  %4773 = vmatprep.subr.mxu0 0.0
  %v4774 = vand.u32 %v544, 4294901760
  %v4775 = vsub.f32 %v544, %v4774
  %v4776 = vand.u32 %v4775, 4294901760
  %4777 = vmatpush1.msra.mxu0 %v4776
  %4778 = vmatprep.subr.mxu0 0.0
  %v4779 = vand.u32 %v545, 4294901760
  %v4780 = vsub.f32 %v545, %v4779
  %v4781 = vand.u32 %v4780, 4294901760
  %4782 = vmatpush1.msra.mxu0 %v4781
  %4783 = vmatprep.subr.mxu0 0.0
  %4784 = vmatpush1.msra.mxu0 0.0
  %4785 = vmatprep.subr.mxu0 0.0
  %4786 = vmatpush1.msra.mxu0 0.0
  %4787 = vmatprep.subr.mxu0 0.0
  %4788 = vmatpush1.msra.mxu0 0.0
  %4789 = vmatprep.subr.mxu0 0.0
  %4790 = vmatpush1.msra.mxu0 0.0
  %4791 = vmatprep.subr.mxu0 0.0
  %4792 = vmatpush1.msra.mxu0 0.0
  %4793 = vmatprep.subr.mxu0 0.0
  %4794 = vmatpush1.msra.mxu0 0.0
  %4795 = vmatprep.subr.mxu0 0.0
  %4796 = vmatpush1.msra.mxu0 0.0
  %4797 = vmatprep.subr.mxu0 0.0
  %4798 = vmatpush1.msra.mxu0 0.0
  %4799 = vmatprep.subr.mxu0 0.0
  %4800 = vmatpush1.msra.mxu0 0.0
  %4801 = vmatprep.subr.mxu0 0.0
  %4802 = vmatpush1.msra.mxu0 0.0
  %4803 = vmatprep.subr.mxu0 0.0
  %4804 = vmatpush1.msra.mxu0 0.0
  %4805 = vmatprep.subr.mxu0 0.0
  %4806 = vmatpush1.msra.mxu0 0.0
  %4807 = vmatprep.subr.mxu0 0.0
  %4808 = vmatpush1.msra.mxu0 0.0
  %4809 = vmatprep.subr.mxu0 0.0
  %4810 = vmatpush1.msra.mxu0 0.0
  %4811 = vmatprep.subr.mxu0 0.0
  %4812 = vmatpush1.msra.mxu0 0.0
  %4813 = vmatprep.subr.mxu0 0.0
  %4814 = vmatpush1.msra.mxu0 0.0
  %4815 = vmatprep.subr.mxu0 0.0
  %4816 = vmatpush1.msra.mxu0 0.0
  %4817 = vmatprep.subr.mxu0 0.0
  %4818 = vmatpush1.msra.mxu0 0.0
  %4819 = vmatprep.subr.mxu0 0.0
  %4820 = vmatpush1.msra.mxu0 0.0
  %4821 = vmatprep.subr.mxu0 0.0
  %4822 = vmatpush1.msra.mxu0 0.0
  %4823 = vmatprep.subr.mxu0 0.0
  %4824 = vmatpush1.msra.mxu0 0.0
  %4825 = vmatprep.subr.mxu0 0.0
  %4826 = vmatpush1.msra.mxu0 0.0
  %4827 = vmatprep.subr.mxu0 0.0
  %4828 = vmatpush1.msra.mxu0 0.0
  %4829 = vmatprep.subr.mxu0 0.0
  %4830 = vmatpush1.msra.mxu0 0.0
  %4831 = vmatprep.mubr.f32.mxu0 0.0
  %v4832 = vand.u32 %v4378, 4294901760
  %4833 = vmatmul.mubr.f32.gmra.mrb[0].mxu0 %v4832
  %v4834 = vpop.f32.mrb[0].mxu0
  %v4835 = vadd.f32 %v4740, %v4834
  %v4836 = vpop.f32.mrb[0].mxu0
  %4837 = vdwg.mxu0
  %4838 = vmatprep.subr.mxu0 0.0
  %v4839 = vand.u32 %v538, 4294901760
  %4840 = vmatpush1.msra.mxu0 %v4839
  %4841 = vmatprep.subr.mxu0 0.0
  %v4842 = vand.u32 %v539, 4294901760
  %4843 = vmatpush1.msra.mxu0 %v4842
  %4844 = vmatprep.subr.mxu0 0.0
  %v4845 = vand.u32 %v540, 4294901760
  %4846 = vmatpush1.msra.mxu0 %v4845
  %4847 = vmatprep.subr.mxu0 0.0
  %v4848 = vand.u32 %v541, 4294901760
  %4849 = vmatpush1.msra.mxu0 %v4848
  %4850 = vmatprep.subr.mxu0 0.0
  %v4851 = vand.u32 %v542, 4294901760
  %4852 = vmatpush1.msra.mxu0 %v4851
  %4853 = vmatprep.subr.mxu0 0.0
  %v4854 = vand.u32 %v543, 4294901760
  %4855 = vmatpush1.msra.mxu0 %v4854
  %4856 = vmatprep.subr.mxu0 0.0
  %v4857 = vand.u32 %v544, 4294901760
  %4858 = vmatpush1.msra.mxu0 %v4857
  %4859 = vmatprep.subr.mxu0 0.0
  %v4860 = vand.u32 %v545, 4294901760
  %4861 = vmatpush1.msra.mxu0 %v4860
  %4862 = vmatprep.subr.mxu0 0.0
  %4863 = vmatpush1.msra.mxu0 0.0
  %4864 = vmatprep.subr.mxu0 0.0
  %4865 = vmatpush1.msra.mxu0 0.0
  %4866 = vmatprep.subr.mxu0 0.0
  %4867 = vmatpush1.msra.mxu0 0.0
  %4868 = vmatprep.subr.mxu0 0.0
  %4869 = vmatpush1.msra.mxu0 0.0
  %4870 = vmatprep.subr.mxu0 0.0
  %4871 = vmatpush1.msra.mxu0 0.0
  %4872 = vmatprep.subr.mxu0 0.0
  %4873 = vmatpush1.msra.mxu0 0.0
  %4874 = vmatprep.subr.mxu0 0.0
  %4875 = vmatpush1.msra.mxu0 0.0
  %4876 = vmatprep.subr.mxu0 0.0
  %4877 = vmatpush1.msra.mxu0 0.0
  %4878 = vmatprep.subr.mxu0 0.0
  %4879 = vmatpush1.msra.mxu0 0.0
  %4880 = vmatprep.subr.mxu0 0.0
  %4881 = vmatpush1.msra.mxu0 0.0
  %4882 = vmatprep.subr.mxu0 0.0
  %4883 = vmatpush1.msra.mxu0 0.0
  %4884 = vmatprep.subr.mxu0 0.0
  %4885 = vmatpush1.msra.mxu0 0.0
  %4886 = vmatprep.subr.mxu0 0.0
  %4887 = vmatpush1.msra.mxu0 0.0
  %4888 = vmatprep.subr.mxu0 0.0
  %4889 = vmatpush1.msra.mxu0 0.0
  %4890 = vmatprep.subr.mxu0 0.0
  %4891 = vmatpush1.msra.mxu0 0.0
  %4892 = vmatprep.subr.mxu0 0.0
  %4893 = vmatpush1.msra.mxu0 0.0
  %4894 = vmatprep.subr.mxu0 0.0
  %4895 = vmatpush1.msra.mxu0 0.0
  %4896 = vmatprep.subr.mxu0 0.0
  %4897 = vmatpush1.msra.mxu0 0.0
  %4898 = vmatprep.subr.mxu0 0.0
  %4899 = vmatpush1.msra.mxu0 0.0
  %4900 = vmatprep.subr.mxu0 0.0
  %4901 = vmatpush1.msra.mxu0 0.0
  %4902 = vmatprep.subr.mxu0 0.0
  %4903 = vmatpush1.msra.mxu0 0.0
  %4904 = vmatprep.subr.mxu0 0.0
  %4905 = vmatpush1.msra.mxu0 0.0
  %4906 = vmatprep.subr.mxu0 0.0
  %4907 = vmatpush1.msra.mxu0 0.0
  %4908 = vmatprep.subr.mxu0 0.0
  %4909 = vmatpush1.msra.mxu0 0.0
  %4910 = vmatprep.mubr.f32.mxu0 0.0
  %v4911 = vand.u32 %v4378, 4294901760
  %4912 = vmatmul.mubr.f32.gmra.mrb[0].mxu0 %v4911
  %v4913 = vpop.f32.mrb[0].mxu0
  %v4914 = vadd.f32 %v4835, %v4913
  %v4915 = vpop.f32.mrb[0].mxu0
  %4916 = vdwg.mxu0
  %v4917 = vadd.f32 %v4377, %v4914
  %v4918 = vtanh.pop %v4917
  %4920 = vrot.lane.b32.xlu0 %v4918, 96
  %v4921 = vpop.permute.xlu0 %4920
  %4923 = vst.msk [vmem:[#allocation3 + $0x5] sm:$0x2] %vm1640, %v4921
  %v4924 = vld [vmem:[#allocation2 + $0xe] sm:$0x3]
  %v4925 = vsel %vm535, %v4918, 0
  %4927 = vmatprep.subr.mxu0 0.0
  %v4928 = vand.u32 %v538, 4294901760
  %4929 = vmatpush1.msra.mxu0 %v4928
  %4930 = vmatprep.subr.mxu0 0.0
  %v4931 = vand.u32 %v539, 4294901760
  %4932 = vmatpush1.msra.mxu0 %v4931
  %4933 = vmatprep.subr.mxu0 0.0
  %v4934 = vand.u32 %v540, 4294901760
  %4935 = vmatpush1.msra.mxu0 %v4934
  %4936 = vmatprep.subr.mxu0 0.0
  %v4937 = vand.u32 %v541, 4294901760
  %4938 = vmatpush1.msra.mxu0 %v4937
  %4939 = vmatprep.subr.mxu0 0.0
  %v4940 = vand.u32 %v542, 4294901760
  %4941 = vmatpush1.msra.mxu0 %v4940
  %4942 = vmatprep.subr.mxu0 0.0
  %v4943 = vand.u32 %v543, 4294901760
  %4944 = vmatpush1.msra.mxu0 %v4943
  %4945 = vmatprep.subr.mxu0 0.0
  %v4946 = vand.u32 %v544, 4294901760
  %4947 = vmatpush1.msra.mxu0 %v4946
  %4948 = vmatprep.subr.mxu0 0.0
  %v4949 = vand.u32 %v545, 4294901760
  %4950 = vmatpush1.msra.mxu0 %v4949
  %4951 = vmatprep.subr.mxu0 0.0
  %4952 = vmatpush1.msra.mxu0 0.0
  %4953 = vmatprep.subr.mxu0 0.0
  %4954 = vmatpush1.msra.mxu0 0.0
  %4955 = vmatprep.subr.mxu0 0.0
  %4956 = vmatpush1.msra.mxu0 0.0
  %4957 = vmatprep.subr.mxu0 0.0
  %4958 = vmatpush1.msra.mxu0 0.0
  %4959 = vmatprep.subr.mxu0 0.0
  %4960 = vmatpush1.msra.mxu0 0.0
  %4961 = vmatprep.subr.mxu0 0.0
  %4962 = vmatpush1.msra.mxu0 0.0
  %4963 = vmatprep.subr.mxu0 0.0
  %4964 = vmatpush1.msra.mxu0 0.0
  %4965 = vmatprep.subr.mxu0 0.0
  %4966 = vmatpush1.msra.mxu0 0.0
  %4967 = vmatprep.subr.mxu0 0.0
  %4968 = vmatpush1.msra.mxu0 0.0
  %4969 = vmatprep.subr.mxu0 0.0
  %4970 = vmatpush1.msra.mxu0 0.0
  %4971 = vmatprep.subr.mxu0 0.0
  %4972 = vmatpush1.msra.mxu0 0.0
  %4973 = vmatprep.subr.mxu0 0.0
  %4974 = vmatpush1.msra.mxu0 0.0
  %4975 = vmatprep.subr.mxu0 0.0
  %4976 = vmatpush1.msra.mxu0 0.0
  %4977 = vmatprep.subr.mxu0 0.0
  %4978 = vmatpush1.msra.mxu0 0.0
  %4979 = vmatprep.subr.mxu0 0.0
  %4980 = vmatpush1.msra.mxu0 0.0
  %4981 = vmatprep.subr.mxu0 0.0
  %4982 = vmatpush1.msra.mxu0 0.0
  %4983 = vmatprep.subr.mxu0 0.0
  %4984 = vmatpush1.msra.mxu0 0.0
  %4985 = vmatprep.subr.mxu0 0.0
  %4986 = vmatpush1.msra.mxu0 0.0
  %4987 = vmatprep.subr.mxu0 0.0
  %4988 = vmatpush1.msra.mxu0 0.0
  %4989 = vmatprep.subr.mxu0 0.0
  %4990 = vmatpush1.msra.mxu0 0.0
  %4991 = vmatprep.subr.mxu0 0.0
  %4992 = vmatpush1.msra.mxu0 0.0
  %4993 = vmatprep.subr.mxu0 0.0
  %4994 = vmatpush1.msra.mxu0 0.0
  %4995 = vmatprep.subr.mxu0 0.0
  %4996 = vmatpush1.msra.mxu0 0.0
  %4997 = vmatprep.subr.mxu0 0.0
  %4998 = vmatpush1.msra.mxu0 0.0
  %4999 = vmatprep.mubr.f32.mxu0 0.0
  %v5000 = vand.u32 %v4925, 4294901760
  %v5001 = vsub.f32 %v4925, %v5000
  %v5002 = vand.u32 %v5001, 4294901760
  %v5003 = vsub.f32 %v5001, %v5002
  %v5004 = vand.u32 %v5003, 4294901760
  %5005 = vmatmul.mubr.f32.gmra.mrb[0].mxu0 %v5004
  %v5006 = vpop.f32.mrb[0].mxu0
  %v5007 = vadd.f32 0.0, %v5006
  %v5008 = vpop.f32.mrb[0].mxu0
  %5009 = vdwg.mxu0
  %5010 = vmatprep.subr.mxu0 0.0
  %v5011 = vand.u32 %v538, 4294901760
  %v5012 = vsub.f32 %v538, %v5011
  %v5013 = vand.u32 %v5012, 4294901760
  %v5014 = vsub.f32 %v5012, %v5013
  %v5015 = vand.u32 %v5014, 4294901760
  %5016 = vmatpush1.msra.mxu0 %v5015
  %5017 = vmatprep.subr.mxu0 0.0
  %v5018 = vand.u32 %v539, 4294901760
  %v5019 = vsub.f32 %v539, %v5018
  %v5020 = vand.u32 %v5019, 4294901760
  %v5021 = vsub.f32 %v5019, %v5020
  %v5022 = vand.u32 %v5021, 4294901760
  %5023 = vmatpush1.msra.mxu0 %v5022
  %5024 = vmatprep.subr.mxu0 0.0
  %v5025 = vand.u32 %v540, 4294901760
  %v5026 = vsub.f32 %v540, %v5025
  %v5027 = vand.u32 %v5026, 4294901760
  %v5028 = vsub.f32 %v5026, %v5027
  %v5029 = vand.u32 %v5028, 4294901760
  %5030 = vmatpush1.msra.mxu0 %v5029
  %5031 = vmatprep.subr.mxu0 0.0
  %v5032 = vand.u32 %v541, 4294901760
  %v5033 = vsub.f32 %v541, %v5032
  %v5034 = vand.u32 %v5033, 4294901760
  %v5035 = vsub.f32 %v5033, %v5034
  %v5036 = vand.u32 %v5035, 4294901760
  %5037 = vmatpush1.msra.mxu0 %v5036
  %5038 = vmatprep.subr.mxu0 0.0
  %v5039 = vand.u32 %v542, 4294901760
  %v5040 = vsub.f32 %v542, %v5039
  %v5041 = vand.u32 %v5040, 4294901760
  %v5042 = vsub.f32 %v5040, %v5041
  %v5043 = vand.u32 %v5042, 4294901760
  %5044 = vmatpush1.msra.mxu0 %v5043
  %5045 = vmatprep.subr.mxu0 0.0
  %v5046 = vand.u32 %v543, 4294901760
  %v5047 = vsub.f32 %v543, %v5046
  %v5048 = vand.u32 %v5047, 4294901760
  %v5049 = vsub.f32 %v5047, %v5048
  %v5050 = vand.u32 %v5049, 4294901760
  %5051 = vmatpush1.msra.mxu0 %v5050
  %5052 = vmatprep.subr.mxu0 0.0
  %v5053 = vand.u32 %v544, 4294901760
  %v5054 = vsub.f32 %v544, %v5053
  %v5055 = vand.u32 %v5054, 4294901760
  %v5056 = vsub.f32 %v5054, %v5055
  %v5057 = vand.u32 %v5056, 4294901760
  %5058 = vmatpush1.msra.mxu0 %v5057
  %5059 = vmatprep.subr.mxu0 0.0
  %v5060 = vand.u32 %v545, 4294901760
  %v5061 = vsub.f32 %v545, %v5060
  %v5062 = vand.u32 %v5061, 4294901760
  %v5063 = vsub.f32 %v5061, %v5062
  %v5064 = vand.u32 %v5063, 4294901760
  %5065 = vmatpush1.msra.mxu0 %v5064
  %5066 = vmatprep.subr.mxu0 0.0
  %5067 = vmatpush1.msra.mxu0 0.0
  %5068 = vmatprep.subr.mxu0 0.0
  %5069 = vmatpush1.msra.mxu0 0.0
  %5070 = vmatprep.subr.mxu0 0.0
  %5071 = vmatpush1.msra.mxu0 0.0
  %5072 = vmatprep.subr.mxu0 0.0
  %5073 = vmatpush1.msra.mxu0 0.0
  %5074 = vmatprep.subr.mxu0 0.0
  %5075 = vmatpush1.msra.mxu0 0.0
  %5076 = vmatprep.subr.mxu0 0.0
  %5077 = vmatpush1.msra.mxu0 0.0
  %5078 = vmatprep.subr.mxu0 0.0
  %5079 = vmatpush1.msra.mxu0 0.0
  %5080 = vmatprep.subr.mxu0 0.0
  %5081 = vmatpush1.msra.mxu0 0.0
  %5082 = vmatprep.subr.mxu0 0.0
  %5083 = vmatpush1.msra.mxu0 0.0
  %5084 = vmatprep.subr.mxu0 0.0
  %5085 = vmatpush1.msra.mxu0 0.0
  %5086 = vmatprep.subr.mxu0 0.0
  %5087 = vmatpush1.msra.mxu0 0.0
  %5088 = vmatprep.subr.mxu0 0.0
  %5089 = vmatpush1.msra.mxu0 0.0
  %5090 = vmatprep.subr.mxu0 0.0
  %5091 = vmatpush1.msra.mxu0 0.0
  %5092 = vmatprep.subr.mxu0 0.0
  %5093 = vmatpush1.msra.mxu0 0.0
  %5094 = vmatprep.subr.mxu0 0.0
  %5095 = vmatpush1.msra.mxu0 0.0
  %5096 = vmatprep.subr.mxu0 0.0
  %5097 = vmatpush1.msra.mxu0 0.0
  %5098 = vmatprep.subr.mxu0 0.0
  %5099 = vmatpush1.msra.mxu0 0.0
  %5100 = vmatprep.subr.mxu0 0.0
  %5101 = vmatpush1.msra.mxu0 0.0
  %5102 = vmatprep.subr.mxu0 0.0
  %5103 = vmatpush1.msra.mxu0 0.0
  %5104 = vmatprep.subr.mxu0 0.0
  %5105 = vmatpush1.msra.mxu0 0.0
  %5106 = vmatprep.subr.mxu0 0.0
  %5107 = vmatpush1.msra.mxu0 0.0
  %5108 = vmatprep.subr.mxu0 0.0
  %5109 = vmatpush1.msra.mxu0 0.0
  %5110 = vmatprep.subr.mxu0 0.0
  %5111 = vmatpush1.msra.mxu0 0.0
  %5112 = vmatprep.subr.mxu0 0.0
  %5113 = vmatpush1.msra.mxu0 0.0
  %5114 = vmatprep.mubr.f32.mxu0 0.0
  %v5115 = vand.u32 %v4925, 4294901760
  %5116 = vmatmul.mubr.f32.gmra.mrb[0].mxu0 %v5115
  %v5117 = vpop.f32.mrb[0].mxu0
  %v5118 = vadd.f32 %v5007, %v5117
  %v5119 = vpop.f32.mrb[0].mxu0
  %5120 = vdwg.mxu0
  %5121 = vmatprep.subr.mxu0 0.0
  %v5122 = vand.u32 %v538, 4294901760
  %v5123 = vsub.f32 %v538, %v5122
  %5124 = vmatpush1.msra.mxu0 %v5123
  %5125 = vmatprep.subr.mxu0 0.0
  %v5126 = vand.u32 %v539, 4294901760
  %v5127 = vsub.f32 %v539, %v5126
  %5128 = vmatpush1.msra.mxu0 %v5127
  %5129 = vmatprep.subr.mxu0 0.0
  %v5130 = vand.u32 %v540, 4294901760
  %v5131 = vsub.f32 %v540, %v5130
  %5132 = vmatpush1.msra.mxu0 %v5131
  %5133 = vmatprep.subr.mxu0 0.0
  %v5134 = vand.u32 %v541, 4294901760
  %v5135 = vsub.f32 %v541, %v5134
  %5136 = vmatpush1.msra.mxu0 %v5135
  %5137 = vmatprep.subr.mxu0 0.0
  %v5138 = vand.u32 %v542, 4294901760
  %v5139 = vsub.f32 %v542, %v5138
  %5140 = vmatpush1.msra.mxu0 %v5139
  %5141 = vmatprep.subr.mxu0 0.0
  %v5142 = vand.u32 %v543, 4294901760
  %v5143 = vsub.f32 %v543, %v5142
  %5144 = vmatpush1.msra.mxu0 %v5143
  %5145 = vmatprep.subr.mxu0 0.0
  %v5146 = vand.u32 %v544, 4294901760
  %v5147 = vsub.f32 %v544, %v5146
  %5148 = vmatpush1.msra.mxu0 %v5147
  %5149 = vmatprep.subr.mxu0 0.0
  %v5150 = vand.u32 %v545, 4294901760
  %v5151 = vsub.f32 %v545, %v5150
  %5152 = vmatpush1.msra.mxu0 %v5151
  %5153 = vmatprep.subr.mxu0 0.0
  %5154 = vmatpush1.msra.mxu0 0.0
  %5155 = vmatprep.subr.mxu0 0.0
  %5156 = vmatpush1.msra.mxu0 0.0
  %5157 = vmatprep.subr.mxu0 0.0
  %5158 = vmatpush1.msra.mxu0 0.0
  %5159 = vmatprep.subr.mxu0 0.0
  %5160 = vmatpush1.msra.mxu0 0.0
  %5161 = vmatprep.subr.mxu0 0.0
  %5162 = vmatpush1.msra.mxu0 0.0
  %5163 = vmatprep.subr.mxu0 0.0
  %5164 = vmatpush1.msra.mxu0 0.0
  %5165 = vmatprep.subr.mxu0 0.0
  %5166 = vmatpush1.msra.mxu0 0.0
  %5167 = vmatprep.subr.mxu0 0.0
  %5168 = vmatpush1.msra.mxu0 0.0
  %5169 = vmatprep.subr.mxu0 0.0
  %5170 = vmatpush1.msra.mxu0 0.0
  %5171 = vmatprep.subr.mxu0 0.0
  %5172 = vmatpush1.msra.mxu0 0.0
  %5173 = vmatprep.subr.mxu0 0.0
  %5174 = vmatpush1.msra.mxu0 0.0
  %5175 = vmatprep.subr.mxu0 0.0
  %5176 = vmatpush1.msra.mxu0 0.0
  %5177 = vmatprep.subr.mxu0 0.0
  %5178 = vmatpush1.msra.mxu0 0.0
  %5179 = vmatprep.subr.mxu0 0.0
  %5180 = vmatpush1.msra.mxu0 0.0
  %5181 = vmatprep.subr.mxu0 0.0
  %5182 = vmatpush1.msra.mxu0 0.0
  %5183 = vmatprep.subr.mxu0 0.0
  %5184 = vmatpush1.msra.mxu0 0.0
  %5185 = vmatprep.subr.mxu0 0.0
  %5186 = vmatpush1.msra.mxu0 0.0
  %5187 = vmatprep.subr.mxu0 0.0
  %5188 = vmatpush1.msra.mxu0 0.0
  %5189 = vmatprep.subr.mxu0 0.0
  %5190 = vmatpush1.msra.mxu0 0.0
  %5191 = vmatprep.subr.mxu0 0.0
  %5192 = vmatpush1.msra.mxu0 0.0
  %5193 = vmatprep.subr.mxu0 0.0
  %5194 = vmatpush1.msra.mxu0 0.0
  %5195 = vmatprep.subr.mxu0 0.0
  %5196 = vmatpush1.msra.mxu0 0.0
  %5197 = vmatprep.subr.mxu0 0.0
  %5198 = vmatpush1.msra.mxu0 0.0
  %5199 = vmatprep.subr.mxu0 0.0
  %5200 = vmatpush1.msra.mxu0 0.0
  %5201 = vmatprep.mubr.f32.mxu0 0.0
  %v5202 = vand.u32 %v4925, 4294901760
  %v5203 = vsub.f32 %v4925, %v5202
  %5204 = vmatmul.mubr.f32.gmra.mrb[0].mxu0 %v5203
  %v5205 = vpop.f32.mrb[0].mxu0
  %v5206 = vadd.f32 %v5118, %v5205
  %v5207 = vpop.f32.mrb[0].mxu0
  %5208 = vdwg.mxu0
  %5209 = vmatprep.subr.mxu0 0.0
  %v5210 = vand.u32 %v538, 4294901760
  %5211 = vmatpush1.msra.mxu0 %v5210
  %5212 = vmatprep.subr.mxu0 0.0
  %v5213 = vand.u32 %v539, 4294901760
  %5214 = vmatpush1.msra.mxu0 %v5213
  %5215 = vmatprep.subr.mxu0 0.0
  %v5216 = vand.u32 %v540, 4294901760
  %5217 = vmatpush1.msra.mxu0 %v5216
  %5218 = vmatprep.subr.mxu0 0.0
  %v5219 = vand.u32 %v541, 4294901760
  %5220 = vmatpush1.msra.mxu0 %v5219
  %5221 = vmatprep.subr.mxu0 0.0
  %v5222 = vand.u32 %v542, 4294901760
  %5223 = vmatpush1.msra.mxu0 %v5222
  %5224 = vmatprep.subr.mxu0 0.0
  %v5225 = vand.u32 %v543, 4294901760
  %5226 = vmatpush1.msra.mxu0 %v5225
  %5227 = vmatprep.subr.mxu0 0.0
  %v5228 = vand.u32 %v544, 4294901760
  %5229 = vmatpush1.msra.mxu0 %v5228
  %5230 = vmatprep.subr.mxu0 0.0
  %v5231 = vand.u32 %v545, 4294901760
  %5232 = vmatpush1.msra.mxu0 %v5231
  %5233 = vmatprep.subr.mxu0 0.0
  %5234 = vmatpush1.msra.mxu0 0.0
  %5235 = vmatprep.subr.mxu0 0.0
  %5236 = vmatpush1.msra.mxu0 0.0
  %5237 = vmatprep.subr.mxu0 0.0
  %5238 = vmatpush1.msra.mxu0 0.0
  %5239 = vmatprep.subr.mxu0 0.0
  %5240 = vmatpush1.msra.mxu0 0.0
  %5241 = vmatprep.subr.mxu0 0.0
  %5242 = vmatpush1.msra.mxu0 0.0
  %5243 = vmatprep.subr.mxu0 0.0
  %5244 = vmatpush1.msra.mxu0 0.0
  %5245 = vmatprep.subr.mxu0 0.0
  %5246 = vmatpush1.msra.mxu0 0.0
  %5247 = vmatprep.subr.mxu0 0.0
  %5248 = vmatpush1.msra.mxu0 0.0
  %5249 = vmatprep.subr.mxu0 0.0
  %5250 = vmatpush1.msra.mxu0 0.0
  %5251 = vmatprep.subr.mxu0 0.0
  %5252 = vmatpush1.msra.mxu0 0.0
  %5253 = vmatprep.subr.mxu0 0.0
  %5254 = vmatpush1.msra.mxu0 0.0
  %5255 = vmatprep.subr.mxu0 0.0
  %5256 = vmatpush1.msra.mxu0 0.0
  %5257 = vmatprep.subr.mxu0 0.0
  %5258 = vmatpush1.msra.mxu0 0.0
  %5259 = vmatprep.subr.mxu0 0.0
  %5260 = vmatpush1.msra.mxu0 0.0
  %5261 = vmatprep.subr.mxu0 0.0
  %5262 = vmatpush1.msra.mxu0 0.0
  %5263 = vmatprep.subr.mxu0 0.0
  %5264 = vmatpush1.msra.mxu0 0.0
  %5265 = vmatprep.subr.mxu0 0.0
  %5266 = vmatpush1.msra.mxu0 0.0
  %5267 = vmatprep.subr.mxu0 0.0
  %5268 = vmatpush1.msra.mxu0 0.0
  %5269 = vmatprep.subr.mxu0 0.0
  %5270 = vmatpush1.msra.mxu0 0.0
  %5271 = vmatprep.subr.mxu0 0.0
  %5272 = vmatpush1.msra.mxu0 0.0
  %5273 = vmatprep.subr.mxu0 0.0
  %5274 = vmatpush1.msra.mxu0 0.0
  %5275 = vmatprep.subr.mxu0 0.0
  %5276 = vmatpush1.msra.mxu0 0.0
  %5277 = vmatprep.subr.mxu0 0.0
  %5278 = vmatpush1.msra.mxu0 0.0
  %5279 = vmatprep.subr.mxu0 0.0
  %5280 = vmatpush1.msra.mxu0 0.0
  %5281 = vmatprep.mubr.f32.mxu0 0.0
  %v5282 = vand.u32 %v4925, 4294901760
  %v5283 = vsub.f32 %v4925, %v5282
  %v5284 = vand.u32 %v5283, 4294901760
  %5285 = vmatmul.mubr.f32.gmra.mrb[0].mxu0 %v5284
  %v5286 = vpop.f32.mrb[0].mxu0
  %v5287 = vadd.f32 %v5206, %v5286
  %v5288 = vpop.f32.mrb[0].mxu0
  %5289 = vdwg.mxu0
  %5290 = vmatprep.subr.mxu0 0.0
  %v5291 = vand.u32 %v538, 4294901760
  %v5292 = vsub.f32 %v538, %v5291
  %v5293 = vand.u32 %v5292, 4294901760
  %5294 = vmatpush1.msra.mxu0 %v5293
  %5295 = vmatprep.subr.mxu0 0.0
  %v5296 = vand.u32 %v539, 4294901760
  %v5297 = vsub.f32 %v539, %v5296
  %v5298 = vand.u32 %v5297, 4294901760
  %5299 = vmatpush1.msra.mxu0 %v5298
  %5300 = vmatprep.subr.mxu0 0.0
  %v5301 = vand.u32 %v540, 4294901760
  %v5302 = vsub.f32 %v540, %v5301
  %v5303 = vand.u32 %v5302, 4294901760
  %5304 = vmatpush1.msra.mxu0 %v5303
  %5305 = vmatprep.subr.mxu0 0.0
  %v5306 = vand.u32 %v541, 4294901760
  %v5307 = vsub.f32 %v541, %v5306
  %v5308 = vand.u32 %v5307, 4294901760
  %5309 = vmatpush1.msra.mxu0 %v5308
  %5310 = vmatprep.subr.mxu0 0.0
  %v5311 = vand.u32 %v542, 4294901760
  %v5312 = vsub.f32 %v542, %v5311
  %v5313 = vand.u32 %v5312, 4294901760
  %5314 = vmatpush1.msra.mxu0 %v5313
  %5315 = vmatprep.subr.mxu0 0.0
  %v5316 = vand.u32 %v543, 4294901760
  %v5317 = vsub.f32 %v543, %v5316
  %v5318 = vand.u32 %v5317, 4294901760
  %5319 = vmatpush1.msra.mxu0 %v5318
  %5320 = vmatprep.subr.mxu0 0.0
  %v5321 = vand.u32 %v544, 4294901760
  %v5322 = vsub.f32 %v544, %v5321
  %v5323 = vand.u32 %v5322, 4294901760
  %5324 = vmatpush1.msra.mxu0 %v5323
  %5325 = vmatprep.subr.mxu0 0.0
  %v5326 = vand.u32 %v545, 4294901760
  %v5327 = vsub.f32 %v545, %v5326
  %v5328 = vand.u32 %v5327, 4294901760
  %5329 = vmatpush1.msra.mxu0 %v5328
  %5330 = vmatprep.subr.mxu0 0.0
  %5331 = vmatpush1.msra.mxu0 0.0
  %5332 = vmatprep.subr.mxu0 0.0
  %5333 = vmatpush1.msra.mxu0 0.0
  %5334 = vmatprep.subr.mxu0 0.0
  %5335 = vmatpush1.msra.mxu0 0.0
  %5336 = vmatprep.subr.mxu0 0.0
  %5337 = vmatpush1.msra.mxu0 0.0
  %5338 = vmatprep.subr.mxu0 0.0
  %5339 = vmatpush1.msra.mxu0 0.0
  %5340 = vmatprep.subr.mxu0 0.0
  %5341 = vmatpush1.msra.mxu0 0.0
  %5342 = vmatprep.subr.mxu0 0.0
  %5343 = vmatpush1.msra.mxu0 0.0
  %5344 = vmatprep.subr.mxu0 0.0
  %5345 = vmatpush1.msra.mxu0 0.0
  %5346 = vmatprep.subr.mxu0 0.0
  %5347 = vmatpush1.msra.mxu0 0.0
  %5348 = vmatprep.subr.mxu0 0.0
  %5349 = vmatpush1.msra.mxu0 0.0
  %5350 = vmatprep.subr.mxu0 0.0
  %5351 = vmatpush1.msra.mxu0 0.0
  %5352 = vmatprep.subr.mxu0 0.0
  %5353 = vmatpush1.msra.mxu0 0.0
  %5354 = vmatprep.subr.mxu0 0.0
  %5355 = vmatpush1.msra.mxu0 0.0
  %5356 = vmatprep.subr.mxu0 0.0
  %5357 = vmatpush1.msra.mxu0 0.0
  %5358 = vmatprep.subr.mxu0 0.0
  %5359 = vmatpush1.msra.mxu0 0.0
  %5360 = vmatprep.subr.mxu0 0.0
  %5361 = vmatpush1.msra.mxu0 0.0
  %5362 = vmatprep.subr.mxu0 0.0
  %5363 = vmatpush1.msra.mxu0 0.0
  %5364 = vmatprep.subr.mxu0 0.0
  %5365 = vmatpush1.msra.mxu0 0.0
  %5366 = vmatprep.subr.mxu0 0.0
  %5367 = vmatpush1.msra.mxu0 0.0
  %5368 = vmatprep.subr.mxu0 0.0
  %5369 = vmatpush1.msra.mxu0 0.0
  %5370 = vmatprep.subr.mxu0 0.0
  %5371 = vmatpush1.msra.mxu0 0.0
  %5372 = vmatprep.subr.mxu0 0.0
  %5373 = vmatpush1.msra.mxu0 0.0
  %5374 = vmatprep.subr.mxu0 0.0
  %5375 = vmatpush1.msra.mxu0 0.0
  %5376 = vmatprep.subr.mxu0 0.0
  %5377 = vmatpush1.msra.mxu0 0.0
  %5378 = vmatprep.mubr.f32.mxu0 0.0
  %v5379 = vand.u32 %v4925, 4294901760
  %5380 = vmatmul.mubr.f32.gmra.mrb[0].mxu0 %v5379
  %v5381 = vpop.f32.mrb[0].mxu0
  %v5382 = vadd.f32 %v5287, %v5381
  %v5383 = vpop.f32.mrb[0].mxu0
  %5384 = vdwg.mxu0
  %5385 = vmatprep.subr.mxu0 0.0
  %v5386 = vand.u32 %v538, 4294901760
  %5387 = vmatpush1.msra.mxu0 %v5386
  %5388 = vmatprep.subr.mxu0 0.0
  %v5389 = vand.u32 %v539, 4294901760
  %5390 = vmatpush1.msra.mxu0 %v5389
  %5391 = vmatprep.subr.mxu0 0.0
  %v5392 = vand.u32 %v540, 4294901760
  %5393 = vmatpush1.msra.mxu0 %v5392
  %5394 = vmatprep.subr.mxu0 0.0
  %v5395 = vand.u32 %v541, 4294901760
  %5396 = vmatpush1.msra.mxu0 %v5395
  %5397 = vmatprep.subr.mxu0 0.0
  %v5398 = vand.u32 %v542, 4294901760
  %5399 = vmatpush1.msra.mxu0 %v5398
  %5400 = vmatprep.subr.mxu0 0.0
  %v5401 = vand.u32 %v543, 4294901760
  %5402 = vmatpush1.msra.mxu0 %v5401
  %5403 = vmatprep.subr.mxu0 0.0
  %v5404 = vand.u32 %v544, 4294901760
  %5405 = vmatpush1.msra.mxu0 %v5404
  %5406 = vmatprep.subr.mxu0 0.0
  %v5407 = vand.u32 %v545, 4294901760
  %5408 = vmatpush1.msra.mxu0 %v5407
  %5409 = vmatprep.subr.mxu0 0.0
  %5410 = vmatpush1.msra.mxu0 0.0
  %5411 = vmatprep.subr.mxu0 0.0
  %5412 = vmatpush1.msra.mxu0 0.0
  %5413 = vmatprep.subr.mxu0 0.0
  %5414 = vmatpush1.msra.mxu0 0.0
  %5415 = vmatprep.subr.mxu0 0.0
  %5416 = vmatpush1.msra.mxu0 0.0
  %5417 = vmatprep.subr.mxu0 0.0
  %5418 = vmatpush1.msra.mxu0 0.0
  %5419 = vmatprep.subr.mxu0 0.0
  %5420 = vmatpush1.msra.mxu0 0.0
  %5421 = vmatprep.subr.mxu0 0.0
  %5422 = vmatpush1.msra.mxu0 0.0
  %5423 = vmatprep.subr.mxu0 0.0
  %5424 = vmatpush1.msra.mxu0 0.0
  %5425 = vmatprep.subr.mxu0 0.0
  %5426 = vmatpush1.msra.mxu0 0.0
  %5427 = vmatprep.subr.mxu0 0.0
  %5428 = vmatpush1.msra.mxu0 0.0
  %5429 = vmatprep.subr.mxu0 0.0
  %5430 = vmatpush1.msra.mxu0 0.0
  %5431 = vmatprep.subr.mxu0 0.0
  %5432 = vmatpush1.msra.mxu0 0.0
  %5433 = vmatprep.subr.mxu0 0.0
  %5434 = vmatpush1.msra.mxu0 0.0
  %5435 = vmatprep.subr.mxu0 0.0
  %5436 = vmatpush1.msra.mxu0 0.0
  %5437 = vmatprep.subr.mxu0 0.0
  %5438 = vmatpush1.msra.mxu0 0.0
  %5439 = vmatprep.subr.mxu0 0.0
  %5440 = vmatpush1.msra.mxu0 0.0
  %5441 = vmatprep.subr.mxu0 0.0
  %5442 = vmatpush1.msra.mxu0 0.0
  %5443 = vmatprep.subr.mxu0 0.0
  %5444 = vmatpush1.msra.mxu0 0.0
  %5445 = vmatprep.subr.mxu0 0.0
  %5446 = vmatpush1.msra.mxu0 0.0
  %5447 = vmatprep.subr.mxu0 0.0
  %5448 = vmatpush1.msra.mxu0 0.0
  %5449 = vmatprep.subr.mxu0 0.0
  %5450 = vmatpush1.msra.mxu0 0.0
  %5451 = vmatprep.subr.mxu0 0.0
  %5452 = vmatpush1.msra.mxu0 0.0
  %5453 = vmatprep.subr.mxu0 0.0
  %5454 = vmatpush1.msra.mxu0 0.0
  %5455 = vmatprep.subr.mxu0 0.0
  %5456 = vmatpush1.msra.mxu0 0.0
  %5457 = vmatprep.mubr.f32.mxu0 0.0
  %v5458 = vand.u32 %v4925, 4294901760
  %5459 = vmatmul.mubr.f32.gmra.mrb[0].mxu0 %v5458
  %v5460 = vpop.f32.mrb[0].mxu0
  %v5461 = vadd.f32 %v5382, %v5460
  %v5462 = vpop.f32.mrb[0].mxu0
  %5463 = vdwg.mxu0
  %v5464 = vadd.f32 %v4924, %v5461
  %v5465 = vtanh.pop %v5464
  %5467 = vrot.lane.b32.xlu0 %v5465, 96
  %v5468 = vpop.permute.xlu0 %5467
  %5470 = vst.msk [vmem:[#allocation3 + $0x6] sm:$0x2] %vm1640, %v5468
  %v5471 = vld [vmem:[#allocation3] sm:$0xff]
  %v5472 = vld [vmem:[%s4] sm:$0x1]
  %v5474 = vlaneseq
  %v5475 = vshrl.u32 %v5474, 7
  %v5476 = vsub.s32 0, %v5475
  %v5477 = vrot.slane %v5472, %v5476
  %v5479 = vmul.f32 %v5471, %v5477
  %vm5480 = vcmask 261120
  %v5481 = vsel %vm5480, %v5479, 0.0
  %5482 = vadd.xlane.f32.xlu0 %v5481
  %v5483 = vpop.xlane.xlu0 %5482
  %v5484 = vld [vmem:[#allocation4] sm:$0x1]
  %v5486 = vlaneseq
  %v5487 = vshrl.u32 %v5486, 7
  %v5488 = vsub.s32 0, %v5487
  %v5489 = vrot.slane %v5484, %v5488
  %v5491 = vadd.f32 %v5483, %v5489
  %v5492 = vxor.u32 %v5491, 2147483648
  %v5493 = vmul.f32 %v5492, 1.442695
  %v5494 = vpow.pop %v5493
  %v5495 = vadd.f32 %v5494, 1.0
  %v5496 = vrcp.pop %v5495
  %v5497 = vmul.f32 1.0, %v5496
  %vm5498 = vcmask 7168
  %5499 = vst.msk [vmem:[%s6] sm:$0xff] %vm5498, %v5497
  // Predicated region
  $region26: #{binary_rnn_forward.1} parent=0 // pred_check
    _
  $region27: #{binary_rnn_forward.1} parent=0 // pred_check_branch
    %5501 = sbr.rel (0) target = $region29
  $region28: #{binary_rnn_forward.1} parent=0 // pred_region
    _
  $region29: #{binary_rnn_forward.1} parent=0 // pred_fallthru
    _
  // Predicated region
  $region30: #{binary_rnn_forward.1} parent=0 // pred_check
    _
  $region31: #{binary_rnn_forward.1} parent=0 // pred_check_branch
    %5503 = sbr.rel (0) target = $region33
  $region32: #{binary_rnn_forward.1} parent=0 // pred_region
    _
  $region33: #{binary_rnn_forward.1} parent=0 // pred_fallthru
    _

</llo_original>
